<compile_context>
chip_gen: v7x
topology: tpu7x:2x2x1
jax: 0.10.0
libtpu: 0.0.40
codegen_flags: <defaults>
</compile_context>

<pallas_src>
import functools
import math

import jax
import jax.numpy as jnp
from jax import lax
from jax.experimental import pallas as pl
from jax.experimental.pallas import tpu as pltpu


def encoder_block_kernel(x_ref,
                         wqkv_ref, bqkv_ref,
                         wo_ref, bo_ref,
                         g1_ref, be1_ref,
                         w1_ref, b1_ref, w2_ref, b2_ref,
                         g2_ref, be2_ref,
                         o_ref,
                         q_scr, kT_scr, v_scr, ctx_scr,
                         *, n_heads, tq):
    eps = 1e-5
    S, D = v_scr.shape
    dh = D // n_heads
    scale = 1.0 / math.sqrt(dh)
    qi = pl.program_id(1)

    # ---- fused Q/K/V projection: ONE (S, D) @ (D, 3D) matmul, once per batch elt ----
    @pl.when(qi == 0)
    def _():
        xb = x_ref[0].astype(jnp.bfloat16)                                    # (S, D)
        qkv = jnp.dot(xb, wqkv_ref[...],
                      preferred_element_type=jnp.float32) + bqkv_ref[...]     # (S, 3D)
        q_scr[...] = qkv[:, :D].astype(jnp.bfloat16)
        # K stored transposed once -> no repeated transpose in the head loop.
        kT_scr[...] = qkv[:, D:2 * D].T.astype(jnp.bfloat16)                  # (D, S)
        v_scr[...] = qkv[:, 2 * D:].astype(jnp.bfloat16)                      # (S, D)

    # ---- query tile ----
    q0 = pl.multiple_of(qi * tq, tq)
    xq = x_ref[0, pl.ds(q0, tq), :]                                           # (TQ, D) fp32 residual path
    q_b = q_scr[pl.ds(q0, tq), :]                                             # (TQ, D) bf16

    # ---- per-head attention; contexts written into one (TQ, D) slab ----
    for h in range(n_heads):                                                  # static unroll (n_heads small)
        lo = h * dh
        s = jnp.dot(q_b[:, lo:lo + dh], kT_scr[lo:lo + dh, :],
                    preferred_element_type=jnp.float32) * scale               # (TQ, S)
        s = s - jnp.max(s, axis=-1, keepdims=True)
        p = jnp.exp(s)
        p = p * pl.reciprocal(jnp.sum(p, axis=-1, keepdims=True), approx=True)
        ctx = jnp.dot(p.astype(jnp.bfloat16), v_scr[:, lo:lo + dh],
                      preferred_element_type=jnp.float32)                     # (TQ, dh)
        ctx_scr[:, lo:lo + dh] = ctx.astype(jnp.bfloat16)

    # ---- single output projection: K = D contraction, lane-dense ----
    att = jnp.dot(ctx_scr[...], wo_ref[...],
                  preferred_element_type=jnp.float32) + bo_ref[...]           # (TQ, D)

    # ---- Add & LayerNorm 1 (fp32 VPU path) ----
    y1 = att + xq
    mu1 = jnp.mean(y1, axis=-1, keepdims=True)
    c1 = y1 - mu1
    var1 = jnp.mean(c1 * c1, axis=-1, keepdims=True)
    x1 = c1 * lax.rsqrt(var1 + eps) * g1_ref[...] + be1_ref[...]

    # ---- Feed-forward (Linear -> ReLU -> Linear) ----
    h1 = jnp.dot(x1.astype(jnp.bfloat16), w1_ref[...],
                 preferred_element_type=jnp.float32) + b1_ref[...]
    h1 = jnp.maximum(h1, 0.0)
    lin = jnp.dot(h1.astype(jnp.bfloat16), w2_ref[...],
                  preferred_element_type=jnp.float32) + b2_ref[...]

    # ---- Add & LayerNorm 2 ----
    y2 = lin + x1
    mu2 = jnp.mean(y2, axis=-1, keepdims=True)
    c2 = y2 - mu2
    var2 = jnp.mean(c2 * c2, axis=-1, keepdims=True)
    out = c2 * lax.rsqrt(var2 + eps) * g2_ref[...] + be2_ref[...]

    o_ref[0] = out.astype(o_ref.dtype)


def _tpu_config():
    """Generation-dependent (max query tile, scoped-VMEM limit in bytes)."""
    kind = ""
    try:
        kind = jax.devices()[0].device_kind.lower()
    except Exception:
        pass
    try:
        vmem_cap = int(pltpu.get_tpu_info().vmem_capacity_bytes)
    except Exception:
        # v7x: 64 MiB / TensorCore; v5e / v6e: 128 MiB.
        vmem_cap = (64 if "7" in kind else 128) * 1024 * 1024
    # 128-wide MXU generations (<= v5) -> M=128 tiles; 256-wide (v6e/v7x) -> M=256.
    narrow_mxu = any(t in kind for t in ("v2", "v3", "v4", "v5"))
    tq_max = 128 if narrow_mxu else 256
    # Leave headroom for compiler-internal scratch / pipeline buffers:
    # ~80% of physical VMEM (~51 MiB on v7x, ~102 MiB on v5e/v6e), capped at 112 MiB.
    vmem_limit = min((vmem_cap * 4) // 5, 112 * 1024 * 1024)
    return tq_max, vmem_limit


def _call(x, wqkv, bqkv, params, n_heads, tq, vmem_limit, single_buffer_weights):
    B, S, D = x.shape
    d_ffn = params["w1"].shape[1]
    num_q = S // tq

    if single_buffer_weights:
        # Constant index_map -> double-buffering the weights only wastes VMEM.
        def wspec(shape):
            return pl.BlockSpec(shape, lambda b, q: (0, 0),
                                pipeline_mode=pl.Buffered(1))
    else:
        def wspec(shape):
            return pl.BlockSpec(shape, lambda b, q: (0, 0))

    bf = lambda a: a.astype(jnp.bfloat16)   # weights -> MXU-native bf16

    in_specs = [
        pl.BlockSpec((1, S, D), lambda b, q: (b, 0, 0)),    # x: full sequence per batch elt
        wspec((D, 3 * D)), wspec((1, 3 * D)),               # fused Wqkv, bqkv
        wspec((D, D)), wspec((1, D)),                       # wo, bo
        wspec((1, D)), wspec((1, D)),                       # gamma1, beta1
        wspec((D, d_ffn)), wspec((1, d_ffn)),               # w1, b1
        wspec((d_ffn, D)), wspec((1, D)),                   # w2, b2
        wspec((1, D)), wspec((1, D)),                       # gamma2, beta2
    ]

    kernel = functools.partial(encoder_block_kernel, n_heads=n_heads, tq=tq)
    grid_spec = pltpu.PrefetchScalarGridSpec(
        num_scalar_prefetch=0,
        grid=(B, num_q),
        in_specs=in_specs,
        out_specs=pl.BlockSpec((1, tq, D), lambda b, q: (b, q, 0)),
        scratch_shapes=[
            pltpu.VMEM((S, D), jnp.bfloat16),    # Q   (whole sequence, per batch elt)
            pltpu.VMEM((D, S), jnp.bfloat16),    # K^T (transposed once per batch elt)
            pltpu.VMEM((S, D), jnp.bfloat16),    # V
            pltpu.VMEM((tq, D), jnp.bfloat16),   # per-head context slab
        ],
    )
    return pl.pallas_call(
        kernel,
        out_shape=jax.ShapeDtypeStruct((B, S, D), x.dtype),
        grid_spec=grid_spec,
        compiler_params=pltpu.CompilerParams(
            # Q/K/V scratch carries across the query-tile axis -> keep it "arbitrary".
            dimension_semantics=("parallel", "arbitrary"),
            vmem_limit_bytes=vmem_limit,
        ),
    )(x,
      bf(wqkv), bqkv,
      bf(params["wo"]), params["bo"],
      params["g1"], params["be1"],
      bf(params["w1"]), params["b1"], bf(params["w2"]), params["b2"],
      params["g2"], params["be2"])


def transformer_encoder_block(x, params, n_heads, *, tq=None):
    B, S, D = x.shape
    assert D % n_heads == 0
    tq_max, vmem_limit = _tpu_config()
    if tq is None:
        tq = S if S <= tq_max else tq_max
    assert S % tq == 0

    # Fused Q/K/V projection weights: one wide (D, 3D) matmul instead of three.
    wqkv = jnp.concatenate([params["wq"], params["wk"], params["wv"]], axis=1)
    bqkv = jnp.concatenate([params["bq"], params["bk"], params["bv"]], axis=1)

    try:
        return _call(x, wqkv, bqkv, params, n_heads, tq, vmem_limit,
                     single_buffer_weights=True)
    except Exception:
        # pipeline_mode=pl.Buffered(1) not available on this jax/libtpu build ->
        # fall back to default (double-buffered) weight specs.
        return _call(x, wqkv, bqkv, params, n_heads, tq, vmem_limit,
                     single_buffer_weights=False)


def reference_block(x, p, n_heads):
    """Pure-JAX fp32 reference for validation."""
    B, S, D = x.shape
    dh = D // n_heads
    q = x @ p["wq"] + p["bq"]
    k = x @ p["wk"] + p["bk"]
    v = x @ p["wv"] + p["bv"]
    qh = q.reshape(B, S, n_heads, dh).transpose(0, 2, 1, 3)
    kh = k.reshape(B, S, n_heads, dh).transpose(0, 2, 1, 3)
    vh = v.reshape(B, S, n_heads, dh).transpose(0, 2, 1, 3)
    s = jnp.einsum("bhqd,bhkd->bhqk", qh, kh) / math.sqrt(dh)
    pmat = jax.nn.softmax(s, axis=-1)
    o = jnp.einsum("bhqk,bhkd->bhqd", pmat, vh).transpose(0, 2, 1, 3).reshape(B, S, D)
    att = o @ p["wo"] + p["bo"]

    def ln(y, g, b):
        mu = jnp.mean(y, -1, keepdims=True)
        var = jnp.mean((y - mu) ** 2, -1, keepdims=True)
        return (y - mu) / jnp.sqrt(var + 1e-5) * g + b

    x1 = ln(att + x, p["g1"], p["be1"])
    lin = jnp.maximum(x1 @ p["w1"] + p["b1"], 0.0) @ p["w2"] + p["b2"]
    return ln(lin + x1, p["g2"], p["be2"])


def init_params(key, d_model, n_heads, d_ffn):
    keys = jax.random.split(key, 16)

    def linear(kw, kb, fan_in, fan_out):
        bound = 1.0 / math.sqrt(fan_in)
        w = jax.random.uniform(kw, (fan_in, fan_out), jnp.float32, -bound, bound)
        b = jax.random.uniform(kb, (1, fan_out), jnp.float32, -bound, bound)
        return w, b

    wq, bq = linear(keys[0], keys[1], d_model, d_model)
    wk, bk = linear(keys[2], keys[3], d_model, d_model)
    wv, bv = linear(keys[4], keys[5], d_model, d_model)
    wo, bo = linear(keys[6], keys[7], d_model, d_model)
    w1, b1 = linear(keys[8], keys[9], d_model, d_ffn)
    w2, b2 = linear(keys[10], keys[11], d_ffn, d_model)
    ones = jnp.ones((1, d_model), jnp.float32)
    zeros = jnp.zeros((1, d_model), jnp.float32)
    return dict(wq=wq, bq=bq, wk=wk, bk=bk, wv=wv, bv=bv, wo=wo, bo=bo,
                g1=ones, be1=zeros, w1=w1, b1=b1, w2=w2, b2=b2,
                g2=ones, be2=zeros)


if __name__ == "__main__":
    # Small but lane-dense shapes: D = d_ffn = 128 (multiple of 128), S multiple of 8.
    B, S, d_model, n_heads = 2, 16, 128, 4
    d_ffn = d_model  # d_ffn=None in the module -> d_ffn = d_model

    key = jax.random.PRNGKey(0)
    kx, kp = jax.random.split(key)
    x = jax.random.normal(kx, (B, S, d_model), jnp.float32)
    params = init_params(kp, d_model, n_heads, d_ffn)

    out = transformer_encoder_block(x, params, n_heads)
    out = jax.block_until_ready(out)

    ref = reference_block(x, params, n_heads)
    assert out.shape == (B, S, d_model)
    # bf16 matmul operands (fp32 accumulation) vs. the fp32 reference -> loose tolerance.
    assert jnp.allclose(out, ref, rtol=5e-2, atol=5e-2), "mismatch vs JAX reference"

    print("KERNEL_OK")
</pallas_src>

<mosaic_0001>
module attributes {stable_mosaic.version = 11 : i64} {
  func.func @encoder_block_kernel(%arg0: i32, %arg1: i32, %arg2: memref<1x16x128xf32, #tpu.memory_space<vmem>>, %arg3: memref<128x384xbf16, #tpu.memory_space<vmem>>, %arg4: memref<1x384xf32, #tpu.memory_space<vmem>>, %arg5: memref<128x128xbf16, #tpu.memory_space<vmem>>, %arg6: memref<1x128xf32, #tpu.memory_space<vmem>>, %arg7: memref<1x128xf32, #tpu.memory_space<vmem>>, %arg8: memref<1x128xf32, #tpu.memory_space<vmem>>, %arg9: memref<128x128xbf16, #tpu.memory_space<vmem>>, %arg10: memref<1x128xf32, #tpu.memory_space<vmem>>, %arg11: memref<128x128xbf16, #tpu.memory_space<vmem>>, %arg12: memref<1x128xf32, #tpu.memory_space<vmem>>, %arg13: memref<1x128xf32, #tpu.memory_space<vmem>>, %arg14: memref<1x128xf32, #tpu.memory_space<vmem>>, %arg15: memref<1x16x128xf32, #tpu.memory_space<vmem>>, %arg16: memref<16x128xbf16, #tpu.memory_space<vmem>>, %arg17: memref<128x16xbf16, #tpu.memory_space<vmem>>, %arg18: memref<16x128xbf16, #tpu.memory_space<vmem>>, %arg19: memref<16x128xbf16, #tpu.memory_space<vmem>>) attributes {dimension_semantics = [#tpu.dimension_semantics<parallel>, #tpu.dimension_semantics<arbitrary>], iteration_bounds = array<i64: 2, 1>, scalar_prefetch = 0 : i64, scratch_operands = 4 : i64, tpu.core_type = #tpu.core_type<tc>, window_params = [{transform_indices = @transform_0, window_bounds = array<i64: 1, 16, 128>}, {pipeline_mode = #tpu.pipeline_mode<synchronous>, transform_indices = @transform_1, window_bounds = array<i64: 128, 384>}, {pipeline_mode = #tpu.pipeline_mode<synchronous>, transform_indices = @transform_2, window_bounds = array<i64: 1, 384>}, {pipeline_mode = #tpu.pipeline_mode<synchronous>, transform_indices = @transform_3, window_bounds = array<i64: 128, 128>}, {pipeline_mode = #tpu.pipeline_mode<synchronous>, transform_indices = @transform_4, window_bounds = array<i64: 1, 128>}, {pipeline_mode = #tpu.pipeline_mode<synchronous>, transform_indices = @transform_5, window_bounds = array<i64: 1, 128>}, {pipeline_mode = #tpu.pipeline_mode<synchronous>, transform_indices = @transform_6, window_bounds = array<i64: 1, 128>}, {pipeline_mode = #tpu.pipeline_mode<synchronous>, transform_indices = @transform_7, window_bounds = array<i64: 128, 128>}, {pipeline_mode = #tpu.pipeline_mode<synchronous>, transform_indices = @transform_8, window_bounds = array<i64: 1, 128>}, {pipeline_mode = #tpu.pipeline_mode<synchronous>, transform_indices = @transform_9, window_bounds = array<i64: 128, 128>}, {pipeline_mode = #tpu.pipeline_mode<synchronous>, transform_indices = @transform_10, window_bounds = array<i64: 1, 128>}, {pipeline_mode = #tpu.pipeline_mode<synchronous>, transform_indices = @transform_11, window_bounds = array<i64: 1, 128>}, {pipeline_mode = #tpu.pipeline_mode<synchronous>, transform_indices = @transform_12, window_bounds = array<i64: 1, 128>}, {transform_indices = @transform_13, window_bounds = array<i64: 1, 16, 128>}]} {
    %c0_i32 = arith.constant 0 : i32
    %0 = arith.cmpi eq, %arg1, %c0_i32 : i32
    %1 = arith.extui %0 : i1 to i32
    %c0_i32_0 = arith.constant 0 : i32
    %2 = arith.cmpi ne, %1, %c0_i32_0 : i32
    scf.if %2 {
      %c0_82 = arith.constant 0 : index
      %c0_83 = arith.constant 0 : index
      %c0_84 = arith.constant 0 : index
      %159 = vector.load %arg2[%c0_82, %c0_83, %c0_84] : memref<1x16x128xf32, #tpu.memory_space<vmem>>, vector<1x16x128xf32>
      %160 = vector.shape_cast %159 : vector<1x16x128xf32> to vector<16x128xf32>
      %161 = arith.truncf %160 : vector<16x128xf32> to vector<16x128xbf16>
      %c0_85 = arith.constant 0 : index
      %c0_86 = arith.constant 0 : index
      %162 = vector.load %arg3[%c0_85, %c0_86] : memref<128x384xbf16, #tpu.memory_space<vmem>>, vector<128x384xbf16>
      %cst_87 = arith.constant dense<0.000000e+00> : vector<16x384xf32>
      %163 = tpu.matmul %161, %162, %cst_87 {dimension_numbers = #tpu.dot_dimension_numbers<[1], [0], [0], [1], [0, 0, 1, 1], [], []>} : vector<16x128xbf16>, vector<128x384xbf16>, vector<16x384xf32> -> vector<16x384xf32>
      %c0_88 = arith.constant 0 : index
      %c0_89 = arith.constant 0 : index
      %164 = vector.load %arg4[%c0_88, %c0_89] : memref<1x384xf32, #tpu.memory_space<vmem>>, vector<1x384xf32>
      %165 = vector.broadcast %164 : vector<1x384xf32> to vector<16x384xf32>
      %166 = arith.addf %163, %165 : vector<16x384xf32>
      %167 = vector.extract_strided_slice %166 {offsets = [0, 0], sizes = [16, 128], strides = [1, 1]} : vector<16x384xf32> to vector<16x128xf32>
      %168 = arith.truncf %167 : vector<16x128xf32> to vector<16x128xbf16>
      %c0_90 = arith.constant 0 : index
      %c0_91 = arith.constant 0 : index
      %169 = vector.load %arg16[%c0_90, %c0_91] : memref<16x128xbf16, #tpu.memory_space<vmem>>, vector<16x128xbf16>
      tpu.vector_store %arg16[%c0_90, %c0_91], %168 {strides = array<i32>} : memref<16x128xbf16, #tpu.memory_space<vmem>>, vector<16x128xbf16>,
      %170 = vector.extract_strided_slice %166 {offsets = [0, 128], sizes = [16, 128], strides = [1, 1]} : vector<16x384xf32> to vector<16x128xf32>
      %171 = tpu.transpose %170, [1, 0] : vector<16x128xf32> -> vector<128x16xf32>
      %172 = arith.truncf %171 : vector<128x16xf32> to vector<128x16xbf16>
      %c0_92 = arith.constant 0 : index
      %c0_93 = arith.constant 0 : index
      %173 = vector.load %arg17[%c0_92, %c0_93] : memref<128x16xbf16, #tpu.memory_space<vmem>>, vector<128x16xbf16>
      tpu.vector_store %arg17[%c0_92, %c0_93], %172 {strides = array<i32>} : memref<128x16xbf16, #tpu.memory_space<vmem>>, vector<128x16xbf16>,
      %174 = vector.extract_strided_slice %166 {offsets = [0, 256], sizes = [16, 128], strides = [1, 1]} : vector<16x384xf32> to vector<16x128xf32>
      %175 = arith.truncf %174 : vector<16x128xf32> to vector<16x128xbf16>
      %c0_94 = arith.constant 0 : index
      %c0_95 = arith.constant 0 : index
      %176 = vector.load %arg18[%c0_94, %c0_95] : memref<16x128xbf16, #tpu.memory_space<vmem>>, vector<16x128xbf16>
      tpu.vector_store %arg18[%c0_94, %c0_95], %175 {strides = array<i32>} : memref<16x128xbf16, #tpu.memory_space<vmem>>, vector<16x128xbf16>,
    } else {
    }
    %c16_i32 = arith.constant 16 : i32
    %3 = arith.muli %arg1, %c16_i32 : i32
    %4 = tpu.assume_multiple %3, 16 : i32
    %c0 = arith.constant 0 : index
    %5 = arith.index_cast %4 : i32 to index
    %c0_1 = arith.constant 0 : index
    %6 = vector.load %arg2[%c0, %5, %c0_1] : memref<1x16x128xf32, #tpu.memory_space<vmem>>, vector<1x16x128xf32>
    %7 = vector.shape_cast %6 : vector<1x16x128xf32> to vector<16x128xf32>
    %8 = arith.index_cast %4 : i32 to index
    %c0_2 = arith.constant 0 : index
    %9 = vector.load %arg16[%8, %c0_2] : memref<16x128xbf16, #tpu.memory_space<vmem>>, vector<16x128xbf16>
    %10 = vector.extract_strided_slice %9 {offsets = [0, 0], sizes = [16, 32], strides = [1, 1]} : vector<16x128xbf16> to vector<16x32xbf16>
    %c0_3 = arith.constant 0 : index
    %c0_4 = arith.constant 0 : index
    %11 = vector.load %arg17[%c0_3, %c0_4] : memref<128x16xbf16, #tpu.memory_space<vmem>>, vector<32x16xbf16>
    %cst = arith.constant dense<0.000000e+00> : vector<16x16xf32>
    %12 = tpu.matmul %10, %11, %cst {dimension_numbers = #tpu.dot_dimension_numbers<[1], [0], [0], [1], [0, 0, 1, 1], [], []>} : vector<16x32xbf16>, vector<32x16xbf16>, vector<16x16xf32> -> vector<16x16xf32>
    %cst_5 = arith.constant 0.176776692 : f32
    %13 = vector.broadcast %cst_5 : f32 to vector<16x16xf32>
    %14 = arith.mulf %12, %13 : vector<16x16xf32>
    %cst_6 = arith.constant dense<0xFF800000> : vector<16xf32>
    %15 = vector.multi_reduction <maximumf>, %14, %cst_6 [1] : vector<16x16xf32> to vector<16xf32>
    %16 = vector.shape_cast %15 : vector<16xf32> to vector<16x1xf32>
    %17 = vector.broadcast %16 : vector<16x1xf32> to vector<16x16xf32>
    %18 = arith.subf %14, %17 : vector<16x16xf32>
    %19 = math.exp %18 : vector<16x16xf32>
    %cst_7 = arith.constant dense<0.000000e+00> : vector<16xf32>
    %20 = vector.multi_reduction <add>, %19, %cst_7 [1] : vector<16x16xf32> to vector<16xf32>
    %21 = vector.shape_cast %20 : vector<16xf32> to vector<16x1xf32>
    %22 = tpu.reciprocal %21 {approx = true} : vector<16x1xf32> -> vector<16x1xf32>
    %23 = vector.broadcast %22 : vector<16x1xf32> to vector<16x16xf32>
    %24 = arith.mulf %19, %23 : vector<16x16xf32>
    %25 = arith.truncf %24 : vector<16x16xf32> to vector<16x16xbf16>
    %c0_8 = arith.constant 0 : index
    %c0_9 = arith.constant 0 : index
    %26 = vector.load %arg18[%c0_8, %c0_9] : memref<16x128xbf16, #tpu.memory_space<vmem>>, vector<16x32xbf16>
    %cst_10 = arith.constant dense<0.000000e+00> : vector<16x32xf32>
    %27 = tpu.matmul %25, %26, %cst_10 {dimension_numbers = #tpu.dot_dimension_numbers<[1], [0], [0], [1], [0, 0, 1, 1], [], []>} : vector<16x16xbf16>, vector<16x32xbf16>, vector<16x32xf32> -> vector<16x32xf32>
    %28 = arith.truncf %27 : vector<16x32xf32> to vector<16x32xbf16>
    %c0_11 = arith.constant 0 : index
    %c0_12 = arith.constant 0 : index
    %29 = vector.load %arg19[%c0_11, %c0_12] : memref<16x128xbf16, #tpu.memory_space<vmem>>, vector<16x32xbf16>
    tpu.vector_store %arg19[%c0_11, %c0_12], %28 {strides = array<i32>} : memref<16x128xbf16, #tpu.memory_space<vmem>>, vector<16x32xbf16>,
    %30 = vector.extract_strided_slice %9 {offsets = [0, 32], sizes = [16, 32], strides = [1, 1]} : vector<16x128xbf16> to vector<16x32xbf16>
    %c32 = arith.constant 32 : index
    %c0_13 = arith.constant 0 : index
    %31 = vector.load %arg17[%c32, %c0_13] : memref<128x16xbf16, #tpu.memory_space<vmem>>, vector<32x16xbf16>
    %cst_14 = arith.constant dense<0.000000e+00> : vector<16x16xf32>
    %32 = tpu.matmul %30, %31, %cst_14 {dimension_numbers = #tpu.dot_dimension_numbers<[1], [0], [0], [1], [0, 0, 1, 1], [], []>} : vector<16x32xbf16>, vector<32x16xbf16>, vector<16x16xf32> -> vector<16x16xf32>
    %cst_15 = arith.constant 0.176776692 : f32
    %33 = vector.broadcast %cst_15 : f32 to vector<16x16xf32>
    %34 = arith.mulf %32, %33 : vector<16x16xf32>
    %cst_16 = arith.constant dense<0xFF800000> : vector<16xf32>
    %35 = vector.multi_reduction <maximumf>, %34, %cst_16 [1] : vector<16x16xf32> to vector<16xf32>
    %36 = vector.shape_cast %35 : vector<16xf32> to vector<16x1xf32>
    %37 = vector.broadcast %36 : vector<16x1xf32> to vector<16x16xf32>
    %38 = arith.subf %34, %37 : vector<16x16xf32>
    %39 = math.exp %38 : vector<16x16xf32>
    %cst_17 = arith.constant dense<0.000000e+00> : vector<16xf32>
    %40 = vector.multi_reduction <add>, %39, %cst_17 [1] : vector<16x16xf32> to vector<16xf32>
    %41 = vector.shape_cast %40 : vector<16xf32> to vector<16x1xf32>
    %42 = tpu.reciprocal %41 {approx = true} : vector<16x1xf32> -> vector<16x1xf32>
    %43 = vector.broadcast %42 : vector<16x1xf32> to vector<16x16xf32>
    %44 = arith.mulf %39, %43 : vector<16x16xf32>
    %45 = arith.truncf %44 : vector<16x16xf32> to vector<16x16xbf16>
    %c0_18 = arith.constant 0 : index
    %c32_19 = arith.constant 32 : index
    %46 = vector.load %arg18[%c0_18, %c32_19] : memref<16x128xbf16, #tpu.memory_space<vmem>>, vector<16x32xbf16>
    %cst_20 = arith.constant dense<0.000000e+00> : vector<16x32xf32>
    %47 = tpu.matmul %45, %46, %cst_20 {dimension_numbers = #tpu.dot_dimension_numbers<[1], [0], [0], [1], [0, 0, 1, 1], [], []>} : vector<16x16xbf16>, vector<16x32xbf16>, vector<16x32xf32> -> vector<16x32xf32>
    %48 = arith.truncf %47 : vector<16x32xf32> to vector<16x32xbf16>
    %c0_21 = arith.constant 0 : index
    %c32_22 = arith.constant 32 : index
    %49 = vector.load %arg19[%c0_21, %c32_22] : memref<16x128xbf16, #tpu.memory_space<vmem>>, vector<16x32xbf16>
    tpu.vector_store %arg19[%c0_21, %c32_22], %48 {strides = array<i32>} : memref<16x128xbf16, #tpu.memory_space<vmem>>, vector<16x32xbf16>,
    %50 = vector.extract_strided_slice %9 {offsets = [0, 64], sizes = [16, 32], strides = [1, 1]} : vector<16x128xbf16> to vector<16x32xbf16>
    %c64 = arith.constant 64 : index
    %c0_23 = arith.constant 0 : index
    %51 = vector.load %arg17[%c64, %c0_23] : memref<128x16xbf16, #tpu.memory_space<vmem>>, vector<32x16xbf16>
    %cst_24 = arith.constant dense<0.000000e+00> : vector<16x16xf32>
    %52 = tpu.matmul %50, %51, %cst_24 {dimension_numbers = #tpu.dot_dimension_numbers<[1], [0], [0], [1], [0, 0, 1, 1], [], []>} : vector<16x32xbf16>, vector<32x16xbf16>, vector<16x16xf32> -> vector<16x16xf32>
    %cst_25 = arith.constant 0.176776692 : f32
    %53 = vector.broadcast %cst_25 : f32 to vector<16x16xf32>
    %54 = arith.mulf %52, %53 : vector<16x16xf32>
    %cst_26 = arith.constant dense<0xFF800000> : vector<16xf32>
    %55 = vector.multi_reduction <maximumf>, %54, %cst_26 [1] : vector<16x16xf32> to vector<16xf32>
    %56 = vector.shape_cast %55 : vector<16xf32> to vector<16x1xf32>
    %57 = vector.broadcast %56 : vector<16x1xf32> to vector<16x16xf32>
    %58 = arith.subf %54, %57 : vector<16x16xf32>
    %59 = math.exp %58 : vector<16x16xf32>
    %cst_27 = arith.constant dense<0.000000e+00> : vector<16xf32>
    %60 = vector.multi_reduction <add>, %59, %cst_27 [1] : vector<16x16xf32> to vector<16xf32>
    %61 = vector.shape_cast %60 : vector<16xf32> to vector<16x1xf32>
    %62 = tpu.reciprocal %61 {approx = true} : vector<16x1xf32> -> vector<16x1xf32>
    %63 = vector.broadcast %62 : vector<16x1xf32> to vector<16x16xf32>
    %64 = arith.mulf %59, %63 : vector<16x16xf32>
    %65 = arith.truncf %64 : vector<16x16xf32> to vector<16x16xbf16>
    %c0_28 = arith.constant 0 : index
    %c64_29 = arith.constant 64 : index
    %66 = vector.load %arg18[%c0_28, %c64_29] : memref<16x128xbf16, #tpu.memory_space<vmem>>, vector<16x32xbf16>
    %cst_30 = arith.constant dense<0.000000e+00> : vector<16x32xf32>
    %67 = tpu.matmul %65, %66, %cst_30 {dimension_numbers = #tpu.dot_dimension_numbers<[1], [0], [0], [1], [0, 0, 1, 1], [], []>} : vector<16x16xbf16>, vector<16x32xbf16>, vector<16x32xf32> -> vector<16x32xf32>
    %68 = arith.truncf %67 : vector<16x32xf32> to vector<16x32xbf16>
    %c0_31 = arith.constant 0 : index
    %c64_32 = arith.constant 64 : index
    %69 = vector.load %arg19[%c0_31, %c64_32] : memref<16x128xbf16, #tpu.memory_space<vmem>>, vector<16x32xbf16>
    tpu.vector_store %arg19[%c0_31, %c64_32], %68 {strides = array<i32>} : memref<16x128xbf16, #tpu.memory_space<vmem>>, vector<16x32xbf16>,
    %70 = vector.extract_strided_slice %9 {offsets = [0, 96], sizes = [16, 32], strides = [1, 1]} : vector<16x128xbf16> to vector<16x32xbf16>
    %c96 = arith.constant 96 : index
    %c0_33 = arith.constant 0 : index
    %71 = vector.load %arg17[%c96, %c0_33] : memref<128x16xbf16, #tpu.memory_space<vmem>>, vector<32x16xbf16>
    %cst_34 = arith.constant dense<0.000000e+00> : vector<16x16xf32>
    %72 = tpu.matmul %70, %71, %cst_34 {dimension_numbers = #tpu.dot_dimension_numbers<[1], [0], [0], [1], [0, 0, 1, 1], [], []>} : vector<16x32xbf16>, vector<32x16xbf16>, vector<16x16xf32> -> vector<16x16xf32>
    %cst_35 = arith.constant 0.176776692 : f32
    %73 = vector.broadcast %cst_35 : f32 to vector<16x16xf32>
    %74 = arith.mulf %72, %73 : vector<16x16xf32>
    %cst_36 = arith.constant dense<0xFF800000> : vector<16xf32>
    %75 = vector.multi_reduction <maximumf>, %74, %cst_36 [1] : vector<16x16xf32> to vector<16xf32>
    %76 = vector.shape_cast %75 : vector<16xf32> to vector<16x1xf32>
    %77 = vector.broadcast %76 : vector<16x1xf32> to vector<16x16xf32>
    %78 = arith.subf %74, %77 : vector<16x16xf32>
    %79 = math.exp %78 : vector<16x16xf32>
    %cst_37 = arith.constant dense<0.000000e+00> : vector<16xf32>
    %80 = vector.multi_reduction <add>, %79, %cst_37 [1] : vector<16x16xf32> to vector<16xf32>
    %81 = vector.shape_cast %80 : vector<16xf32> to vector<16x1xf32>
    %82 = tpu.reciprocal %81 {approx = true} : vector<16x1xf32> -> vector<16x1xf32>
    %83 = vector.broadcast %82 : vector<16x1xf32> to vector<16x16xf32>
    %84 = arith.mulf %79, %83 : vector<16x16xf32>
    %85 = arith.truncf %84 : vector<16x16xf32> to vector<16x16xbf16>
    %c0_38 = arith.constant 0 : index
    %c96_39 = arith.constant 96 : index
    %86 = vector.load %arg18[%c0_38, %c96_39] : memref<16x128xbf16, #tpu.memory_space<vmem>>, vector<16x32xbf16>
    %cst_40 = arith.constant dense<0.000000e+00> : vector<16x32xf32>
    %87 = tpu.matmul %85, %86, %cst_40 {dimension_numbers = #tpu.dot_dimension_numbers<[1], [0], [0], [1], [0, 0, 1, 1], [], []>} : vector<16x16xbf16>, vector<16x32xbf16>, vector<16x32xf32> -> vector<16x32xf32>
    %88 = arith.truncf %87 : vector<16x32xf32> to vector<16x32xbf16>
    %c0_41 = arith.constant 0 : index
    %c96_42 = arith.constant 96 : index
    %89 = vector.load %arg19[%c0_41, %c96_42] : memref<16x128xbf16, #tpu.memory_space<vmem>>, vector<16x32xbf16>
    tpu.vector_store %arg19[%c0_41, %c96_42], %88 {strides = array<i32>} : memref<16x128xbf16, #tpu.memory_space<vmem>>, vector<16x32xbf16>,
    %c0_43 = arith.constant 0 : index
    %c0_44 = arith.constant 0 : index
    %90 = vector.load %arg19[%c0_43, %c0_44] : memref<16x128xbf16, #tpu.memory_space<vmem>>, vector<16x128xbf16>
    %c0_45 = arith.constant 0 : index
    %c0_46 = arith.constant 0 : index
    %91 = vector.load %arg5[%c0_45, %c0_46] : memref<128x128xbf16, #tpu.memory_space<vmem>>, vector<128x128xbf16>
    %cst_47 = arith.constant dense<0.000000e+00> : vector<16x128xf32>
    %92 = tpu.matmul %90, %91, %cst_47 {dimension_numbers = #tpu.dot_dimension_numbers<[1], [0], [0], [1], [0, 0, 1, 1], [], []>} : vector<16x128xbf16>, vector<128x128xbf16>, vector<16x128xf32> -> vector<16x128xf32>
    %c0_48 = arith.constant 0 : index
    %c0_49 = arith.constant 0 : index
    %93 = vector.load %arg6[%c0_48, %c0_49] : memref<1x128xf32, #tpu.memory_space<vmem>>, vector<1x128xf32>
    %94 = vector.broadcast %93 : vector<1x128xf32> to vector<16x128xf32>
    %95 = arith.addf %92, %94 : vector<16x128xf32>
    %96 = arith.addf %95, %7 : vector<16x128xf32>
    %cst_50 = arith.constant dense<0.000000e+00> : vector<16xf32>
    %97 = vector.multi_reduction <add>, %96, %cst_50 [1] : vector<16x128xf32> to vector<16xf32>
    %98 = vector.shape_cast %97 : vector<16xf32> to vector<16x1xf32>
    %cst_51 = arith.constant 1.280000e+02 : f32
    %99 = vector.broadcast %cst_51 : f32 to vector<16x1xf32>
    %100 = arith.divf %98, %99 : vector<16x1xf32>
    %101 = vector.broadcast %100 : vector<16x1xf32> to vector<16x128xf32>
    %102 = arith.subf %96, %101 : vector<16x128xf32>
    %103 = arith.mulf %102, %102 : vector<16x128xf32>
    %cst_52 = arith.constant dense<0.000000e+00> : vector<16xf32>
    %104 = vector.multi_reduction <add>, %103, %cst_52 [1] : vector<16x128xf32> to vector<16xf32>
    %105 = vector.shape_cast %104 : vector<16xf32> to vector<16x1xf32>
    %cst_53 = arith.constant 1.280000e+02 : f32
    %106 = vector.broadcast %cst_53 : f32 to vector<16x1xf32>
    %107 = arith.divf %105, %106 : vector<16x1xf32>
    %cst_54 = arith.constant 9.99999974E-6 : f32
    %108 = vector.broadcast %cst_54 : f32 to vector<16x1xf32>
    %109 = arith.addf %107, %108 : vector<16x1xf32>
    %110 = math.rsqrt %109 : vector<16x1xf32>
    %111 = vector.broadcast %110 : vector<16x1xf32> to vector<16x128xf32>
    %112 = arith.mulf %102, %111 : vector<16x128xf32>
    %c0_55 = arith.constant 0 : index
    %c0_56 = arith.constant 0 : index
    %113 = vector.load %arg7[%c0_55, %c0_56] : memref<1x128xf32, #tpu.memory_space<vmem>>, vector<1x128xf32>
    %114 = vector.broadcast %113 : vector<1x128xf32> to vector<16x128xf32>
    %115 = arith.mulf %112, %114 : vector<16x128xf32>
    %c0_57 = arith.constant 0 : index
    %c0_58 = arith.constant 0 : index
    %116 = vector.load %arg8[%c0_57, %c0_58] : memref<1x128xf32, #tpu.memory_space<vmem>>, vector<1x128xf32>
    %117 = vector.broadcast %116 : vector<1x128xf32> to vector<16x128xf32>
    %118 = arith.addf %115, %117 : vector<16x128xf32>
    %119 = arith.truncf %118 : vector<16x128xf32> to vector<16x128xbf16>
    %c0_59 = arith.constant 0 : index
    %c0_60 = arith.constant 0 : index
    %120 = vector.load %arg9[%c0_59, %c0_60] : memref<128x128xbf16, #tpu.memory_space<vmem>>, vector<128x128xbf16>
    %cst_61 = arith.constant dense<0.000000e+00> : vector<16x128xf32>
    %121 = tpu.matmul %119, %120, %cst_61 {dimension_numbers = #tpu.dot_dimension_numbers<[1], [0], [0], [1], [0, 0, 1, 1], [], []>} : vector<16x128xbf16>, vector<128x128xbf16>, vector<16x128xf32> -> vector<16x128xf32>
    %c0_62 = arith.constant 0 : index
    %c0_63 = arith.constant 0 : index
    %122 = vector.load %arg10[%c0_62, %c0_63] : memref<1x128xf32, #tpu.memory_space<vmem>>, vector<1x128xf32>
    %123 = vector.broadcast %122 : vector<1x128xf32> to vector<16x128xf32>
    %124 = arith.addf %121, %123 : vector<16x128xf32>
    %cst_64 = arith.constant 0.000000e+00 : f32
    %125 = vector.broadcast %cst_64 : f32 to vector<16x128xf32>
    %126 = arith.maximumf %124, %125 : vector<16x128xf32>
    %127 = arith.truncf %126 : vector<16x128xf32> to vector<16x128xbf16>
    %c0_65 = arith.constant 0 : index
    %c0_66 = arith.constant 0 : index
    %128 = vector.load %arg11[%c0_65, %c0_66] : memref<128x128xbf16, #tpu.memory_space<vmem>>, vector<128x128xbf16>
    %cst_67 = arith.constant dense<0.000000e+00> : vector<16x128xf32>
    %129 = tpu.matmul %127, %128, %cst_67 {dimension_numbers = #tpu.dot_dimension_numbers<[1], [0], [0], [1], [0, 0, 1, 1], [], []>} : vector<16x128xbf16>, vector<128x128xbf16>, vector<16x128xf32> -> vector<16x128xf32>
    %c0_68 = arith.constant 0 : index
    %c0_69 = arith.constant 0 : index
    %130 = vector.load %arg12[%c0_68, %c0_69] : memref<1x128xf32, #tpu.memory_space<vmem>>, vector<1x128xf32>
    %131 = vector.broadcast %130 : vector<1x128xf32> to vector<16x128xf32>
    %132 = arith.addf %129, %131 : vector<16x128xf32>
    %133 = arith.addf %132, %118 : vector<16x128xf32>
    %cst_70 = arith.constant dense<0.000000e+00> : vector<16xf32>
    %134 = vector.multi_reduction <add>, %133, %cst_70 [1] : vector<16x128xf32> to vector<16xf32>
    %135 = vector.shape_cast %134 : vector<16xf32> to vector<16x1xf32>
    %cst_71 = arith.constant 1.280000e+02 : f32
    %136 = vector.broadcast %cst_71 : f32 to vector<16x1xf32>
    %137 = arith.divf %135, %136 : vector<16x1xf32>
    %138 = vector.broadcast %137 : vector<16x1xf32> to vector<16x128xf32>
    %139 = arith.subf %133, %138 : vector<16x128xf32>
    %140 = arith.mulf %139, %139 : vector<16x128xf32>
    %cst_72 = arith.constant dense<0.000000e+00> : vector<16xf32>
    %141 = vector.multi_reduction <add>, %140, %cst_72 [1] : vector<16x128xf32> to vector<16xf32>
    %142 = vector.shape_cast %141 : vector<16xf32> to vector<16x1xf32>
    %cst_73 = arith.constant 1.280000e+02 : f32
    %143 = vector.broadcast %cst_73 : f32 to vector<16x1xf32>
    %144 = arith.divf %142, %143 : vector<16x1xf32>
    %cst_74 = arith.constant 9.99999974E-6 : f32
    %145 = vector.broadcast %cst_74 : f32 to vector<16x1xf32>
    %146 = arith.addf %144, %145 : vector<16x1xf32>
    %147 = math.rsqrt %146 : vector<16x1xf32>
    %148 = vector.broadcast %147 : vector<16x1xf32> to vector<16x128xf32>
    %149 = arith.mulf %139, %148 : vector<16x128xf32>
    %c0_75 = arith.constant 0 : index
    %c0_76 = arith.constant 0 : index
    %150 = vector.load %arg13[%c0_75, %c0_76] : memref<1x128xf32, #tpu.memory_space<vmem>>, vector<1x128xf32>
    %151 = vector.broadcast %150 : vector<1x128xf32> to vector<16x128xf32>
    %152 = arith.mulf %149, %151 : vector<16x128xf32>
    %c0_77 = arith.constant 0 : index
    %c0_78 = arith.constant 0 : index
    %153 = vector.load %arg14[%c0_77, %c0_78] : memref<1x128xf32, #tpu.memory_space<vmem>>, vector<1x128xf32>
    %154 = vector.broadcast %153 : vector<1x128xf32> to vector<16x128xf32>
    %155 = arith.addf %152, %154 : vector<16x128xf32>
    %c0_79 = arith.constant 0 : index
    %c0_80 = arith.constant 0 : index
    %c0_81 = arith.constant 0 : index
    %156 = vector.load %arg15[%c0_79, %c0_80, %c0_81] : memref<1x16x128xf32, #tpu.memory_space<vmem>>, vector<1x16x128xf32>
    %157 = vector.shape_cast %156 : vector<1x16x128xf32> to vector<16x128xf32>
    %158 = vector.shape_cast %155 : vector<16x128xf32> to vector<1x16x128xf32>
    tpu.vector_store %arg15[%c0_79, %c0_80, %c0_81], %158 {strides = array<i32>} : memref<1x16x128xf32, #tpu.memory_space<vmem>>, vector<1x16x128xf32>,
    return
  }
  func.func @transform_0(%arg0: i32, %arg1: i32) -> (i32, i32, i32) {
    %c0_i32 = arith.constant 0 : i32
    %c0_i32_0 = arith.constant 0 : i32
    %c0_i32_1 = arith.constant 0 : i32
    return %arg0, %c0_i32, %c0_i32_0 : i32, i32, i32
  }
  func.func @transform_1(%arg0: i32, %arg1: i32) -> (i32, i32) {
    %c0_i32 = arith.constant 0 : i32
    %c0_i32_0 = arith.constant 0 : i32
    %c0_i32_1 = arith.constant 0 : i32
    return %c0_i32, %c0_i32_0 : i32, i32
  }
  func.func @transform_2(%arg0: i32, %arg1: i32) -> (i32, i32) {
    %c0_i32 = arith.constant 0 : i32
    %c0_i32_0 = arith.constant 0 : i32
    %c0_i32_1 = arith.constant 0 : i32
    return %c0_i32, %c0_i32_0 : i32, i32
  }
  func.func @transform_3(%arg0: i32, %arg1: i32) -> (i32, i32) {
    %c0_i32 = arith.constant 0 : i32
    %c0_i32_0 = arith.constant 0 : i32
    %c0_i32_1 = arith.constant 0 : i32
    return %c0_i32, %c0_i32_0 : i32, i32
  }
  func.func @transform_4(%arg0: i32, %arg1: i32) -> (i32, i32) {
    %c0_i32 = arith.constant 0 : i32
    %c0_i32_0 = arith.constant 0 : i32
    %c0_i32_1 = arith.constant 0 : i32
    return %c0_i32, %c0_i32_0 : i32, i32
  }
  func.func @transform_5(%arg0: i32, %arg1: i32) -> (i32, i32) {
    %c0_i32 = arith.constant 0 : i32
    %c0_i32_0 = arith.constant 0 : i32
    %c0_i32_1 = arith.constant 0 : i32
    return %c0_i32, %c0_i32_0 : i32, i32
  }
  func.func @transform_6(%arg0: i32, %arg1: i32) -> (i32, i32) {
    %c0_i32 = arith.constant 0 : i32
    %c0_i32_0 = arith.constant 0 : i32
    %c0_i32_1 = arith.constant 0 : i32
    return %c0_i32, %c0_i32_0 : i32, i32
  }
  func.func @transform_7(%arg0: i32, %arg1: i32) -> (i32, i32) {
    %c0_i32 = arith.constant 0 : i32
    %c0_i32_0 = arith.constant 0 : i32
    %c0_i32_1 = arith.constant 0 : i32
    return %c0_i32, %c0_i32_0 : i32, i32
  }
  func.func @transform_8(%arg0: i32, %arg1: i32) -> (i32, i32) {
    %c0_i32 = arith.constant 0 : i32
    %c0_i32_0 = arith.constant 0 : i32
    %c0_i32_1 = arith.constant 0 : i32
    return %c0_i32, %c0_i32_0 : i32, i32
  }
  func.func @transform_9(%arg0: i32, %arg1: i32) -> (i32, i32) {
    %c0_i32 = arith.constant 0 : i32
    %c0_i32_0 = arith.constant 0 : i32
    %c0_i32_1 = arith.constant 0 : i32
    return %c0_i32, %c0_i32_0 : i32, i32
  }
  func.func @transform_10(%arg0: i32, %arg1: i32) -> (i32, i32) {
    %c0_i32 = arith.constant 0 : i32
    %c0_i32_0 = arith.constant 0 : i32
    %c0_i32_1 = arith.constant 0 : i32
    return %c0_i32, %c0_i32_0 : i32, i32
  }
  func.func @transform_11(%arg0: i32, %arg1: i32) -> (i32, i32) {
    %c0_i32 = arith.constant 0 : i32
    %c0_i32_0 = arith.constant 0 : i32
    %c0_i32_1 = arith.constant 0 : i32
    return %c0_i32, %c0_i32_0 : i32, i32
  }
  func.func @transform_12(%arg0: i32, %arg1: i32) -> (i32, i32) {
    %c0_i32 = arith.constant 0 : i32
    %c0_i32_0 = arith.constant 0 : i32
    %c0_i32_1 = arith.constant 0 : i32
    return %c0_i32, %c0_i32_0 : i32, i32
  }
  func.func @transform_13(%arg0: i32, %arg1: i32) -> (i32, i32, i32) {
    %c0_i32 = arith.constant 0 : i32
    %c0_i32_0 = arith.constant 0 : i32
    return %arg0, %arg1, %c0_i32 : i32, i32, i32
  }
}

module attributes {stable_mosaic.version = 11 : i64} {
  func.func @encoder_block_kernel(%arg0: i32, %arg1: i32, %arg2: memref<1x16x128xf32, #tpu.memory_space<vmem>>, %arg3: memref<128x384xbf16, #tpu.memory_space<vmem>>, %arg4: memref<1x384xf32, #tpu.memory_space<vmem>>, %arg5: memref<128x128xbf16, #tpu.memory_space<vmem>>, %arg6: memref<1x128xf32, #tpu.memory_space<vmem>>, %arg7: memref<1x128xf32, #tpu.memory_space<vmem>>, %arg8: memref<1x128xf32, #tpu.memory_space<vmem>>, %arg9: memref<128x128xbf16, #tpu.memory_space<vmem>>, %arg10: memref<1x128xf32, #tpu.memory_space<vmem>>, %arg11: memref<128x128xbf16, #tpu.memory_space<vmem>>, %arg12: memref<1x128xf32, #tpu.memory_space<vmem>>, %arg13: memref<1x128xf32, #tpu.memory_space<vmem>>, %arg14: memref<1x128xf32, #tpu.memory_space<vmem>>, %arg15: memref<1x16x128xf32, #tpu.memory_space<vmem>>, %arg16: memref<16x128xbf16, #tpu.memory_space<vmem>>, %arg17: memref<128x16xbf16, #tpu.memory_space<vmem>>, %arg18: memref<16x128xbf16, #tpu.memory_space<vmem>>, %arg19: memref<16x128xbf16, #tpu.memory_space<vmem>>) attributes {dimension_semantics = [#tpu.dimension_semantics<parallel>, #tpu.dimension_semantics<arbitrary>], iteration_bounds = array<i64: 2, 1>, scalar_prefetch = 0 : i64, scratch_operands = 4 : i64, tpu.core_type = #tpu.core_type<tc>, window_params = [{transform_indices = @transform_0, window_bounds = array<i64: 1, 16, 128>}, {pipeline_mode = #tpu.pipeline_mode<synchronous>, transform_indices = @transform_1, window_bounds = array<i64: 128, 384>}, {pipeline_mode = #tpu.pipeline_mode<synchronous>, transform_indices = @transform_2, window_bounds = array<i64: 1, 384>}, {pipeline_mode = #tpu.pipeline_mode<synchronous>, transform_indices = @transform_3, window_bounds = array<i64: 128, 128>}, {pipeline_mode = #tpu.pipeline_mode<synchronous>, transform_indices = @transform_4, window_bounds = array<i64: 1, 128>}, {pipeline_mode = #tpu.pipeline_mode<synchronous>, transform_indices = @transform_5, window_bounds = array<i64: 1, 128>}, {pipeline_mode = #tpu.pipeline_mode<synchronous>, transform_indices = @transform_6, window_bounds = array<i64: 1, 128>}, {pipeline_mode = #tpu.pipeline_mode<synchronous>, transform_indices = @transform_7, window_bounds = array<i64: 128, 128>}, {pipeline_mode = #tpu.pipeline_mode<synchronous>, transform_indices = @transform_8, window_bounds = array<i64: 1, 128>}, {pipeline_mode = #tpu.pipeline_mode<synchronous>, transform_indices = @transform_9, window_bounds = array<i64: 128, 128>}, {pipeline_mode = #tpu.pipeline_mode<synchronous>, transform_indices = @transform_10, window_bounds = array<i64: 1, 128>}, {pipeline_mode = #tpu.pipeline_mode<synchronous>, transform_indices = @transform_11, window_bounds = array<i64: 1, 128>}, {pipeline_mode = #tpu.pipeline_mode<synchronous>, transform_indices = @transform_12, window_bounds = array<i64: 1, 128>}, {transform_indices = @transform_13, window_bounds = array<i64: 1, 16, 128>}]} {
    %c0_i32 = arith.constant 0 : i32
    %0 = arith.cmpi eq, %arg1, %c0_i32 : i32
    %1 = arith.extui %0 : i1 to i32
    %c0_i32_0 = arith.constant 0 : i32
    %2 = arith.cmpi ne, %1, %c0_i32_0 : i32
    scf.if %2 {
      %c0_82 = arith.constant 0 : index
      %c0_83 = arith.constant 0 : index
      %c0_84 = arith.constant 0 : index
      %159 = vector.load %arg2[%c0_82, %c0_83, %c0_84] : memref<1x16x128xf32, #tpu.memory_space<vmem>>, vector<1x16x128xf32>
      %160 = vector.shape_cast %159 : vector<1x16x128xf32> to vector<16x128xf32>
      %161 = arith.truncf %160 : vector<16x128xf32> to vector<16x128xbf16>
      %c0_85 = arith.constant 0 : index
      %c0_86 = arith.constant 0 : index
      %162 = vector.load %arg3[%c0_85, %c0_86] : memref<128x384xbf16, #tpu.memory_space<vmem>>, vector<128x384xbf16>
      %cst_87 = arith.constant dense<0.000000e+00> : vector<16x384xf32>
      %163 = tpu.matmul %161, %162, %cst_87 {dimension_numbers = #tpu.dot_dimension_numbers<[1], [0], [0], [1], [0, 0, 1, 1], [], []>} : vector<16x128xbf16>, vector<128x384xbf16>, vector<16x384xf32> -> vector<16x384xf32>
      %c0_88 = arith.constant 0 : index
      %c0_89 = arith.constant 0 : index
      %164 = vector.load %arg4[%c0_88, %c0_89] : memref<1x384xf32, #tpu.memory_space<vmem>>, vector<1x384xf32>
      %165 = vector.broadcast %164 : vector<1x384xf32> to vector<16x384xf32>
      %166 = arith.addf %163, %165 : vector<16x384xf32>
      %167 = vector.extract_strided_slice %166 {offsets = [0, 0], sizes = [16, 128], strides = [1, 1]} : vector<16x384xf32> to vector<16x128xf32>
      %168 = arith.truncf %167 : vector<16x128xf32> to vector<16x128xbf16>
      %c0_90 = arith.constant 0 : index
      %c0_91 = arith.constant 0 : index
      %169 = vector.load %arg16[%c0_90, %c0_91] : memref<16x128xbf16, #tpu.memory_space<vmem>>, vector<16x128xbf16>
      tpu.vector_store %arg16[%c0_90, %c0_91], %168 {strides = array<i32>} : memref<16x128xbf16, #tpu.memory_space<vmem>>, vector<16x128xbf16>,
      %170 = vector.extract_strided_slice %166 {offsets = [0, 128], sizes = [16, 128], strides = [1, 1]} : vector<16x384xf32> to vector<16x128xf32>
      %171 = tpu.transpose %170, [1, 0] : vector<16x128xf32> -> vector<128x16xf32>
      %172 = arith.truncf %171 : vector<128x16xf32> to vector<128x16xbf16>
      %c0_92 = arith.constant 0 : index
      %c0_93 = arith.constant 0 : index
      %173 = vector.load %arg17[%c0_92, %c0_93] : memref<128x16xbf16, #tpu.memory_space<vmem>>, vector<128x16xbf16>
      tpu.vector_store %arg17[%c0_92, %c0_93], %172 {strides = array<i32>} : memref<128x16xbf16, #tpu.memory_space<vmem>>, vector<128x16xbf16>,
      %174 = vector.extract_strided_slice %166 {offsets = [0, 256], sizes = [16, 128], strides = [1, 1]} : vector<16x384xf32> to vector<16x128xf32>
      %175 = arith.truncf %174 : vector<16x128xf32> to vector<16x128xbf16>
      %c0_94 = arith.constant 0 : index
      %c0_95 = arith.constant 0 : index
      %176 = vector.load %arg18[%c0_94, %c0_95] : memref<16x128xbf16, #tpu.memory_space<vmem>>, vector<16x128xbf16>
      tpu.vector_store %arg18[%c0_94, %c0_95], %175 {strides = array<i32>} : memref<16x128xbf16, #tpu.memory_space<vmem>>, vector<16x128xbf16>,
    } else {
    }
    %c16_i32 = arith.constant 16 : i32
    %3 = arith.muli %arg1, %c16_i32 : i32
    %4 = tpu.assume_multiple %3, 16 : i32
    %c0 = arith.constant 0 : index
    %5 = arith.index_cast %4 : i32 to index
    %c0_1 = arith.constant 0 : index
    %6 = vector.load %arg2[%c0, %5, %c0_1] : memref<1x16x128xf32, #tpu.memory_space<vmem>>, vector<1x16x128xf32>
    %7 = vector.shape_cast %6 : vector<1x16x128xf32> to vector<16x128xf32>
    %8 = arith.index_cast %4 : i32 to index
    %c0_2 = arith.constant 0 : index
    %9 = vector.load %arg16[%8, %c0_2] : memref<16x128xbf16, #tpu.memory_space<vmem>>, vector<16x128xbf16>
    %10 = vector.extract_strided_slice %9 {offsets = [0, 0], sizes = [16, 32], strides = [1, 1]} : vector<16x128xbf16> to vector<16x32xbf16>
    %c0_3 = arith.constant 0 : index
    %c0_4 = arith.constant 0 : index
    %11 = vector.load %arg17[%c0_3, %c0_4] : memref<128x16xbf16, #tpu.memory_space<vmem>>, vector<32x16xbf16>
    %cst = arith.constant dense<0.000000e+00> : vector<16x16xf32>
    %12 = tpu.matmul %10, %11, %cst {dimension_numbers = #tpu.dot_dimension_numbers<[1], [0], [0], [1], [0, 0, 1, 1], [], []>} : vector<16x32xbf16>, vector<32x16xbf16>, vector<16x16xf32> -> vector<16x16xf32>
    %cst_5 = arith.constant 0.176776692 : f32
    %13 = vector.broadcast %cst_5 : f32 to vector<16x16xf32>
    %14 = arith.mulf %12, %13 : vector<16x16xf32>
    %cst_6 = arith.constant dense<0xFF800000> : vector<16xf32>
    %15 = vector.multi_reduction <maximumf>, %14, %cst_6 [1] : vector<16x16xf32> to vector<16xf32>
    %16 = vector.shape_cast %15 : vector<16xf32> to vector<16x1xf32>
    %17 = vector.broadcast %16 : vector<16x1xf32> to vector<16x16xf32>
    %18 = arith.subf %14, %17 : vector<16x16xf32>
    %19 = math.exp %18 : vector<16x16xf32>
    %cst_7 = arith.constant dense<0.000000e+00> : vector<16xf32>
    %20 = vector.multi_reduction <add>, %19, %cst_7 [1] : vector<16x16xf32> to vector<16xf32>
    %21 = vector.shape_cast %20 : vector<16xf32> to vector<16x1xf32>
    %22 = tpu.reciprocal %21 {approx = true} : vector<16x1xf32> -> vector<16x1xf32>
    %23 = vector.broadcast %22 : vector<16x1xf32> to vector<16x16xf32>
    %24 = arith.mulf %19, %23 : vector<16x16xf32>
    %25 = arith.truncf %24 : vector<16x16xf32> to vector<16x16xbf16>
    %c0_8 = arith.constant 0 : index
    %c0_9 = arith.constant 0 : index
    %26 = vector.load %arg18[%c0_8, %c0_9] : memref<16x128xbf16, #tpu.memory_space<vmem>>, vector<16x32xbf16>
    %cst_10 = arith.constant dense<0.000000e+00> : vector<16x32xf32>
    %27 = tpu.matmul %25, %26, %cst_10 {dimension_numbers = #tpu.dot_dimension_numbers<[1], [0], [0], [1], [0, 0, 1, 1], [], []>} : vector<16x16xbf16>, vector<16x32xbf16>, vector<16x32xf32> -> vector<16x32xf32>
    %28 = arith.truncf %27 : vector<16x32xf32> to vector<16x32xbf16>
    %c0_11 = arith.constant 0 : index
    %c0_12 = arith.constant 0 : index
    %29 = vector.load %arg19[%c0_11, %c0_12] : memref<16x128xbf16, #tpu.memory_space<vmem>>, vector<16x32xbf16>
    tpu.vector_store %arg19[%c0_11, %c0_12], %28 {strides = array<i32>} : memref<16x128xbf16, #tpu.memory_space<vmem>>, vector<16x32xbf16>,
    %30 = vector.extract_strided_slice %9 {offsets = [0, 32], sizes = [16, 32], strides = [1, 1]} : vector<16x128xbf16> to vector<16x32xbf16>
    %c32 = arith.constant 32 : index
    %c0_13 = arith.constant 0 : index
    %31 = vector.load %arg17[%c32, %c0_13] : memref<128x16xbf16, #tpu.memory_space<vmem>>, vector<32x16xbf16>
    %cst_14 = arith.constant dense<0.000000e+00> : vector<16x16xf32>
    %32 = tpu.matmul %30, %31, %cst_14 {dimension_numbers = #tpu.dot_dimension_numbers<[1], [0], [0], [1], [0, 0, 1, 1], [], []>} : vector<16x32xbf16>, vector<32x16xbf16>, vector<16x16xf32> -> vector<16x16xf32>
    %cst_15 = arith.constant 0.176776692 : f32
    %33 = vector.broadcast %cst_15 : f32 to vector<16x16xf32>
    %34 = arith.mulf %32, %33 : vector<16x16xf32>
    %cst_16 = arith.constant dense<0xFF800000> : vector<16xf32>
    %35 = vector.multi_reduction <maximumf>, %34, %cst_16 [1] : vector<16x16xf32> to vector<16xf32>
    %36 = vector.shape_cast %35 : vector<16xf32> to vector<16x1xf32>
    %37 = vector.broadcast %36 : vector<16x1xf32> to vector<16x16xf32>
    %38 = arith.subf %34, %37 : vector<16x16xf32>
    %39 = math.exp %38 : vector<16x16xf32>
    %cst_17 = arith.constant dense<0.000000e+00> : vector<16xf32>
    %40 = vector.multi_reduction <add>, %39, %cst_17 [1] : vector<16x16xf32> to vector<16xf32>
    %41 = vector.shape_cast %40 : vector<16xf32> to vector<16x1xf32>
    %42 = tpu.reciprocal %41 {approx = true} : vector<16x1xf32> -> vector<16x1xf32>
    %43 = vector.broadcast %42 : vector<16x1xf32> to vector<16x16xf32>
    %44 = arith.mulf %39, %43 : vector<16x16xf32>
    %45 = arith.truncf %44 : vector<16x16xf32> to vector<16x16xbf16>
    %c0_18 = arith.constant 0 : index
    %c32_19 = arith.constant 32 : index
    %46 = vector.load %arg18[%c0_18, %c32_19] : memref<16x128xbf16, #tpu.memory_space<vmem>>, vector<16x32xbf16>
    %cst_20 = arith.constant dense<0.000000e+00> : vector<16x32xf32>
    %47 = tpu.matmul %45, %46, %cst_20 {dimension_numbers = #tpu.dot_dimension_numbers<[1], [0], [0], [1], [0, 0, 1, 1], [], []>} : vector<16x16xbf16>, vector<16x32xbf16>, vector<16x32xf32> -> vector<16x32xf32>
    %48 = arith.truncf %47 : vector<16x32xf32> to vector<16x32xbf16>
    %c0_21 = arith.constant 0 : index
    %c32_22 = arith.constant 32 : index
    %49 = vector.load %arg19[%c0_21, %c32_22] : memref<16x128xbf16, #tpu.memory_space<vmem>>, vector<16x32xbf16>
    tpu.vector_store %arg19[%c0_21, %c32_22], %48 {strides = array<i32>} : memref<16x128xbf16, #tpu.memory_space<vmem>>, vector<16x32xbf16>,
    %50 = vector.extract_strided_slice %9 {offsets = [0, 64], sizes = [16, 32], strides = [1, 1]} : vector<16x128xbf16> to vector<16x32xbf16>
    %c64 = arith.constant 64 : index
    %c0_23 = arith.constant 0 : index
    %51 = vector.load %arg17[%c64, %c0_23] : memref<128x16xbf16, #tpu.memory_space<vmem>>, vector<32x16xbf16>
    %cst_24 = arith.constant dense<0.000000e+00> : vector<16x16xf32>
    %52 = tpu.matmul %50, %51, %cst_24 {dimension_numbers = #tpu.dot_dimension_numbers<[1], [0], [0], [1], [0, 0, 1, 1], [], []>} : vector<16x32xbf16>, vector<32x16xbf16>, vector<16x16xf32> -> vector<16x16xf32>
    %cst_25 = arith.constant 0.176776692 : f32
    %53 = vector.broadcast %cst_25 : f32 to vector<16x16xf32>
    %54 = arith.mulf %52, %53 : vector<16x16xf32>
    %cst_26 = arith.constant dense<0xFF800000> : vector<16xf32>
    %55 = vector.multi_reduction <maximumf>, %54, %cst_26 [1] : vector<16x16xf32> to vector<16xf32>
    %56 = vector.shape_cast %55 : vector<16xf32> to vector<16x1xf32>
    %57 = vector.broadcast %56 : vector<16x1xf32> to vector<16x16xf32>
    %58 = arith.subf %54, %57 : vector<16x16xf32>
    %59 = math.exp %58 : vector<16x16xf32>
    %cst_27 = arith.constant dense<0.000000e+00> : vector<16xf32>
    %60 = vector.multi_reduction <add>, %59, %cst_27 [1] : vector<16x16xf32> to vector<16xf32>
    %61 = vector.shape_cast %60 : vector<16xf32> to vector<16x1xf32>
    %62 = tpu.reciprocal %61 {approx = true} : vector<16x1xf32> -> vector<16x1xf32>
    %63 = vector.broadcast %62 : vector<16x1xf32> to vector<16x16xf32>
    %64 = arith.mulf %59, %63 : vector<16x16xf32>
    %65 = arith.truncf %64 : vector<16x16xf32> to vector<16x16xbf16>
    %c0_28 = arith.constant 0 : index
    %c64_29 = arith.constant 64 : index
    %66 = vector.load %arg18[%c0_28, %c64_29] : memref<16x128xbf16, #tpu.memory_space<vmem>>, vector<16x32xbf16>
    %cst_30 = arith.constant dense<0.000000e+00> : vector<16x32xf32>
    %67 = tpu.matmul %65, %66, %cst_30 {dimension_numbers = #tpu.dot_dimension_numbers<[1], [0], [0], [1], [0, 0, 1, 1], [], []>} : vector<16x16xbf16>, vector<16x32xbf16>, vector<16x32xf32> -> vector<16x32xf32>
    %68 = arith.truncf %67 : vector<16x32xf32> to vector<16x32xbf16>
    %c0_31 = arith.constant 0 : index
    %c64_32 = arith.constant 64 : index
    %69 = vector.load %arg19[%c0_31, %c64_32] : memref<16x128xbf16, #tpu.memory_space<vmem>>, vector<16x32xbf16>
    tpu.vector_store %arg19[%c0_31, %c64_32], %68 {strides = array<i32>} : memref<16x128xbf16, #tpu.memory_space<vmem>>, vector<16x32xbf16>,
    %70 = vector.extract_strided_slice %9 {offsets = [0, 96], sizes = [16, 32], strides = [1, 1]} : vector<16x128xbf16> to vector<16x32xbf16>
    %c96 = arith.constant 96 : index
    %c0_33 = arith.constant 0 : index
    %71 = vector.load %arg17[%c96, %c0_33] : memref<128x16xbf16, #tpu.memory_space<vmem>>, vector<32x16xbf16>
    %cst_34 = arith.constant dense<0.000000e+00> : vector<16x16xf32>
    %72 = tpu.matmul %70, %71, %cst_34 {dimension_numbers = #tpu.dot_dimension_numbers<[1], [0], [0], [1], [0, 0, 1, 1], [], []>} : vector<16x32xbf16>, vector<32x16xbf16>, vector<16x16xf32> -> vector<16x16xf32>
    %cst_35 = arith.constant 0.176776692 : f32
    %73 = vector.broadcast %cst_35 : f32 to vector<16x16xf32>
    %74 = arith.mulf %72, %73 : vector<16x16xf32>
    %cst_36 = arith.constant dense<0xFF800000> : vector<16xf32>
    %75 = vector.multi_reduction <maximumf>, %74, %cst_36 [1] : vector<16x16xf32> to vector<16xf32>
    %76 = vector.shape_cast %75 : vector<16xf32> to vector<16x1xf32>
    %77 = vector.broadcast %76 : vector<16x1xf32> to vector<16x16xf32>
    %78 = arith.subf %74, %77 : vector<16x16xf32>
    %79 = math.exp %78 : vector<16x16xf32>
    %cst_37 = arith.constant dense<0.000000e+00> : vector<16xf32>
    %80 = vector.multi_reduction <add>, %79, %cst_37 [1] : vector<16x16xf32> to vector<16xf32>
    %81 = vector.shape_cast %80 : vector<16xf32> to vector<16x1xf32>
    %82 = tpu.reciprocal %81 {approx = true} : vector<16x1xf32> -> vector<16x1xf32>
    %83 = vector.broadcast %82 : vector<16x1xf32> to vector<16x16xf32>
    %84 = arith.mulf %79, %83 : vector<16x16xf32>
    %85 = arith.truncf %84 : vector<16x16xf32> to vector<16x16xbf16>
    %c0_38 = arith.constant 0 : index
    %c96_39 = arith.constant 96 : index
    %86 = vector.load %arg18[%c0_38, %c96_39] : memref<16x128xbf16, #tpu.memory_space<vmem>>, vector<16x32xbf16>
    %cst_40 = arith.constant dense<0.000000e+00> : vector<16x32xf32>
    %87 = tpu.matmul %85, %86, %cst_40 {dimension_numbers = #tpu.dot_dimension_numbers<[1], [0], [0], [1], [0, 0, 1, 1], [], []>} : vector<16x16xbf16>, vector<16x32xbf16>, vector<16x32xf32> -> vector<16x32xf32>
    %88 = arith.truncf %87 : vector<16x32xf32> to vector<16x32xbf16>
    %c0_41 = arith.constant 0 : index
    %c96_42 = arith.constant 96 : index
    %89 = vector.load %arg19[%c0_41, %c96_42] : memref<16x128xbf16, #tpu.memory_space<vmem>>, vector<16x32xbf16>
    tpu.vector_store %arg19[%c0_41, %c96_42], %88 {strides = array<i32>} : memref<16x128xbf16, #tpu.memory_space<vmem>>, vector<16x32xbf16>,
    %c0_43 = arith.constant 0 : index
    %c0_44 = arith.constant 0 : index
    %90 = vector.load %arg19[%c0_43, %c0_44] : memref<16x128xbf16, #tpu.memory_space<vmem>>, vector<16x128xbf16>
    %c0_45 = arith.constant 0 : index
    %c0_46 = arith.constant 0 : index
    %91 = vector.load %arg5[%c0_45, %c0_46] : memref<128x128xbf16, #tpu.memory_space<vmem>>, vector<128x128xbf16>
    %cst_47 = arith.constant dense<0.000000e+00> : vector<16x128xf32>
    %92 = tpu.matmul %90, %91, %cst_47 {dimension_numbers = #tpu.dot_dimension_numbers<[1], [0], [0], [1], [0, 0, 1, 1], [], []>} : vector<16x128xbf16>, vector<128x128xbf16>, vector<16x128xf32> -> vector<16x128xf32>
    %c0_48 = arith.constant 0 : index
    %c0_49 = arith.constant 0 : index
    %93 = vector.load %arg6[%c0_48, %c0_49] : memref<1x128xf32, #tpu.memory_space<vmem>>, vector<1x128xf32>
    %94 = vector.broadcast %93 : vector<1x128xf32> to vector<16x128xf32>
    %95 = arith.addf %92, %94 : vector<16x128xf32>
    %96 = arith.addf %95, %7 : vector<16x128xf32>
    %cst_50 = arith.constant dense<0.000000e+00> : vector<16xf32>
    %97 = vector.multi_reduction <add>, %96, %cst_50 [1] : vector<16x128xf32> to vector<16xf32>
    %98 = vector.shape_cast %97 : vector<16xf32> to vector<16x1xf32>
    %cst_51 = arith.constant 1.280000e+02 : f32
    %99 = vector.broadcast %cst_51 : f32 to vector<16x1xf32>
    %100 = arith.divf %98, %99 : vector<16x1xf32>
    %101 = vector.broadcast %100 : vector<16x1xf32> to vector<16x128xf32>
    %102 = arith.subf %96, %101 : vector<16x128xf32>
    %103 = arith.mulf %102, %102 : vector<16x128xf32>
    %cst_52 = arith.constant dense<0.000000e+00> : vector<16xf32>
    %104 = vector.multi_reduction <add>, %103, %cst_52 [1] : vector<16x128xf32> to vector<16xf32>
    %105 = vector.shape_cast %104 : vector<16xf32> to vector<16x1xf32>
    %cst_53 = arith.constant 1.280000e+02 : f32
    %106 = vector.broadcast %cst_53 : f32 to vector<16x1xf32>
    %107 = arith.divf %105, %106 : vector<16x1xf32>
    %cst_54 = arith.constant 9.99999974E-6 : f32
    %108 = vector.broadcast %cst_54 : f32 to vector<16x1xf32>
    %109 = arith.addf %107, %108 : vector<16x1xf32>
    %110 = math.rsqrt %109 : vector<16x1xf32>
    %111 = vector.broadcast %110 : vector<16x1xf32> to vector<16x128xf32>
    %112 = arith.mulf %102, %111 : vector<16x128xf32>
    %c0_55 = arith.constant 0 : index
    %c0_56 = arith.constant 0 : index
    %113 = vector.load %arg7[%c0_55, %c0_56] : memref<1x128xf32, #tpu.memory_space<vmem>>, vector<1x128xf32>
    %114 = vector.broadcast %113 : vector<1x128xf32> to vector<16x128xf32>
    %115 = arith.mulf %112, %114 : vector<16x128xf32>
    %c0_57 = arith.constant 0 : index
    %c0_58 = arith.constant 0 : index
    %116 = vector.load %arg8[%c0_57, %c0_58] : memref<1x128xf32, #tpu.memory_space<vmem>>, vector<1x128xf32>
    %117 = vector.broadcast %116 : vector<1x128xf32> to vector<16x128xf32>
    %118 = arith.addf %115, %117 : vector<16x128xf32>
    %119 = arith.truncf %118 : vector<16x128xf32> to vector<16x128xbf16>
    %c0_59 = arith.constant 0 : index
    %c0_60 = arith.constant 0 : index
    %120 = vector.load %arg9[%c0_59, %c0_60] : memref<128x128xbf16, #tpu.memory_space<vmem>>, vector<128x128xbf16>
    %cst_61 = arith.constant dense<0.000000e+00> : vector<16x128xf32>
    %121 = tpu.matmul %119, %120, %cst_61 {dimension_numbers = #tpu.dot_dimension_numbers<[1], [0], [0], [1], [0, 0, 1, 1], [], []>} : vector<16x128xbf16>, vector<128x128xbf16>, vector<16x128xf32> -> vector<16x128xf32>
    %c0_62 = arith.constant 0 : index
    %c0_63 = arith.constant 0 : index
    %122 = vector.load %arg10[%c0_62, %c0_63] : memref<1x128xf32, #tpu.memory_space<vmem>>, vector<1x128xf32>
    %123 = vector.broadcast %122 : vector<1x128xf32> to vector<16x128xf32>
    %124 = arith.addf %121, %123 : vector<16x128xf32>
    %cst_64 = arith.constant 0.000000e+00 : f32
    %125 = vector.broadcast %cst_64 : f32 to vector<16x128xf32>
    %126 = arith.maximumf %124, %125 : vector<16x128xf32>
    %127 = arith.truncf %126 : vector<16x128xf32> to vector<16x128xbf16>
    %c0_65 = arith.constant 0 : index
    %c0_66 = arith.constant 0 : index
    %128 = vector.load %arg11[%c0_65, %c0_66] : memref<128x128xbf16, #tpu.memory_space<vmem>>, vector<128x128xbf16>
    %cst_67 = arith.constant dense<0.000000e+00> : vector<16x128xf32>
    %129 = tpu.matmul %127, %128, %cst_67 {dimension_numbers = #tpu.dot_dimension_numbers<[1], [0], [0], [1], [0, 0, 1, 1], [], []>} : vector<16x128xbf16>, vector<128x128xbf16>, vector<16x128xf32> -> vector<16x128xf32>
    %c0_68 = arith.constant 0 : index
    %c0_69 = arith.constant 0 : index
    %130 = vector.load %arg12[%c0_68, %c0_69] : memref<1x128xf32, #tpu.memory_space<vmem>>, vector<1x128xf32>
    %131 = vector.broadcast %130 : vector<1x128xf32> to vector<16x128xf32>
    %132 = arith.addf %129, %131 : vector<16x128xf32>
    %133 = arith.addf %132, %118 : vector<16x128xf32>
    %cst_70 = arith.constant dense<0.000000e+00> : vector<16xf32>
    %134 = vector.multi_reduction <add>, %133, %cst_70 [1] : vector<16x128xf32> to vector<16xf32>
    %135 = vector.shape_cast %134 : vector<16xf32> to vector<16x1xf32>
    %cst_71 = arith.constant 1.280000e+02 : f32
    %136 = vector.broadcast %cst_71 : f32 to vector<16x1xf32>
    %137 = arith.divf %135, %136 : vector<16x1xf32>
    %138 = vector.broadcast %137 : vector<16x1xf32> to vector<16x128xf32>
    %139 = arith.subf %133, %138 : vector<16x128xf32>
    %140 = arith.mulf %139, %139 : vector<16x128xf32>
    %cst_72 = arith.constant dense<0.000000e+00> : vector<16xf32>
    %141 = vector.multi_reduction <add>, %140, %cst_72 [1] : vector<16x128xf32> to vector<16xf32>
    %142 = vector.shape_cast %141 : vector<16xf32> to vector<16x1xf32>
    %cst_73 = arith.constant 1.280000e+02 : f32
    %143 = vector.broadcast %cst_73 : f32 to vector<16x1xf32>
    %144 = arith.divf %142, %143 : vector<16x1xf32>
    %cst_74 = arith.constant 9.99999974E-6 : f32
    %145 = vector.broadcast %cst_74 : f32 to vector<16x1xf32>
    %146 = arith.addf %144, %145 : vector<16x1xf32>
    %147 = math.rsqrt %146 : vector<16x1xf32>
    %148 = vector.broadcast %147 : vector<16x1xf32> to vector<16x128xf32>
    %149 = arith.mulf %139, %148 : vector<16x128xf32>
    %c0_75 = arith.constant 0 : index
    %c0_76 = arith.constant 0 : index
    %150 = vector.load %arg13[%c0_75, %c0_76] : memref<1x128xf32, #tpu.memory_space<vmem>>, vector<1x128xf32>
    %151 = vector.broadcast %150 : vector<1x128xf32> to vector<16x128xf32>
    %152 = arith.mulf %149, %151 : vector<16x128xf32>
    %c0_77 = arith.constant 0 : index
    %c0_78 = arith.constant 0 : index
    %153 = vector.load %arg14[%c0_77, %c0_78] : memref<1x128xf32, #tpu.memory_space<vmem>>, vector<1x128xf32>
    %154 = vector.broadcast %153 : vector<1x128xf32> to vector<16x128xf32>
    %155 = arith.addf %152, %154 : vector<16x128xf32>
    %c0_79 = arith.constant 0 : index
    %c0_80 = arith.constant 0 : index
    %c0_81 = arith.constant 0 : index
    %156 = vector.load %arg15[%c0_79, %c0_80, %c0_81] : memref<1x16x128xf32, #tpu.memory_space<vmem>>, vector<1x16x128xf32>
    %157 = vector.shape_cast %156 : vector<1x16x128xf32> to vector<16x128xf32>
    %158 = vector.shape_cast %155 : vector<16x128xf32> to vector<1x16x128xf32>
    tpu.vector_store %arg15[%c0_79, %c0_80, %c0_81], %158 {strides = array<i32>} : memref<1x16x128xf32, #tpu.memory_space<vmem>>, vector<1x16x128xf32>,
    return
  }
  func.func @transform_0(%arg0: i32, %arg1: i32) -> (i32, i32, i32) {
    %c0_i32 = arith.constant 0 : i32
    %c0_i32_0 = arith.constant 0 : i32
    %c0_i32_1 = arith.constant 0 : i32
    return %arg0, %c0_i32, %c0_i32_0 : i32, i32, i32
  }
  func.func @transform_1(%arg0: i32, %arg1: i32) -> (i32, i32) {
    %c0_i32 = arith.constant 0 : i32
    %c0_i32_0 = arith.constant 0 : i32
    %c0_i32_1 = arith.constant 0 : i32
    return %c0_i32, %c0_i32_0 : i32, i32
  }
  func.func @transform_2(%arg0: i32, %arg1: i32) -> (i32, i32) {
    %c0_i32 = arith.constant 0 : i32
    %c0_i32_0 = arith.constant 0 : i32
    %c0_i32_1 = arith.constant 0 : i32
    return %c0_i32, %c0_i32_0 : i32, i32
  }
  func.func @transform_3(%arg0: i32, %arg1: i32) -> (i32, i32) {
    %c0_i32 = arith.constant 0 : i32
    %c0_i32_0 = arith.constant 0 : i32
    %c0_i32_1 = arith.constant 0 : i32
    return %c0_i32, %c0_i32_0 : i32, i32
  }
  func.func @transform_4(%arg0: i32, %arg1: i32) -> (i32, i32) {
    %c0_i32 = arith.constant 0 : i32
    %c0_i32_0 = arith.constant 0 : i32
    %c0_i32_1 = arith.constant 0 : i32
    return %c0_i32, %c0_i32_0 : i32, i32
  }
  func.func @transform_5(%arg0: i32, %arg1: i32) -> (i32, i32) {
    %c0_i32 = arith.constant 0 : i32
    %c0_i32_0 = arith.constant 0 : i32
    %c0_i32_1 = arith.constant 0 : i32
    return %c0_i32, %c0_i32_0 : i32, i32
  }
  func.func @transform_6(%arg0: i32, %arg1: i32) -> (i32, i32) {
    %c0_i32 = arith.constant 0 : i32
    %c0_i32_0 = arith.constant 0 : i32
    %c0_i32_1 = arith.constant 0 : i32
    return %c0_i32, %c0_i32_0 : i32, i32
  }
  func.func @transform_7(%arg0: i32, %arg1: i32) -> (i32, i32) {
    %c0_i32 = arith.constant 0 : i32
    %c0_i32_0 = arith.constant 0 : i32
    %c0_i32_1 = arith.constant 0 : i32
    return %c0_i32, %c0_i32_0 : i32, i32
  }
  func.func @transform_8(%arg0: i32, %arg1: i32) -> (i32, i32) {
    %c0_i32 = arith.constant 0 : i32
    %c0_i32_0 = arith.constant 0 : i32
    %c0_i32_1 = arith.constant 0 : i32
    return %c0_i32, %c0_i32_0 : i32, i32
  }
  func.func @transform_9(%arg0: i32, %arg1: i32) -> (i32, i32) {
    %c0_i32 = arith.constant 0 : i32
    %c0_i32_0 = arith.constant 0 : i32
    %c0_i32_1 = arith.constant 0 : i32
    return %c0_i32, %c0_i32_0 : i32, i32
  }
  func.func @transform_10(%arg0: i32, %arg1: i32) -> (i32, i32) {
    %c0_i32 = arith.constant 0 : i32
    %c0_i32_0 = arith.constant 0 : i32
    %c0_i32_1 = arith.constant 0 : i32
    return %c0_i32, %c0_i32_0 : i32, i32
  }
  func.func @transform_11(%arg0: i32, %arg1: i32) -> (i32, i32) {
    %c0_i32 = arith.constant 0 : i32
    %c0_i32_0 = arith.constant 0 : i32
    %c0_i32_1 = arith.constant 0 : i32
    return %c0_i32, %c0_i32_0 : i32, i32
  }
  func.func @transform_12(%arg0: i32, %arg1: i32) -> (i32, i32) {
    %c0_i32 = arith.constant 0 : i32
    %c0_i32_0 = arith.constant 0 : i32
    %c0_i32_1 = arith.constant 0 : i32
    return %c0_i32, %c0_i32_0 : i32, i32
  }
  func.func @transform_13(%arg0: i32, %arg1: i32) -> (i32, i32, i32) {
    %c0_i32 = arith.constant 0 : i32
    %c0_i32_0 = arith.constant 0 : i32
    return %arg0, %arg1, %c0_i32 : i32, i32, i32
  }
}

</mosaic_0001>

<llo_original>
// kernel: tpu_custom_call.1
$region0: #{tpu_custom_call.1}
  #allocation0 [shape = 'u32[]', space=smem, size = 0x4, offset = 0x4, fixed_abs, tag = 'smem constant byte address 0x4 - core index']
  #allocation1 [shape = 'u32[144,128]{1,0:T(1,128)}', space=vmem, size = 0x12000, scoped, tag = 'internal scratch']
  #allocation2 [shape = 'bf16[16,128]{1,0:T(16,128)(2,1)}', space=vmem, size = 0x1000, scoped, tag = 'scratch operand']
  #allocation3 [shape = 'bf16[128,16]{1,0:T(16,128)(2,1)}', space=vmem, size = 0x8000, scoped, tag = 'scratch operand']
  #allocation4 [shape = 'bf16[16,128]{1,0:T(16,128)(2,1)}', space=vmem, size = 0x1000, scoped, tag = 'scratch operand']
  #allocation5 [shape = 'bf16[16,128]{1,0:T(16,128)(2,1)}', space=vmem, size = 0x1000, scoped, tag = 'scratch operand']
  %s0 = inlined_call_operand.hbm [shape: f32[2,16,128], index: 0, kind: input, shape index: {}]
  %s1 = inlined_call_operand.hbm [shape: bf16[128,384], index: 1, kind: input, shape index: {}]
  %s2 = inlined_call_operand.hbm [shape: f32[1,384], index: 2, kind: input, shape index: {}]
  %s3 = inlined_call_operand.hbm [shape: bf16[128,128], index: 3, kind: input, shape index: {}]
  %s4 = inlined_call_operand.hbm [shape: f32[1,128], index: 4, kind: input, shape index: {}]
  %s5 = inlined_call_operand.hbm [shape: f32[1,128], index: 5, kind: input, shape index: {}]
  %s6 = inlined_call_operand.hbm [shape: f32[1,128], index: 6, kind: input, shape index: {}]
  %s7 = inlined_call_operand.hbm [shape: bf16[128,128], index: 7, kind: input, shape index: {}]
  %s8 = inlined_call_operand.hbm [shape: f32[1,128], index: 8, kind: input, shape index: {}]
  %s9 = inlined_call_operand.hbm [shape: bf16[128,128], index: 9, kind: input, shape index: {}]
  %s10 = inlined_call_operand.hbm [shape: f32[1,128], index: 10, kind: input, shape index: {}]
  %s11 = inlined_call_operand.hbm [shape: f32[1,128], index: 11, kind: input, shape index: {}]
  %s12 = inlined_call_operand.hbm [shape: f32[1,128], index: 12, kind: input, shape index: {}]
  %s13 = inlined_call_operand.hbm [shape: f32[2,16,128], index: 13, kind: output, shape index: {}]
  %s14 = sld [smem:[#allocation0]]
  $region141: #{tpu_custom_call.1} parent=0
    _
  %s16 = ssub.s32 1, %s14
  %s17 = scalar_select 0, %s16, %s14
  $region1: #{tpu_custom_call.1} parent=0
    #allocation6 [shape = 'u8[16384]{0}', space=vmem, size = 0x4000, scoped, tag = 'input window, operand 0']
    #allocation7 [shape = 's32[2]{0}', space=sflag, size = 0x8, scoped, tag = 'scoped memory for tpu_custom_call.1']
    #allocation8 [shape = 's32[2]{0}', space=sflag, size = 0x8, scoped, tag = 'scoped memory for tpu_custom_call.1']
    #allocation9 [shape = 'u8[98304]{0}', space=vmem, size = 0x18000, scoped, tag = 'input window, operand 1, single buffered']
    #allocation10 [shape = 's32[1]{0}', space=sflag, size = 0x4, scoped, tag = 'scoped memory for tpu_custom_call.1']
    #allocation11 [shape = 'u8[1536]{0}', space=vmem, size = 0x800, scoped, tag = 'input window, operand 2, single buffered']
    #allocation12 [shape = 'u8[32768]{0}', space=vmem, size = 0x8000, scoped, tag = 'input window, operand 3, single buffered']
    #allocation13 [shape = 's32[1]{0}', space=sflag, size = 0x4, scoped, tag = 'scoped memory for tpu_custom_call.1']
    #allocation14 [shape = 'u8[512]{0}', space=vmem, size = 0x400, scoped, tag = 'input window, operand 4, single buffered']
    #allocation15 [shape = 'u8[512]{0}', space=vmem, size = 0x400, scoped, tag = 'input window, operand 5, single buffered']
    #allocation16 [shape = 's32[1]{0}', space=sflag, size = 0x4, scoped, tag = 'scoped memory for tpu_custom_call.1']
    #allocation17 [shape = 'u8[512]{0}', space=vmem, size = 0x400, scoped, tag = 'input window, operand 6, single buffered']
    #allocation18 [shape = 'u8[32768]{0}', space=vmem, size = 0x8000, scoped, tag = 'input window, operand 7, single buffered']
    #allocation19 [shape = 's32[1]{0}', space=sflag, size = 0x4, scoped, tag = 'scoped memory for tpu_custom_call.1']
    #allocation20 [shape = 'u8[512]{0}', space=vmem, size = 0x400, scoped, tag = 'input window, operand 8, single buffered']
    #allocation21 [shape = 'u8[32768]{0}', space=vmem, size = 0x8000, scoped, tag = 'input window, operand 9, single buffered']
    #allocation22 [shape = 's32[1]{0}', space=sflag, size = 0x4, scoped, tag = 'scoped memory for tpu_custom_call.1']
    #allocation23 [shape = 'u8[512]{0}', space=vmem, size = 0x400, scoped, tag = 'input window, operand 10, single buffered']
    #allocation24 [shape = 'u8[512]{0}', space=vmem, size = 0x400, scoped, tag = 'input window, operand 11, single buffered']
    #allocation25 [shape = 's32[1]{0}', space=sflag, size = 0x4, scoped, tag = 'scoped memory for tpu_custom_call.1']
    #allocation26 [shape = 'u8[512]{0}', space=vmem, size = 0x400, scoped, tag = 'input window, operand 12, single buffered']
    #allocation27 [shape = 'u8[16384]{0}', space=vmem, size = 0x4000, scoped, tag = 'output window, operand 0']
    %18 = vsyncpa [#allocation7], 0
    %s19 = scalar_lea.sflag [#allocation7], 1
    %20 = vsyncpa %s19, 0
    %21 = vsyncpa [#allocation10], 0
    %22 = vsyncpa [#allocation13], 0
    %23 = vsyncpa [#allocation16], 0
    %24 = vsyncpa [#allocation19], 0
    %25 = vsyncpa [#allocation22], 0
    %26 = vsyncpa [#allocation25], 0
    %27 = vsyncpa [#allocation8], 0
    %s28 = scalar_lea.sflag [#allocation8], 1
    %29 = vsyncpa %s28, 0
    loop: start=0, step=1, limit=4
    $region2: #{tpu_custom_call.1} parent=1 // loop_pre_header
      _
    $region3: #{tpu_custom_call.1} parent=1 // loop_header
      %s31 = sphi 0, %s35
      %p32 = scmp.ge.s32.totalorder %s31, 4
      %s38 = sphi 0, %s50
      %s39 = sphi 0, %s46
      %s40 = sphi 0, %s38
      %s41 = sphi 0, %s39
      %s42 = sphi 0, %s40
      %s43 = sphi 0, %s41
      %s53 = sphi 0, %s55
      %s56 = sphi 0, %s53
      %s57 = sphi 0, %s56
      %s73 = sphi 0, %s57
      %s77 = sphi 0, %s77
      %s79 = sphi 0, %s77
      %s80 = sphi 0, %s79
      %s94 = sphi 0, %s80
      %s98 = sphi 0, %s98
      %s100 = sphi 0, %s98
      %s101 = sphi 0, %s100
      %s115 = sphi 0, %s101
      %s119 = sphi 0, %s119
      %s121 = sphi 0, %s119
      %s122 = sphi 0, %s121
      %s136 = sphi 0, %s122
      %s140 = sphi 0, %s140
      %s142 = sphi 0, %s140
      %s143 = sphi 0, %s142
      %s157 = sphi 0, %s143
      %s161 = sphi 0, %s161
      %s163 = sphi 0, %s161
      %s164 = sphi 0, %s163
      %s178 = sphi 0, %s164
      %s182 = sphi 0, %s182
      %s184 = sphi 0, %s182
      %s185 = sphi 0, %s184
      %s199 = sphi 0, %s185
      %s203 = sphi 0, %s203
      %s205 = sphi 0, %s203
      %s206 = sphi 0, %s205
      %s220 = sphi 0, %s206
      %s224 = sphi 0, %s224
      %s226 = sphi 0, %s224
      %s227 = sphi 0, %s226
      %s241 = sphi 0, %s227
      %s245 = sphi 0, %s245
      %s247 = sphi 0, %s245
      %s248 = sphi 0, %s247
      %s262 = sphi 0, %s248
      %s266 = sphi 0, %s266
      %s268 = sphi 0, %s266
      %s269 = sphi 0, %s268
      %s283 = sphi 0, %s269
      %s287 = sphi 0, %s287
      %s289 = sphi 0, %s287
      %s290 = sphi 0, %s289
      %s304 = sphi 0, %s290
      %s308 = sphi 0, %s308
      %s310 = sphi 0, %s308
      %s311 = sphi 0, %s310
      %s325 = sphi 0, %s311
      %s333 = sphi 0, %s335
      %s336 = sphi 0, %s333
      %s337 = sphi 0, %s336
      %s353 = sphi 0, %s337
    $region4: #{tpu_custom_call.1} parent=1 // loop_header_branch
      %34 = sbr.rel (%p32) target = $region8
    $region5: #{tpu_custom_call.1} parent=1 // loop_body
      %s36 = ssub.s32 %s31, 1
      %s37 = ssub.s32 %s31, 2
      %s44 = sadd.s32 1, %s39
      %p45 = scmp.ge.s32.totalorder %s44, 1
      %s46 = scalar_select %p45, 0, %s44
      %s47 = sadd.s32 1, %s38
      %s48 = scalar_select %p45, %s47, %s38
      %p49 = scmp.ge.s32.totalorder %s48, 2
      %s50 = scalar_select %p49, 0, %s48
      %s51 = ssub.s32 %s38, %s50
      %p52 = scmp.eq.s32.totalorder %s51, 0
      %s54 = sadd.s32 %s53, 1
      %s55 = scalar_select %p52, %s53, %s54
      %p58 = pneg %p52
      %p59 = scmp.eq.s32.totalorder %s31, 1
      %p60 = por %p58, %p59
      %p61 = scmp.ne.s32.totalorder %s53, %s56
      %p62 = scmp.eq.s32.totalorder %s31, 0
      %p63 = por %p61, %p62
      %p64 = scmp.ne.s32.totalorder %s53, %s56
      %p65 = scmp.eq.s32.totalorder %s36, 1
      %p66 = por %p64, %p65
      %p67 = scmp.ne.s32.totalorder %s56, %s57
      %p68 = scmp.eq.s32.totalorder %s36, 0
      %p69 = por %p67, %p68
      %p70 = scmp.ne.s32.totalorder %s56, %s57
      %p71 = scmp.eq.s32.totalorder %s37, 1
      %p72 = por %p70, %p71
      %p74 = scmp.ne.s32.totalorder %s57, %s73
      %p75 = scmp.eq.s32.totalorder %s37, 0
      %p76 = por %p74, %p75
      %s78 = sadd.s32 %s77, 1
      %p81 = scmp.eq.s32.totalorder %s31, 1
      %p82 = scmp.ne.s32.totalorder %s77, %s79
      %p83 = scmp.eq.s32.totalorder %s31, 0
      %p84 = por %p82, %p83
      %p85 = scmp.ne.s32.totalorder %s77, %s79
      %p86 = scmp.eq.s32.totalorder %s36, 1
      %p87 = por %p85, %p86
      %p88 = scmp.ne.s32.totalorder %s79, %s80
      %p89 = scmp.eq.s32.totalorder %s36, 0
      %p90 = por %p88, %p89
      %p91 = scmp.ne.s32.totalorder %s79, %s80
      %p92 = scmp.eq.s32.totalorder %s37, 1
      %p93 = por %p91, %p92
      %p95 = scmp.ne.s32.totalorder %s80, %s94
      %p96 = scmp.eq.s32.totalorder %s37, 0
      %p97 = por %p95, %p96
      %s99 = sadd.s32 %s98, 1
      %p102 = scmp.eq.s32.totalorder %s31, 1
      %p103 = scmp.ne.s32.totalorder %s98, %s100
      %p104 = scmp.eq.s32.totalorder %s31, 0
      %p105 = por %p103, %p104
      %p106 = scmp.ne.s32.totalorder %s98, %s100
      %p107 = scmp.eq.s32.totalorder %s36, 1
      %p108 = por %p106, %p107
      %p109 = scmp.ne.s32.totalorder %s100, %s101
      %p110 = scmp.eq.s32.totalorder %s36, 0
      %p111 = por %p109, %p110
      %p112 = scmp.ne.s32.totalorder %s100, %s101
      %p113 = scmp.eq.s32.totalorder %s37, 1
      %p114 = por %p112, %p113
      %p116 = scmp.ne.s32.totalorder %s101, %s115
      %p117 = scmp.eq.s32.totalorder %s37, 0
      %p118 = por %p116, %p117
      %s120 = sadd.s32 %s119, 1
      %p123 = scmp.eq.s32.totalorder %s31, 1
      %p124 = scmp.ne.s32.totalorder %s119, %s121
      %p125 = scmp.eq.s32.totalorder %s31, 0
      %p126 = por %p124, %p125
      %p127 = scmp.ne.s32.totalorder %s119, %s121
      %p128 = scmp.eq.s32.totalorder %s36, 1
      %p129 = por %p127, %p128
      %p130 = scmp.ne.s32.totalorder %s121, %s122
      %p131 = scmp.eq.s32.totalorder %s36, 0
      %p132 = por %p130, %p131
      %p133 = scmp.ne.s32.totalorder %s121, %s122
      %p134 = scmp.eq.s32.totalorder %s37, 1
      %p135 = por %p133, %p134
      %p137 = scmp.ne.s32.totalorder %s122, %s136
      %p138 = scmp.eq.s32.totalorder %s37, 0
      %p139 = por %p137, %p138
      %s141 = sadd.s32 %s140, 1
      %p144 = scmp.eq.s32.totalorder %s31, 1
      %p145 = scmp.ne.s32.totalorder %s140, %s142
      %p146 = scmp.eq.s32.totalorder %s31, 0
      %p147 = por %p145, %p146
      %p148 = scmp.ne.s32.totalorder %s140, %s142
      %p149 = scmp.eq.s32.totalorder %s36, 1
      %p150 = por %p148, %p149
      %p151 = scmp.ne.s32.totalorder %s142, %s143
      %p152 = scmp.eq.s32.totalorder %s36, 0
      %p153 = por %p151, %p152
      %p154 = scmp.ne.s32.totalorder %s142, %s143
      %p155 = scmp.eq.s32.totalorder %s37, 1
      %p156 = por %p154, %p155
      %p158 = scmp.ne.s32.totalorder %s143, %s157
      %p159 = scmp.eq.s32.totalorder %s37, 0
      %p160 = por %p158, %p159
      %s162 = sadd.s32 %s161, 1
      %p165 = scmp.eq.s32.totalorder %s31, 1
      %p166 = scmp.ne.s32.totalorder %s161, %s163
      %p167 = scmp.eq.s32.totalorder %s31, 0
      %p168 = por %p166, %p167
      %p169 = scmp.ne.s32.totalorder %s161, %s163
      %p170 = scmp.eq.s32.totalorder %s36, 1
      %p171 = por %p169, %p170
      %p172 = scmp.ne.s32.totalorder %s163, %s164
      %p173 = scmp.eq.s32.totalorder %s36, 0
      %p174 = por %p172, %p173
      %p175 = scmp.ne.s32.totalorder %s163, %s164
      %p176 = scmp.eq.s32.totalorder %s37, 1
      %p177 = por %p175, %p176
      %p179 = scmp.ne.s32.totalorder %s164, %s178
      %p180 = scmp.eq.s32.totalorder %s37, 0
      %p181 = por %p179, %p180
      %s183 = sadd.s32 %s182, 1
      %p186 = scmp.eq.s32.totalorder %s31, 1
      %p187 = scmp.ne.s32.totalorder %s182, %s184
      %p188 = scmp.eq.s32.totalorder %s31, 0
      %p189 = por %p187, %p188
      %p190 = scmp.ne.s32.totalorder %s182, %s184
      %p191 = scmp.eq.s32.totalorder %s36, 1
      %p192 = por %p190, %p191
      %p193 = scmp.ne.s32.totalorder %s184, %s185
      %p194 = scmp.eq.s32.totalorder %s36, 0
      %p195 = por %p193, %p194
      %p196 = scmp.ne.s32.totalorder %s184, %s185
      %p197 = scmp.eq.s32.totalorder %s37, 1
      %p198 = por %p196, %p197
      %p200 = scmp.ne.s32.totalorder %s185, %s199
      %p201 = scmp.eq.s32.totalorder %s37, 0
      %p202 = por %p200, %p201
      %s204 = sadd.s32 %s203, 1
      %p207 = scmp.eq.s32.totalorder %s31, 1
      %p208 = scmp.ne.s32.totalorder %s203, %s205
      %p209 = scmp.eq.s32.totalorder %s31, 0
      %p210 = por %p208, %p209
      %p211 = scmp.ne.s32.totalorder %s203, %s205
      %p212 = scmp.eq.s32.totalorder %s36, 1
      %p213 = por %p211, %p212
      %p214 = scmp.ne.s32.totalorder %s205, %s206
      %p215 = scmp.eq.s32.totalorder %s36, 0
      %p216 = por %p214, %p215
      %p217 = scmp.ne.s32.totalorder %s205, %s206
      %p218 = scmp.eq.s32.totalorder %s37, 1
      %p219 = por %p217, %p218
      %p221 = scmp.ne.s32.totalorder %s206, %s220
      %p222 = scmp.eq.s32.totalorder %s37, 0
      %p223 = por %p221, %p222
      %s225 = sadd.s32 %s224, 1
      %p228 = scmp.eq.s32.totalorder %s31, 1
      %p229 = scmp.ne.s32.totalorder %s224, %s226
      %p230 = scmp.eq.s32.totalorder %s31, 0
      %p231 = por %p229, %p230
      %p232 = scmp.ne.s32.totalorder %s224, %s226
      %p233 = scmp.eq.s32.totalorder %s36, 1
      %p234 = por %p232, %p233
      %p235 = scmp.ne.s32.totalorder %s226, %s227
      %p236 = scmp.eq.s32.totalorder %s36, 0
      %p237 = por %p235, %p236
      %p238 = scmp.ne.s32.totalorder %s226, %s227
      %p239 = scmp.eq.s32.totalorder %s37, 1
      %p240 = por %p238, %p239
      %p242 = scmp.ne.s32.totalorder %s227, %s241
      %p243 = scmp.eq.s32.totalorder %s37, 0
      %p244 = por %p242, %p243
      %s246 = sadd.s32 %s245, 1
      %p249 = scmp.eq.s32.totalorder %s31, 1
      %p250 = scmp.ne.s32.totalorder %s245, %s247
      %p251 = scmp.eq.s32.totalorder %s31, 0
      %p252 = por %p250, %p251
      %p253 = scmp.ne.s32.totalorder %s245, %s247
      %p254 = scmp.eq.s32.totalorder %s36, 1
      %p255 = por %p253, %p254
      %p256 = scmp.ne.s32.totalorder %s247, %s248
      %p257 = scmp.eq.s32.totalorder %s36, 0
      %p258 = por %p256, %p257
      %p259 = scmp.ne.s32.totalorder %s247, %s248
      %p260 = scmp.eq.s32.totalorder %s37, 1
      %p261 = por %p259, %p260
      %p263 = scmp.ne.s32.totalorder %s248, %s262
      %p264 = scmp.eq.s32.totalorder %s37, 0
      %p265 = por %p263, %p264
      %s267 = sadd.s32 %s266, 1
      %p270 = scmp.eq.s32.totalorder %s31, 1
      %p271 = scmp.ne.s32.totalorder %s266, %s268
      %p272 = scmp.eq.s32.totalorder %s31, 0
      %p273 = por %p271, %p272
      %p274 = scmp.ne.s32.totalorder %s266, %s268
      %p275 = scmp.eq.s32.totalorder %s36, 1
      %p276 = por %p274, %p275
      %p277 = scmp.ne.s32.totalorder %s268, %s269
      %p278 = scmp.eq.s32.totalorder %s36, 0
      %p279 = por %p277, %p278
      %p280 = scmp.ne.s32.totalorder %s268, %s269
      %p281 = scmp.eq.s32.totalorder %s37, 1
      %p282 = por %p280, %p281
      %p284 = scmp.ne.s32.totalorder %s269, %s283
      %p285 = scmp.eq.s32.totalorder %s37, 0
      %p286 = por %p284, %p285
      %s288 = sadd.s32 %s287, 1
      %p291 = scmp.eq.s32.totalorder %s31, 1
      %p292 = scmp.ne.s32.totalorder %s287, %s289
      %p293 = scmp.eq.s32.totalorder %s31, 0
      %p294 = por %p292, %p293
      %p295 = scmp.ne.s32.totalorder %s287, %s289
      %p296 = scmp.eq.s32.totalorder %s36, 1
      %p297 = por %p295, %p296
      %p298 = scmp.ne.s32.totalorder %s289, %s290
      %p299 = scmp.eq.s32.totalorder %s36, 0
      %p300 = por %p298, %p299
      %p301 = scmp.ne.s32.totalorder %s289, %s290
      %p302 = scmp.eq.s32.totalorder %s37, 1
      %p303 = por %p301, %p302
      %p305 = scmp.ne.s32.totalorder %s290, %s304
      %p306 = scmp.eq.s32.totalorder %s37, 0
      %p307 = por %p305, %p306
      %s309 = sadd.s32 %s308, 1
      %p312 = scmp.eq.s32.totalorder %s31, 1
      %p313 = scmp.ne.s32.totalorder %s308, %s310
      %p314 = scmp.eq.s32.totalorder %s31, 0
      %p315 = por %p313, %p314
      %p316 = scmp.ne.s32.totalorder %s308, %s310
      %p317 = scmp.eq.s32.totalorder %s36, 1
      %p318 = por %p316, %p317
      %p319 = scmp.ne.s32.totalorder %s310, %s311
      %p320 = scmp.eq.s32.totalorder %s36, 0
      %p321 = por %p319, %p320
      %p322 = scmp.ne.s32.totalorder %s310, %s311
      %p323 = scmp.eq.s32.totalorder %s37, 1
      %p324 = por %p322, %p323
      %p326 = scmp.ne.s32.totalorder %s311, %s325
      %p327 = scmp.eq.s32.totalorder %s37, 0
      %p328 = por %p326, %p327
      %s329 = ssub.s32 %s38, %s50
      %s330 = ssub.s32 %s39, %s46
      %s331 = sor.u32 %s329, %s330
      %p332 = scmp.eq.s32.totalorder %s331, 0
      %s334 = sadd.s32 %s333, 1
      %s335 = scalar_select %p332, %s333, %s334
      %p338 = pneg %p332
      %p339 = scmp.eq.s32.totalorder %s31, 1
      %p340 = por %p338, %p339
      %p341 = scmp.ne.s32.totalorder %s333, %s336
      %p342 = scmp.eq.s32.totalorder %s31, 0
      %p343 = por %p341, %p342
      %p344 = scmp.ne.s32.totalorder %s333, %s336
      %p345 = scmp.eq.s32.totalorder %s36, 1
      %p346 = por %p344, %p345
      %p347 = scmp.ne.s32.totalorder %s336, %s337
      %p348 = scmp.eq.s32.totalorder %s36, 0
      %p349 = por %p347, %p348
      %p350 = scmp.ne.s32.totalorder %s336, %s337
      %p351 = scmp.eq.s32.totalorder %s37, 1
      %p352 = por %p350, %p351
      %p354 = scmp.ne.s32.totalorder %s337, %s353
      %p355 = scmp.eq.s32.totalorder %s37, 0
      %p356 = por %p354, %p355
      %p357 = scmp.le.s32.totalorder 1, %s31
      %p358 = scmp.lt.s32.totalorder %s31, 3
      %p359 = pnand %p357, %p358
      %p360 = pneg %p359
      // Predicated region
      $region9: #{tpu_custom_call.1} parent=5 // pred_check
        _
      $region10: #{tpu_custom_call.1} parent=5 // pred_check_branch
        %362 = sbr.rel (%p359) target = $region12
      $region11: #{tpu_custom_call.1} parent=5 // pred_region
        %s363 = ssub.s32 %s31, 1
        // Predicated region
        $region13: #{tpu_custom_call.1} parent=11 // pred_check
          %p364 = pneg %p90
        $region14: #{tpu_custom_call.1} parent=11 // pred_check_branch
          %366 = sbr.rel (%p364) target = $region16
        $region15: #{tpu_custom_call.1} parent=11 // pred_region
          %s368 = ssub.s32 3072, 3072
          %369 = vsyncadd [#allocation10], %s368
          %s370 = sshll.u32 [#allocation9], 4
          %s371 = int_to_ptr.vmem [resolvable:$true] %s370
          %376 = dma.hbm_to_vmem [thread:$0]  %s1, 3072, %s371, [#allocation10], 192, 192, 12
        $region16: #{tpu_custom_call.1} parent=11 // pred_fallthru
          _
        // Predicated region
        $region17: #{tpu_custom_call.1} parent=11 // pred_check
          %p377 = pneg %p111
        $region18: #{tpu_custom_call.1} parent=11 // pred_check_branch
          %379 = sbr.rel (%p377) target = $region20
        $region19: #{tpu_custom_call.1} parent=11 // pred_region
          %s381 = ssub.s32 48, 48
          %382 = vsyncadd [#allocation10], %s381
          %s384 = sshll.u32 [#allocation11], 4
          %s385 = int_to_ptr.vmem [resolvable:$true] %s384
          %387 = dma.hbm_to_vmem [thread:$0]  %s2, 48, %s385, [#allocation10]
        $region20: #{tpu_custom_call.1} parent=11 // pred_fallthru
          _
        // Predicated region
        $region21: #{tpu_custom_call.1} parent=11 // pred_check
          %p388 = pneg %p132
        $region22: #{tpu_custom_call.1} parent=11 // pred_check_branch
          %390 = sbr.rel (%p388) target = $region24
        $region23: #{tpu_custom_call.1} parent=11 // pred_region
          %s392 = ssub.s32 1024, 1024
          %393 = vsyncadd [#allocation13], %s392
          %s394 = sshll.u32 [#allocation12], 4
          %s395 = int_to_ptr.vmem [resolvable:$true] %s394
          %400 = dma.hbm_to_vmem [thread:$0]  %s3, 1024, %s395, [#allocation13], 64, 64, 4
        $region24: #{tpu_custom_call.1} parent=11 // pred_fallthru
          _
        // Predicated region
        $region25: #{tpu_custom_call.1} parent=11 // pred_check
          %p401 = pneg %p153
        $region26: #{tpu_custom_call.1} parent=11 // pred_check_branch
          %403 = sbr.rel (%p401) target = $region28
        $region27: #{tpu_custom_call.1} parent=11 // pred_region
          %s405 = ssub.s32 16, 16
          %406 = vsyncadd [#allocation13], %s405
          %s408 = sshll.u32 [#allocation14], 4
          %s409 = int_to_ptr.vmem [resolvable:$true] %s408
          %411 = dma.hbm_to_vmem [thread:$0]  %s4, 16, %s409, [#allocation13]
        $region28: #{tpu_custom_call.1} parent=11 // pred_fallthru
          _
        // Predicated region
        $region29: #{tpu_custom_call.1} parent=11 // pred_check
          %p412 = pneg %p174
        $region30: #{tpu_custom_call.1} parent=11 // pred_check_branch
          %414 = sbr.rel (%p412) target = $region32
        $region31: #{tpu_custom_call.1} parent=11 // pred_region
          %s416 = ssub.s32 16, 16
          %417 = vsyncadd [#allocation16], %s416
          %s419 = sshll.u32 [#allocation15], 4
          %s420 = int_to_ptr.vmem [resolvable:$true] %s419
          %422 = dma.hbm_to_vmem [thread:$0]  %s5, 16, %s420, [#allocation16]
        $region32: #{tpu_custom_call.1} parent=11 // pred_fallthru
          _
        // Predicated region
        $region33: #{tpu_custom_call.1} parent=11 // pred_check
          %p423 = pneg %p195
        $region34: #{tpu_custom_call.1} parent=11 // pred_check_branch
          %425 = sbr.rel (%p423) target = $region36
        $region35: #{tpu_custom_call.1} parent=11 // pred_region
          %s427 = ssub.s32 16, 16
          %428 = vsyncadd [#allocation16], %s427
          %s430 = sshll.u32 [#allocation17], 4
          %s431 = int_to_ptr.vmem [resolvable:$true] %s430
          %433 = dma.hbm_to_vmem [thread:$0]  %s6, 16, %s431, [#allocation16]
        $region36: #{tpu_custom_call.1} parent=11 // pred_fallthru
          _
        // Predicated region
        $region37: #{tpu_custom_call.1} parent=11 // pred_check
          %p434 = pneg %p216
        $region38: #{tpu_custom_call.1} parent=11 // pred_check_branch
          %436 = sbr.rel (%p434) target = $region40
        $region39: #{tpu_custom_call.1} parent=11 // pred_region
          %s438 = ssub.s32 1024, 1024
          %439 = vsyncadd [#allocation19], %s438
          %s440 = sshll.u32 [#allocation18], 4
          %s441 = int_to_ptr.vmem [resolvable:$true] %s440
          %446 = dma.hbm_to_vmem [thread:$0]  %s7, 1024, %s441, [#allocation19], 64, 64, 4
        $region40: #{tpu_custom_call.1} parent=11 // pred_fallthru
          _
        // Predicated region
        $region41: #{tpu_custom_call.1} parent=11 // pred_check
          %p447 = pneg %p237
        $region42: #{tpu_custom_call.1} parent=11 // pred_check_branch
          %449 = sbr.rel (%p447) target = $region44
        $region43: #{tpu_custom_call.1} parent=11 // pred_region
          %s451 = ssub.s32 16, 16
          %452 = vsyncadd [#allocation19], %s451
          %s454 = sshll.u32 [#allocation20], 4
          %s455 = int_to_ptr.vmem [resolvable:$true] %s454
          %457 = dma.hbm_to_vmem [thread:$0]  %s8, 16, %s455, [#allocation19]
        $region44: #{tpu_custom_call.1} parent=11 // pred_fallthru
          _
        // Predicated region
        $region45: #{tpu_custom_call.1} parent=11 // pred_check
          %p458 = pneg %p258
        $region46: #{tpu_custom_call.1} parent=11 // pred_check_branch
          %460 = sbr.rel (%p458) target = $region48
        $region47: #{tpu_custom_call.1} parent=11 // pred_region
          %s462 = ssub.s32 1024, 1024
          %463 = vsyncadd [#allocation22], %s462
          %s464 = sshll.u32 [#allocation21], 4
          %s465 = int_to_ptr.vmem [resolvable:$true] %s464
          %470 = dma.hbm_to_vmem [thread:$0]  %s9, 1024, %s465, [#allocation22], 64, 64, 4
        $region48: #{tpu_custom_call.1} parent=11 // pred_fallthru
          _
        // Predicated region
        $region49: #{tpu_custom_call.1} parent=11 // pred_check
          %p471 = pneg %p279
        $region50: #{tpu_custom_call.1} parent=11 // pred_check_branch
          %473 = sbr.rel (%p471) target = $region52
        $region51: #{tpu_custom_call.1} parent=11 // pred_region
          %s475 = ssub.s32 16, 16
          %476 = vsyncadd [#allocation22], %s475
          %s478 = sshll.u32 [#allocation23], 4
          %s479 = int_to_ptr.vmem [resolvable:$true] %s478
          %481 = dma.hbm_to_vmem [thread:$0]  %s10, 16, %s479, [#allocation22]
        $region52: #{tpu_custom_call.1} parent=11 // pred_fallthru
          _
        // Predicated region
        $region53: #{tpu_custom_call.1} parent=11 // pred_check
          %p482 = pneg %p300
        $region54: #{tpu_custom_call.1} parent=11 // pred_check_branch
          %484 = sbr.rel (%p482) target = $region56
        $region55: #{tpu_custom_call.1} parent=11 // pred_region
          %s486 = ssub.s32 16, 16
          %487 = vsyncadd [#allocation25], %s486
          %s489 = sshll.u32 [#allocation24], 4
          %s490 = int_to_ptr.vmem [resolvable:$true] %s489
          %492 = dma.hbm_to_vmem [thread:$0]  %s11, 16, %s490, [#allocation25]
        $region56: #{tpu_custom_call.1} parent=11 // pred_fallthru
          _
        // Predicated region
        $region57: #{tpu_custom_call.1} parent=11 // pred_check
          %p493 = pneg %p321
        $region58: #{tpu_custom_call.1} parent=11 // pred_check_branch
          %495 = sbr.rel (%p493) target = $region60
        $region59: #{tpu_custom_call.1} parent=11 // pred_region
          %s497 = ssub.s32 16, 16
          %498 = vsyncadd [#allocation25], %s497
          %s500 = sshll.u32 [#allocation26], 4
          %s501 = int_to_ptr.vmem [resolvable:$true] %s500
          %503 = dma.hbm_to_vmem [thread:$0]  %s12, 16, %s501, [#allocation25]
        $region60: #{tpu_custom_call.1} parent=11 // pred_fallthru
          _
      $region12: #{tpu_custom_call.1} parent=5 // pred_fallthru
        _
      %p504 = scmp.lt.s32.totalorder %s31, 2
      // Predicated region
      $region61: #{tpu_custom_call.1} parent=5 // pred_check
        %p505 = pneg %p504
      $region62: #{tpu_custom_call.1} parent=5 // pred_check_branch
        %507 = sbr.rel (%p505) target = $region64
      $region63: #{tpu_custom_call.1} parent=5 // pred_region
        // Predicated region
        $region65: #{tpu_custom_call.1} parent=63 // pred_check
          %p508 = pneg %p63
        $region66: #{tpu_custom_call.1} parent=63 // pred_check_branch
          %510 = sbr.rel (%p508) target = $region68
        $region67: #{tpu_custom_call.1} parent=63 // pred_region
          %s511 = sand.u32 %s53, 1
          %s512 = scalar_lea.sflag [#allocation7], %s511
          %s513 = sand.u32 %s53, 1
          %s514 = smul.addr %s513, 16
          %s515 = scalar_lea.vmem [#allocation6], %s514
          %s517 = ssub.s32 256, 256
          %518 = vsyncadd %s512, %s517
          %s519 = smul.addr %s38, 2
          %s520 = smul.addr %s519, 128
          %s521 = scalar_lea.hbm %s0, %s520
          %s522 = sshll.u32 %s515, 4
          %s523 = int_to_ptr.vmem [resolvable:$true] %s522
          %528 = dma.hbm_to_vmem [thread:$0]  %s521, 256, %s523, %s512, 128, 128, 8
        $region68: #{tpu_custom_call.1} parent=63 // pred_fallthru
          _
      $region64: #{tpu_custom_call.1} parent=5 // pred_fallthru
        _
      %p529 = scmp.le.s32.totalorder 1, %s31
      %p530 = scmp.lt.s32.totalorder %s31, 3
      %p531 = pnand %p529, %p530
      %p532 = pneg %p531
      // Predicated region
      $region69: #{tpu_custom_call.1} parent=5 // pred_check
        _
      $region70: #{tpu_custom_call.1} parent=5 // pred_check_branch
        %534 = sbr.rel (%p531) target = $region72
      $region71: #{tpu_custom_call.1} parent=5 // pred_region
        %s535 = ssub.s32 %s31, 1
        %s536 = sand.u32 %s56, 1
        %s537 = scalar_lea.sflag [#allocation7], %s536
        %s538 = sand.u32 %s56, 1
        %s539 = smul.addr %s538, 16
        %s540 = scalar_lea.vmem [#allocation6], %s539
        // Predicated region
        $region73: #{tpu_custom_call.1} parent=71 // pred_check
          %p541 = pneg %p69
        $region74: #{tpu_custom_call.1} parent=71 // pred_check_branch
          %543 = sbr.rel (%p541) target = $region76
        $region75: #{tpu_custom_call.1} parent=71 // pred_region
          %544 = dma.done %s537, 256
        $region76: #{tpu_custom_call.1} parent=71 // pred_fallthru
          _
        // Predicated region
        $region77: #{tpu_custom_call.1} parent=71 // pred_check
          %p545 = pneg %p90
        $region78: #{tpu_custom_call.1} parent=71 // pred_check_branch
          %547 = sbr.rel (%p545) target = $region80
        $region79: #{tpu_custom_call.1} parent=71 // pred_region
          %548 = dma.done [#allocation10], 3072
        $region80: #{tpu_custom_call.1} parent=71 // pred_fallthru
          _
        // Predicated region
        $region81: #{tpu_custom_call.1} parent=71 // pred_check
          %p549 = pneg %p111
        $region82: #{tpu_custom_call.1} parent=71 // pred_check_branch
          %551 = sbr.rel (%p549) target = $region84
        $region83: #{tpu_custom_call.1} parent=71 // pred_region
          %552 = dma.done [#allocation10], 48
        $region84: #{tpu_custom_call.1} parent=71 // pred_fallthru
          _
        // Predicated region
        $region85: #{tpu_custom_call.1} parent=71 // pred_check
          %p553 = pneg %p132
        $region86: #{tpu_custom_call.1} parent=71 // pred_check_branch
          %555 = sbr.rel (%p553) target = $region88
        $region87: #{tpu_custom_call.1} parent=71 // pred_region
          %556 = dma.done [#allocation13], 1024
        $region88: #{tpu_custom_call.1} parent=71 // pred_fallthru
          _
        // Predicated region
        $region89: #{tpu_custom_call.1} parent=71 // pred_check
          %p557 = pneg %p153
        $region90: #{tpu_custom_call.1} parent=71 // pred_check_branch
          %559 = sbr.rel (%p557) target = $region92
        $region91: #{tpu_custom_call.1} parent=71 // pred_region
          %560 = dma.done [#allocation13], 16
        $region92: #{tpu_custom_call.1} parent=71 // pred_fallthru
          _
        // Predicated region
        $region93: #{tpu_custom_call.1} parent=71 // pred_check
          %p561 = pneg %p174
        $region94: #{tpu_custom_call.1} parent=71 // pred_check_branch
          %563 = sbr.rel (%p561) target = $region96
        $region95: #{tpu_custom_call.1} parent=71 // pred_region
          %564 = dma.done [#allocation16], 16
        $region96: #{tpu_custom_call.1} parent=71 // pred_fallthru
          _
        // Predicated region
        $region97: #{tpu_custom_call.1} parent=71 // pred_check
          %p565 = pneg %p195
        $region98: #{tpu_custom_call.1} parent=71 // pred_check_branch
          %567 = sbr.rel (%p565) target = $region100
        $region99: #{tpu_custom_call.1} parent=71 // pred_region
          %568 = dma.done [#allocation16], 16
        $region100: #{tpu_custom_call.1} parent=71 // pred_fallthru
          _
        // Predicated region
        $region101: #{tpu_custom_call.1} parent=71 // pred_check
          %p569 = pneg %p216
        $region102: #{tpu_custom_call.1} parent=71 // pred_check_branch
          %571 = sbr.rel (%p569) target = $region104
        $region103: #{tpu_custom_call.1} parent=71 // pred_region
          %572 = dma.done [#allocation19], 1024
        $region104: #{tpu_custom_call.1} parent=71 // pred_fallthru
          _
        // Predicated region
        $region105: #{tpu_custom_call.1} parent=71 // pred_check
          %p573 = pneg %p237
        $region106: #{tpu_custom_call.1} parent=71 // pred_check_branch
          %575 = sbr.rel (%p573) target = $region108
        $region107: #{tpu_custom_call.1} parent=71 // pred_region
          %576 = dma.done [#allocation19], 16
        $region108: #{tpu_custom_call.1} parent=71 // pred_fallthru
          _
        // Predicated region
        $region109: #{tpu_custom_call.1} parent=71 // pred_check
          %p577 = pneg %p258
        $region110: #{tpu_custom_call.1} parent=71 // pred_check_branch
          %579 = sbr.rel (%p577) target = $region112
        $region111: #{tpu_custom_call.1} parent=71 // pred_region
          %580 = dma.done [#allocation22], 1024
        $region112: #{tpu_custom_call.1} parent=71 // pred_fallthru
          _
        // Predicated region
        $region113: #{tpu_custom_call.1} parent=71 // pred_check
          %p581 = pneg %p279
        $region114: #{tpu_custom_call.1} parent=71 // pred_check_branch
          %583 = sbr.rel (%p581) target = $region116
        $region115: #{tpu_custom_call.1} parent=71 // pred_region
          %584 = dma.done [#allocation22], 16
        $region116: #{tpu_custom_call.1} parent=71 // pred_fallthru
          _
        // Predicated region
        $region117: #{tpu_custom_call.1} parent=71 // pred_check
          %p585 = pneg %p300
        $region118: #{tpu_custom_call.1} parent=71 // pred_check_branch
          %587 = sbr.rel (%p585) target = $region120
        $region119: #{tpu_custom_call.1} parent=71 // pred_region
          %588 = dma.done [#allocation25], 16
        $region120: #{tpu_custom_call.1} parent=71 // pred_fallthru
          _
        // Predicated region
        $region121: #{tpu_custom_call.1} parent=71 // pred_check
          %p589 = pneg %p321
        $region122: #{tpu_custom_call.1} parent=71 // pred_check_branch
          %591 = sbr.rel (%p589) target = $region124
        $region123: #{tpu_custom_call.1} parent=71 // pred_region
          %592 = dma.done [#allocation25], 16
        $region124: #{tpu_custom_call.1} parent=71 // pred_fallthru
          _
        %s593 = sand.u32 %s56, 1
        %s594 = scalar_lea.sflag [#allocation7], %s593
        %s595 = sand.u32 %s56, 1
        %s596 = smul.addr %s595, 16
        %s597 = scalar_lea.vmem [#allocation6], %s596
        %p598 = pneg %p69
        %p599 = pneg %p66
        %p600 = pneg %p90
        %p601 = pneg %p87
        %p602 = pneg %p111
        %p603 = pneg %p108
        %p604 = pneg %p132
        %p605 = pneg %p129
        %p606 = pneg %p153
        %p607 = pneg %p150
        %p608 = pneg %p174
        %p609 = pneg %p171
        %p610 = pneg %p195
        %p611 = pneg %p192
        %p612 = pneg %p216
        %p613 = pneg %p213
        %p614 = pneg %p237
        %p615 = pneg %p234
        %p616 = pneg %p258
        %p617 = pneg %p255
        %p618 = pneg %p279
        %p619 = pneg %p276
        %p620 = pneg %p300
        %p621 = pneg %p297
        %p622 = pneg %p321
        %p623 = pneg %p318
        %p624 = pneg %p349
        %p625 = pneg %p346
        %s626 = sand.u32 %s336, 1
        %s627 = scalar_lea.sflag [#allocation8], %s626
        %s628 = sand.u32 %s336, 1
        %s629 = smul.addr %s628, 16
        %s630 = scalar_lea.vmem [#allocation27], %s629
        %s631 = smul.u32 2, %s41
        %p633 = scmp.eq.s32.totalorder %s41, 0
        // Predicated region
        $region125: #{tpu_custom_call.1} parent=71 // pred_check
          %p634 = pneg %p633
        $region126: #{tpu_custom_call.1} parent=71 // pred_check_branch
          %636 = sbr.rel (%p634) target = $region128
        $region127: #{tpu_custom_call.1} parent=71 // pred_region
          %v637 = vld [vmem:[%s540] sm:$0xff]
          %v638 = vld [vmem:[%s540 + $0x8] sm:$0xff]
          %v639 = vpack.c.bf16 %v638, %v637
          %v640 = vld [vmem:[#allocation9] sm:$0xff]
          %v641 = vld [vmem:[#allocation9 + $0x8] sm:$0xf]
          %v642 = vld [vmem:[#allocation9 + $0xc] sm:$0xff]
          %v643 = vld [vmem:[#allocation9 + $0x14] sm:$0xf]
          %v644 = vld [vmem:[#allocation9 + $0x18] sm:$0xff]
          %v645 = vld [vmem:[#allocation9 + $0x20] sm:$0xf]
          %v646 = vld [vmem:[#allocation9 + $0x24] sm:$0xff]
          %v647 = vld [vmem:[#allocation9 + $0x2c] sm:$0xf]
          %v648 = vld [vmem:[#allocation9 + $0x30] sm:$0xff]
          %v649 = vld [vmem:[#allocation9 + $0x38] sm:$0xf]
          %v650 = vld [vmem:[#allocation9 + $0x3c] sm:$0xff]
          %v651 = vld [vmem:[#allocation9 + $0x44] sm:$0xf]
          %v652 = vld [vmem:[#allocation9 + $0x48] sm:$0xff]
          %v653 = vld [vmem:[#allocation9 + $0x50] sm:$0xf]
          %v654 = vld [vmem:[#allocation9 + $0x54] sm:$0xff]
          %v655 = vld [vmem:[#allocation9 + $0x5c] sm:$0xf]
          %v656 = vld [vmem:[#allocation9 + $0x60] sm:$0xff]
          %v657 = vld [vmem:[#allocation9 + $0x68] sm:$0xf]
          %v658 = vld [vmem:[#allocation9 + $0x6c] sm:$0xff]
          %v659 = vld [vmem:[#allocation9 + $0x74] sm:$0xf]
          %v660 = vld [vmem:[#allocation9 + $0x78] sm:$0xff]
          %v661 = vld [vmem:[#allocation9 + $0x80] sm:$0xf]
          %v662 = vld [vmem:[#allocation9 + $0x84] sm:$0xff]
          %v663 = vld [vmem:[#allocation9 + $0x8c] sm:$0xf]
          %v664 = vld [vmem:[#allocation9 + $0x90] sm:$0xff]
          %v665 = vld [vmem:[#allocation9 + $0x98] sm:$0xf]
          %v666 = vld [vmem:[#allocation9 + $0x9c] sm:$0xff]
          %v667 = vld [vmem:[#allocation9 + $0xa4] sm:$0xf]
          %v668 = vld [vmem:[#allocation9 + $0xa8] sm:$0xff]
          %v669 = vld [vmem:[#allocation9 + $0xb0] sm:$0xf]
          %v670 = vld [vmem:[#allocation9 + $0xb4] sm:$0xff]
          %v671 = vld [vmem:[#allocation9 + $0xbc] sm:$0xf]
          %v672 = vld [vmem:[#allocation11] sm:$0x7]
          %v674 = vlaneseq
          %v675 = vshrl.u32 %v674, 7
          %v676 = vsub.s32 0, %v675
          %v677 = vrot.slane %v672, %v676
          %v678 = vlaneseq
          %v679 = vshrl.u32 %v678, 7
          %v680 = vsub.s32 1, %v679
          %v681 = vrot.slane %v672, %v680
          %v682 = vlaneseq
          %v683 = vshrl.u32 %v682, 7
          %v684 = vsub.s32 2, %v683
          %v685 = vrot.slane %v672, %v684
          %v721 = vunpack.c.l.b16 %v640
          %v722 = vunpack.c.h.b16 %v640
          %v723 = vunpack.c.l.b16 %v641
          %v724 = vunpack.c.l.b16 %v642
          %v725 = vunpack.c.h.b16 %v642
          %v726 = vunpack.c.l.b16 %v643
          %v727 = vunpack.c.l.b16 %v644
          %v728 = vunpack.c.h.b16 %v644
          %v729 = vunpack.c.l.b16 %v645
          %v730 = vunpack.c.l.b16 %v646
          %v731 = vunpack.c.h.b16 %v646
          %v732 = vunpack.c.l.b16 %v647
          %v733 = vunpack.c.l.b16 %v648
          %v734 = vunpack.c.h.b16 %v648
          %v735 = vunpack.c.l.b16 %v649
          %v736 = vunpack.c.l.b16 %v650
          %v737 = vunpack.c.h.b16 %v650
          %v738 = vunpack.c.l.b16 %v651
          %v739 = vunpack.c.l.b16 %v652
          %v740 = vunpack.c.h.b16 %v652
          %v741 = vunpack.c.l.b16 %v653
          %v742 = vunpack.c.l.b16 %v654
          %v743 = vunpack.c.h.b16 %v654
          %v744 = vunpack.c.l.b16 %v655
          %v745 = vunpack.c.l.b16 %v656
          %v746 = vunpack.c.h.b16 %v656
          %v747 = vunpack.c.l.b16 %v657
          %v748 = vunpack.c.l.b16 %v658
          %v749 = vunpack.c.h.b16 %v658
          %v750 = vunpack.c.l.b16 %v659
          %v751 = vunpack.c.l.b16 %v660
          %v752 = vunpack.c.h.b16 %v660
          %v753 = vunpack.c.l.b16 %v661
          %v754 = vunpack.c.l.b16 %v662
          %v755 = vunpack.c.h.b16 %v662
          %v756 = vunpack.c.l.b16 %v663
          %v757 = vunpack.c.l.b16 %v664
          %v758 = vunpack.c.h.b16 %v664
          %v759 = vunpack.c.l.b16 %v665
          %v760 = vunpack.c.l.b16 %v666
          %v761 = vunpack.c.h.b16 %v666
          %v762 = vunpack.c.l.b16 %v667
          %v763 = vunpack.c.l.b16 %v668
          %v764 = vunpack.c.h.b16 %v668
          %v765 = vunpack.c.l.b16 %v669
          %v766 = vunpack.c.l.b16 %v670
          %v767 = vunpack.c.h.b16 %v670
          %v768 = vunpack.c.l.b16 %v671
          %v769 = vpack.c.b16 %v724, %v721
          %v770 = vpack.c.b16 %v725, %v722
          %v771 = vpack.c.b16 %v726, %v723
          %v772 = vpack.c.b16 %v730, %v727
          %v773 = vpack.c.b16 %v731, %v728
          %v774 = vpack.c.b16 %v732, %v729
          %v775 = vpack.c.b16 %v736, %v733
          %v776 = vpack.c.b16 %v737, %v734
          %v777 = vpack.c.b16 %v738, %v735
          %v778 = vpack.c.b16 %v742, %v739
          %v779 = vpack.c.b16 %v743, %v740
          %v780 = vpack.c.b16 %v744, %v741
          %v781 = vpack.c.b16 %v748, %v745
          %v782 = vpack.c.b16 %v749, %v746
          %v783 = vpack.c.b16 %v750, %v747
          %v784 = vpack.c.b16 %v754, %v751
          %v785 = vpack.c.b16 %v755, %v752
          %v786 = vpack.c.b16 %v756, %v753
          %v787 = vpack.c.b16 %v760, %v757
          %v788 = vpack.c.b16 %v761, %v758
          %v789 = vpack.c.b16 %v762, %v759
          %v790 = vpack.c.b16 %v766, %v763
          %v791 = vpack.c.b16 %v767, %v764
          %v792 = vpack.c.b16 %v768, %v765
          %817 = vmatprep.subr.bf16.mxu0 %v770
          %818 = vmatpush1.bf16.msra.mxu0 %v769
          %819 = vmatprep.subr.bf16.mxu0 %v773
          %820 = vmatpush1.bf16.msra.mxu0 %v772
          %821 = vmatprep.subr.bf16.mxu0 %v776
          %822 = vmatpush1.bf16.msra.mxu0 %v775
          %823 = vmatprep.subr.bf16.mxu0 %v779
          %824 = vmatpush1.bf16.msra.mxu0 %v778
          %825 = vmatprep.subr.bf16.mxu0 %v782
          %826 = vmatpush1.bf16.msra.mxu0 %v781
          %827 = vmatprep.subr.bf16.mxu0 %v785
          %828 = vmatpush1.bf16.msra.mxu0 %v784
          %829 = vmatprep.subr.bf16.mxu0 %v788
          %830 = vmatpush1.bf16.msra.mxu0 %v787
          %831 = vmatprep.subr.bf16.mxu0 %v791
          %832 = vmatpush1.bf16.msra.mxu0 %v790
          %833 = vmatprep.subr.bf16.mxu0 0
          %834 = vmatpush1.bf16.msra.mxu0 0
          %835 = vmatprep.subr.bf16.mxu0 0
          %836 = vmatpush1.bf16.msra.mxu0 0
          %837 = vmatprep.subr.bf16.mxu0 0
          %838 = vmatpush1.bf16.msra.mxu0 0
          %839 = vmatprep.subr.bf16.mxu0 0
          %840 = vmatpush1.bf16.msra.mxu0 0
          %841 = vmatprep.subr.bf16.mxu0 0
          %842 = vmatpush1.bf16.msra.mxu0 0
          %843 = vmatprep.subr.bf16.mxu0 0
          %844 = vmatpush1.bf16.msra.mxu0 0
          %845 = vmatprep.subr.bf16.mxu0 0
          %846 = vmatpush1.bf16.msra.mxu0 0
          %847 = vmatprep.subr.bf16.mxu0 0
          %848 = vmatpush1.bf16.msra.mxu0 0
          %849 = vmatprep.mubr.bf16.mxu0 0
          %850 = vmatmul.mubr.bf16.gmra.mrb[0].mxu0 %v639
          %v851 = vpop.f32.mrb[0].mxu0
          %v852 = vadd.f32 %v677, %v851
          %v853 = vpop.f32.mrb[0].mxu0
          %v854 = vadd.f32 %v681, %v853
          %v855 = vpop.f32.mrb[0].mxu0
          %v856 = vadd.f32 %v677, %v855
          %v857 = vpop.f32.mrb[0].mxu0
          %v858 = vadd.f32 %v681, %v857
          %859 = vdwg.mxu0
          %860 = vmatprep.subr.bf16.mxu0 0
          %861 = vmatpush1.bf16.msra.mxu0 %v771
          %862 = vmatprep.subr.bf16.mxu0 0
          %863 = vmatpush1.bf16.msra.mxu0 %v774
          %864 = vmatprep.subr.bf16.mxu0 0
          %865 = vmatpush1.bf16.msra.mxu0 %v777
          %866 = vmatprep.subr.bf16.mxu0 0
          %867 = vmatpush1.bf16.msra.mxu0 %v780
          %868 = vmatprep.subr.bf16.mxu0 0
          %869 = vmatpush1.bf16.msra.mxu0 %v783
          %870 = vmatprep.subr.bf16.mxu0 0
          %871 = vmatpush1.bf16.msra.mxu0 %v786
          %872 = vmatprep.subr.bf16.mxu0 0
          %873 = vmatpush1.bf16.msra.mxu0 %v789
          %874 = vmatprep.subr.bf16.mxu0 0
          %875 = vmatpush1.bf16.msra.mxu0 %v792
          %876 = vmatprep.subr.bf16.mxu0 0
          %877 = vmatpush1.bf16.msra.mxu0 0
          %878 = vmatprep.subr.bf16.mxu0 0
          %879 = vmatpush1.bf16.msra.mxu0 0
          %880 = vmatprep.subr.bf16.mxu0 0
          %881 = vmatpush1.bf16.msra.mxu0 0
          %882 = vmatprep.subr.bf16.mxu0 0
          %883 = vmatpush1.bf16.msra.mxu0 0
          %884 = vmatprep.subr.bf16.mxu0 0
          %885 = vmatpush1.bf16.msra.mxu0 0
          %886 = vmatprep.subr.bf16.mxu0 0
          %887 = vmatpush1.bf16.msra.mxu0 0
          %888 = vmatprep.subr.bf16.mxu0 0
          %889 = vmatpush1.bf16.msra.mxu0 0
          %890 = vmatprep.subr.bf16.mxu0 0
          %891 = vmatpush1.bf16.msra.mxu0 0
          %892 = vmatprep.mubr.bf16.mxu0 0
          %893 = vmatmul.mubr.bf16.gmra.mrb[0].mxu0 %v639
          %v894 = vpop.f32.mrb[0].mxu0
          %v895 = vadd.f32 %v685, %v894
          %v896 = vpop.f32.mrb[0].mxu0
          %v897 = vpop.f32.mrb[0].mxu0
          %v898 = vadd.f32 %v685, %v897
          %v899 = vpop.f32.mrb[0].mxu0
          %900 = vdwg.mxu0
          %v901 = vpack.c.bf16 %v856, %v852
          %902 = vst [vmem:[#allocation2] sm:$0xff] %v901
          %903 = vxpose.xlu0.b32.start [1/16] %v854, 128
          %904 = vxpose.xlu0.b32.cont [2/16] %v858, 128
          %905 = vxpose.xlu0.b32.cont [3/16] 0.0, 128
          %906 = vxpose.xlu0.b32.cont [4/16] 0.0, 128
          %907 = vxpose.xlu0.b32.cont [5/16] 0.0, 128
          %908 = vxpose.xlu0.b32.cont [6/16] 0.0, 128
          %909 = vxpose.xlu0.b32.cont [7/16] 0.0, 128
          %910 = vxpose.xlu0.b32.cont [8/16] 0.0, 128
          %911 = vxpose.xlu0.b32.cont [9/16] 0.0, 128
          %912 = vxpose.xlu0.b32.cont [10/16] 0.0, 128
          %913 = vxpose.xlu0.b32.cont [11/16] 0.0, 128
          %914 = vxpose.xlu0.b32.cont [12/16] 0.0, 128
          %915 = vxpose.xlu0.b32.cont [13/16] 0.0, 128
          %916 = vxpose.xlu0.b32.cont [14/16] 0.0, 128
          %917 = vxpose.xlu0.b32.cont [15/16] 0.0, 128
          %918 = vxpose.xlu0.b32.end [16/16] 0.0, 128
          %v919 = vpop.trf.xlu0
          %v920 = vpop.trf.xlu0
          %v921 = vpop.trf.xlu0
          %v922 = vpop.trf.xlu0
          %v923 = vpop.trf.xlu0
          %v924 = vpop.trf.xlu0
          %v925 = vpop.trf.xlu0
          %v926 = vpop.trf.xlu0
          %v927 = vpop.trf.xlu0
          %v928 = vpop.trf.xlu0
          %v929 = vpop.trf.xlu0
          %v930 = vpop.trf.xlu0
          %v931 = vpop.trf.xlu0
          %v932 = vpop.trf.xlu0
          %v933 = vpop.trf.xlu0
          %v934 = vpop.trf.xlu0
          %v935 = vpack.c.bf16 %v920, %v919
          %v936 = vpack.c.bf16 %v922, %v921
          %v937 = vpack.c.bf16 %v924, %v923
          %v938 = vpack.c.bf16 %v926, %v925
          %v939 = vpack.c.bf16 %v928, %v927
          %v940 = vpack.c.bf16 %v930, %v929
          %v941 = vpack.c.bf16 %v932, %v931
          %v942 = vpack.c.bf16 %v934, %v933
          %vm943 = vcmask 130048
          %944 = vst.msk [vmem:[#allocation3] sm:$0xff] %vm943, %v935
          %945 = vst.msk [vmem:[#allocation3 + $0x8] sm:$0xff] %vm943, %v936
          %946 = vst.msk [vmem:[#allocation3 + $0x10] sm:$0xff] %vm943, %v937
          %947 = vst.msk [vmem:[#allocation3 + $0x18] sm:$0xff] %vm943, %v938
          %948 = vst.msk [vmem:[#allocation3 + $0x20] sm:$0xff] %vm943, %v939
          %949 = vst.msk [vmem:[#allocation3 + $0x28] sm:$0xff] %vm943, %v940
          %950 = vst.msk [vmem:[#allocation3 + $0x30] sm:$0xff] %vm943, %v941
          %951 = vst.msk [vmem:[#allocation3 + $0x38] sm:$0xff] %vm943, %v942
          %v952 = vpack.c.bf16 %v898, %v895
          %953 = vst [vmem:[#allocation4] sm:$0xff] %v952
        $region128: #{tpu_custom_call.1} parent=71 // pred_fallthru
          _
        %s954 = smul.u32 %s41, 16
        %s955 = scalar_lea.vmem %s540, %s954 [#allocation6]
        %v956 = vld [vmem:[%s955] sm:$0xff]
        %v957 = vld [vmem:[%s955 + $0x8] sm:$0xff]
        %s958 = sshra.s32 %s954, 4
        %s959 = sand.u32 %s954, 15
        %s960 = smul.addr %s958, 8
        %s961 = scalar_lea.vmem [#allocation2], %s960
        %v962 = vld [vmem:[%s961] sm:$0xff]
        %v963 = vld [vmem:[#allocation3] sm:$0xff]
        %v964 = vld [vmem:[#allocation3 + $0x8] sm:$0xff]
        %vm965 = vcmask 261120
        %v967 = vsel %vm965, %v962, 0
        %969 = vmatprep.subr.bf16.mxu0 0
        %970 = vmatpush1.bf16.msra.mxu0 %v963
        %971 = vmatprep.subr.bf16.mxu0 0
        %972 = vmatpush1.bf16.msra.mxu0 %v964
        %973 = vmatprep.subr.bf16.mxu0 0
        %974 = vmatpush1.bf16.msra.mxu0 0
        %975 = vmatprep.subr.bf16.mxu0 0
        %976 = vmatpush1.bf16.msra.mxu0 0
        %977 = vmatprep.subr.bf16.mxu0 0
        %978 = vmatpush1.bf16.msra.mxu0 0
        %979 = vmatprep.subr.bf16.mxu0 0
        %980 = vmatpush1.bf16.msra.mxu0 0
        %981 = vmatprep.subr.bf16.mxu0 0
        %982 = vmatpush1.bf16.msra.mxu0 0
        %983 = vmatprep.subr.bf16.mxu0 0
        %984 = vmatpush1.bf16.msra.mxu0 0
        %985 = vmatprep.subr.bf16.mxu0 0
        %986 = vmatpush1.bf16.msra.mxu0 0
        %987 = vmatprep.subr.bf16.mxu0 0
        %988 = vmatpush1.bf16.msra.mxu0 0
        %989 = vmatprep.subr.bf16.mxu0 0
        %990 = vmatpush1.bf16.msra.mxu0 0
        %991 = vmatprep.subr.bf16.mxu0 0
        %992 = vmatpush1.bf16.msra.mxu0 0
        %993 = vmatprep.subr.bf16.mxu0 0
        %994 = vmatpush1.bf16.msra.mxu0 0
        %995 = vmatprep.subr.bf16.mxu0 0
        %996 = vmatpush1.bf16.msra.mxu0 0
        %997 = vmatprep.subr.bf16.mxu0 0
        %998 = vmatpush1.bf16.msra.mxu0 0
        %999 = vmatprep.subr.bf16.mxu0 0
        %1000 = vmatpush1.bf16.msra.mxu0 0
        %1001 = vmatprep.mubr.bf16.mxu0 0
        %1002 = vmatmul.mubr.bf16.gmra.mrb[0].mxu0 %v967
        %v1003 = vpop.f32.mrb[0].mxu0
        %v1004 = vadd.f32 0.0, %v1003
        %v1005 = vpop.f32.mrb[0].mxu0
        %v1006 = vpop.f32.mrb[0].mxu0
        %v1007 = vadd.f32 0.0, %v1006
        %v1008 = vpop.f32.mrb[0].mxu0
        %1009 = vdwg.mxu0
        %v1010 = vmul.f32 %v1004, 0.17677669
        %v1011 = vmul.f32 %v1007, 0.17677669
        %vm1012 = vcmask 130048
        %v1013 = vsel %vm1012, %v1010, -inf
        %1014 = vmax.xlane.f32.xlu0 %v1013
        %v1015 = vpop.xlane.xlu0 %1014
        %v1016 = vsel %vm1012, %v1011, -inf
        %1017 = vmax.xlane.f32.xlu0 %v1016
        %v1018 = vpop.xlane.xlu0 %1017
        %v1019 = vsub.f32 %v1010, %v1015
        %v1020 = vsub.f32 %v1011, %v1018
        %v1021 = vmul.f32 %v1019, 1.442695
        %v1022 = vpow.pop %v1021
        %v1023 = vmul.f32 %v1020, 1.442695
        %v1024 = vpow.pop %v1023
        %v1025 = vsel %vm1012, %v1022, 0.0
        %1026 = vadd.xlane.f32.xlu0 %v1025
        %v1027 = vpop.xlane.xlu0 %1026
        %v1028 = vsel %vm1012, %v1024, 0.0
        %1029 = vadd.xlane.f32.xlu0 %v1028
        %v1030 = vpop.xlane.xlu0 %1029
        %v1031 = vrcp.pop %v1027
        %v1032 = vrcp.pop %v1030
        %v1033 = vmul.f32 %v1022, %v1031
        %v1034 = vmul.f32 %v1024, %v1032
        %v1035 = vpack.c.bf16 %v1034, %v1033
        %v1036 = vld [vmem:[#allocation4] sm:$0xff]
        %v1038 = vsel %vm1012, %v1035, 0
        %1040 = vmatprep.subr.bf16.mxu0 0
        %1041 = vmatpush1.bf16.msra.mxu0 %v1036
        %1042 = vmatprep.subr.bf16.mxu0 0
        %1043 = vmatpush1.bf16.msra.mxu0 0
        %1044 = vmatprep.subr.bf16.mxu0 0
        %1045 = vmatpush1.bf16.msra.mxu0 0
        %1046 = vmatprep.subr.bf16.mxu0 0
        %1047 = vmatpush1.bf16.msra.mxu0 0
        %1048 = vmatprep.subr.bf16.mxu0 0
        %1049 = vmatpush1.bf16.msra.mxu0 0
        %1050 = vmatprep.subr.bf16.mxu0 0
        %1051 = vmatpush1.bf16.msra.mxu0 0
        %1052 = vmatprep.subr.bf16.mxu0 0
        %1053 = vmatpush1.bf16.msra.mxu0 0
        %1054 = vmatprep.subr.bf16.mxu0 0
        %1055 = vmatpush1.bf16.msra.mxu0 0
        %1056 = vmatprep.subr.bf16.mxu0 0
        %1057 = vmatpush1.bf16.msra.mxu0 0
        %1058 = vmatprep.subr.bf16.mxu0 0
        %1059 = vmatpush1.bf16.msra.mxu0 0
        %1060 = vmatprep.subr.bf16.mxu0 0
        %1061 = vmatpush1.bf16.msra.mxu0 0
        %1062 = vmatprep.subr.bf16.mxu0 0
        %1063 = vmatpush1.bf16.msra.mxu0 0
        %1064 = vmatprep.subr.bf16.mxu0 0
        %1065 = vmatpush1.bf16.msra.mxu0 0
        %1066 = vmatprep.subr.bf16.mxu0 0
        %1067 = vmatpush1.bf16.msra.mxu0 0
        %1068 = vmatprep.subr.bf16.mxu0 0
        %1069 = vmatpush1.bf16.msra.mxu0 0
        %1070 = vmatprep.subr.bf16.mxu0 0
        %1071 = vmatpush1.bf16.msra.mxu0 0
        %1072 = vmatprep.mubr.bf16.mxu0 0
        %1073 = vmatmul.mubr.bf16.gmra.mrb[0].mxu0 %v1038
        %v1074 = vpop.f32.mrb[0].mxu0
        %v1075 = vadd.f32 0.0, %v1074
        %v1076 = vpop.f32.mrb[0].mxu0
        %v1077 = vpop.f32.mrb[0].mxu0
        %v1078 = vadd.f32 0.0, %v1077
        %v1079 = vpop.f32.mrb[0].mxu0
        %1080 = vdwg.mxu0
        %v1081 = vpack.c.bf16 %v1078, %v1075
        %1082 = vst.msk [vmem:[#allocation5] sm:$0xff] %vm965, %v1081
        %v1083 = vld [vmem:[#allocation3 + $0x10] sm:$0xff]
        %v1084 = vld [vmem:[#allocation3 + $0x18] sm:$0xff]
        %1086 = vrot.lane.b32.xlu0 %v962, 96
        %v1087 = vpop.permute.xlu0 %1086
        %v1089 = vsel %vm965, %v1087, 0
        %1091 = vmatprep.subr.bf16.mxu0 0
        %1092 = vmatpush1.bf16.msra.mxu0 %v1083
        %1093 = vmatprep.subr.bf16.mxu0 0
        %1094 = vmatpush1.bf16.msra.mxu0 %v1084
        %1095 = vmatprep.subr.bf16.mxu0 0
        %1096 = vmatpush1.bf16.msra.mxu0 0
        %1097 = vmatprep.subr.bf16.mxu0 0
        %1098 = vmatpush1.bf16.msra.mxu0 0
        %1099 = vmatprep.subr.bf16.mxu0 0
        %1100 = vmatpush1.bf16.msra.mxu0 0
        %1101 = vmatprep.subr.bf16.mxu0 0
        %1102 = vmatpush1.bf16.msra.mxu0 0
        %1103 = vmatprep.subr.bf16.mxu0 0
        %1104 = vmatpush1.bf16.msra.mxu0 0
        %1105 = vmatprep.subr.bf16.mxu0 0
        %1106 = vmatpush1.bf16.msra.mxu0 0
        %1107 = vmatprep.subr.bf16.mxu0 0
        %1108 = vmatpush1.bf16.msra.mxu0 0
        %1109 = vmatprep.subr.bf16.mxu0 0
        %1110 = vmatpush1.bf16.msra.mxu0 0
        %1111 = vmatprep.subr.bf16.mxu0 0
        %1112 = vmatpush1.bf16.msra.mxu0 0
        %1113 = vmatprep.subr.bf16.mxu0 0
        %1114 = vmatpush1.bf16.msra.mxu0 0
        %1115 = vmatprep.subr.bf16.mxu0 0
        %1116 = vmatpush1.bf16.msra.mxu0 0
        %1117 = vmatprep.subr.bf16.mxu0 0
        %1118 = vmatpush1.bf16.msra.mxu0 0
        %1119 = vmatprep.subr.bf16.mxu0 0
        %1120 = vmatpush1.bf16.msra.mxu0 0
        %1121 = vmatprep.subr.bf16.mxu0 0
        %1122 = vmatpush1.bf16.msra.mxu0 0
        %1123 = vmatprep.mubr.bf16.mxu0 0
        %1124 = vmatmul.mubr.bf16.gmra.mrb[0].mxu0 %v1089
        %v1125 = vpop.f32.mrb[0].mxu0
        %v1126 = vadd.f32 0.0, %v1125
        %v1127 = vpop.f32.mrb[0].mxu0
        %v1128 = vpop.f32.mrb[0].mxu0
        %v1129 = vadd.f32 0.0, %v1128
        %v1130 = vpop.f32.mrb[0].mxu0
        %1131 = vdwg.mxu0
        %v1132 = vmul.f32 %v1126, 0.17677669
        %v1133 = vmul.f32 %v1129, 0.17677669
        %v1134 = vsel %vm1012, %v1132, -inf
        %1135 = vmax.xlane.f32.xlu0 %v1134
        %v1136 = vpop.xlane.xlu0 %1135
        %v1137 = vsel %vm1012, %v1133, -inf
        %1138 = vmax.xlane.f32.xlu0 %v1137
        %v1139 = vpop.xlane.xlu0 %1138
        %v1140 = vsub.f32 %v1132, %v1136
        %v1141 = vsub.f32 %v1133, %v1139
        %v1142 = vmul.f32 %v1140, 1.442695
        %v1143 = vpow.pop %v1142
        %v1144 = vmul.f32 %v1141, 1.442695
        %v1145 = vpow.pop %v1144
        %v1146 = vsel %vm1012, %v1143, 0.0
        %1147 = vadd.xlane.f32.xlu0 %v1146
        %v1148 = vpop.xlane.xlu0 %1147
        %v1149 = vsel %vm1012, %v1145, 0.0
        %1150 = vadd.xlane.f32.xlu0 %v1149
        %v1151 = vpop.xlane.xlu0 %1150
        %v1152 = vrcp.pop %v1148
        %v1153 = vrcp.pop %v1151
        %v1154 = vmul.f32 %v1143, %v1152
        %v1155 = vmul.f32 %v1145, %v1153
        %v1156 = vpack.c.bf16 %v1155, %v1154
        %v1157 = vld [vmem:[#allocation4] sm:$0xff]
        %1159 = vrot.lane.b32.xlu0 %v1157, 96
        %v1160 = vpop.permute.xlu0 %1159
        %v1163 = vsel %vm1012, %v1156, 0
        %1165 = vmatprep.subr.bf16.mxu0 0
        %1166 = vmatpush1.bf16.msra.mxu0 %v1160
        %1167 = vmatprep.subr.bf16.mxu0 0
        %1168 = vmatpush1.bf16.msra.mxu0 0
        %1169 = vmatprep.subr.bf16.mxu0 0
        %1170 = vmatpush1.bf16.msra.mxu0 0
        %1171 = vmatprep.subr.bf16.mxu0 0
        %1172 = vmatpush1.bf16.msra.mxu0 0
        %1173 = vmatprep.subr.bf16.mxu0 0
        %1174 = vmatpush1.bf16.msra.mxu0 0
        %1175 = vmatprep.subr.bf16.mxu0 0
        %1176 = vmatpush1.bf16.msra.mxu0 0
        %1177 = vmatprep.subr.bf16.mxu0 0
        %1178 = vmatpush1.bf16.msra.mxu0 0
        %1179 = vmatprep.subr.bf16.mxu0 0
        %1180 = vmatpush1.bf16.msra.mxu0 0
        %1181 = vmatprep.subr.bf16.mxu0 0
        %1182 = vmatpush1.bf16.msra.mxu0 0
        %1183 = vmatprep.subr.bf16.mxu0 0
        %1184 = vmatpush1.bf16.msra.mxu0 0
        %1185 = vmatprep.subr.bf16.mxu0 0
        %1186 = vmatpush1.bf16.msra.mxu0 0
        %1187 = vmatprep.subr.bf16.mxu0 0
        %1188 = vmatpush1.bf16.msra.mxu0 0
        %1189 = vmatprep.subr.bf16.mxu0 0
        %1190 = vmatpush1.bf16.msra.mxu0 0
        %1191 = vmatprep.subr.bf16.mxu0 0
        %1192 = vmatpush1.bf16.msra.mxu0 0
        %1193 = vmatprep.subr.bf16.mxu0 0
        %1194 = vmatpush1.bf16.msra.mxu0 0
        %1195 = vmatprep.subr.bf16.mxu0 0
        %1196 = vmatpush1.bf16.msra.mxu0 0
        %1197 = vmatprep.mubr.bf16.mxu0 0
        %1198 = vmatmul.mubr.bf16.gmra.mrb[0].mxu0 %v1163
        %v1199 = vpop.f32.mrb[0].mxu0
        %v1200 = vadd.f32 0.0, %v1199
        %v1201 = vpop.f32.mrb[0].mxu0
        %v1202 = vpop.f32.mrb[0].mxu0
        %v1203 = vadd.f32 0.0, %v1202
        %v1204 = vpop.f32.mrb[0].mxu0
        %1205 = vdwg.mxu0
        %v1206 = vpack.c.bf16 %v1203, %v1200
        %1208 = vrot.lane.b32.xlu0 %v1206, 32
        %v1209 = vpop.permute.xlu0 %1208
        %vm1211 = vcmask 523520
        %1212 = vst.msk [vmem:[#allocation5] sm:$0xff] %vm1211, %v1209
        %v1213 = vld [vmem:[#allocation3 + $0x20] sm:$0xff]
        %v1214 = vld [vmem:[#allocation3 + $0x28] sm:$0xff]
        %1215 = vrot.lane.b32.xlu0 %v962, 64
        %v1216 = vpop.permute.xlu0 %1215
        %v1218 = vsel %vm965, %v1216, 0
        %1220 = vmatprep.subr.bf16.mxu0 0
        %1221 = vmatpush1.bf16.msra.mxu0 %v1213
        %1222 = vmatprep.subr.bf16.mxu0 0
        %1223 = vmatpush1.bf16.msra.mxu0 %v1214
        %1224 = vmatprep.subr.bf16.mxu0 0
        %1225 = vmatpush1.bf16.msra.mxu0 0
        %1226 = vmatprep.subr.bf16.mxu0 0
        %1227 = vmatpush1.bf16.msra.mxu0 0
        %1228 = vmatprep.subr.bf16.mxu0 0
        %1229 = vmatpush1.bf16.msra.mxu0 0
        %1230 = vmatprep.subr.bf16.mxu0 0
        %1231 = vmatpush1.bf16.msra.mxu0 0
        %1232 = vmatprep.subr.bf16.mxu0 0
        %1233 = vmatpush1.bf16.msra.mxu0 0
        %1234 = vmatprep.subr.bf16.mxu0 0
        %1235 = vmatpush1.bf16.msra.mxu0 0
        %1236 = vmatprep.subr.bf16.mxu0 0
        %1237 = vmatpush1.bf16.msra.mxu0 0
        %1238 = vmatprep.subr.bf16.mxu0 0
        %1239 = vmatpush1.bf16.msra.mxu0 0
        %1240 = vmatprep.subr.bf16.mxu0 0
        %1241 = vmatpush1.bf16.msra.mxu0 0
        %1242 = vmatprep.subr.bf16.mxu0 0
        %1243 = vmatpush1.bf16.msra.mxu0 0
        %1244 = vmatprep.subr.bf16.mxu0 0
        %1245 = vmatpush1.bf16.msra.mxu0 0
        %1246 = vmatprep.subr.bf16.mxu0 0
        %1247 = vmatpush1.bf16.msra.mxu0 0
        %1248 = vmatprep.subr.bf16.mxu0 0
        %1249 = vmatpush1.bf16.msra.mxu0 0
        %1250 = vmatprep.subr.bf16.mxu0 0
        %1251 = vmatpush1.bf16.msra.mxu0 0
        %1252 = vmatprep.mubr.bf16.mxu0 0
        %1253 = vmatmul.mubr.bf16.gmra.mrb[0].mxu0 %v1218
        %v1254 = vpop.f32.mrb[0].mxu0
        %v1255 = vadd.f32 0.0, %v1254
        %v1256 = vpop.f32.mrb[0].mxu0
        %v1257 = vpop.f32.mrb[0].mxu0
        %v1258 = vadd.f32 0.0, %v1257
        %v1259 = vpop.f32.mrb[0].mxu0
        %1260 = vdwg.mxu0
        %v1261 = vmul.f32 %v1255, 0.17677669
        %v1262 = vmul.f32 %v1258, 0.17677669
        %v1263 = vsel %vm1012, %v1261, -inf
        %1264 = vmax.xlane.f32.xlu0 %v1263
        %v1265 = vpop.xlane.xlu0 %1264
        %v1266 = vsel %vm1012, %v1262, -inf
        %1267 = vmax.xlane.f32.xlu0 %v1266
        %v1268 = vpop.xlane.xlu0 %1267
        %v1269 = vsub.f32 %v1261, %v1265
        %v1270 = vsub.f32 %v1262, %v1268
        %v1271 = vmul.f32 %v1269, 1.442695
        %v1272 = vpow.pop %v1271
        %v1273 = vmul.f32 %v1270, 1.442695
        %v1274 = vpow.pop %v1273
        %v1275 = vsel %vm1012, %v1272, 0.0
        %1276 = vadd.xlane.f32.xlu0 %v1275
        %v1277 = vpop.xlane.xlu0 %1276
        %v1278 = vsel %vm1012, %v1274, 0.0
        %1279 = vadd.xlane.f32.xlu0 %v1278
        %v1280 = vpop.xlane.xlu0 %1279
        %v1281 = vrcp.pop %v1277
        %v1282 = vrcp.pop %v1280
        %v1283 = vmul.f32 %v1272, %v1281
        %v1284 = vmul.f32 %v1274, %v1282
        %v1285 = vpack.c.bf16 %v1284, %v1283
        %v1286 = vld [vmem:[#allocation4] sm:$0xff]
        %1288 = vrot.lane.b32.xlu0 %v1286, 64
        %v1289 = vpop.permute.xlu0 %1288
        %v1292 = vsel %vm1012, %v1285, 0
        %1294 = vmatprep.subr.bf16.mxu0 0
        %1295 = vmatpush1.bf16.msra.mxu0 %v1289
        %1296 = vmatprep.subr.bf16.mxu0 0
        %1297 = vmatpush1.bf16.msra.mxu0 0
        %1298 = vmatprep.subr.bf16.mxu0 0
        %1299 = vmatpush1.bf16.msra.mxu0 0
        %1300 = vmatprep.subr.bf16.mxu0 0
        %1301 = vmatpush1.bf16.msra.mxu0 0
        %1302 = vmatprep.subr.bf16.mxu0 0
        %1303 = vmatpush1.bf16.msra.mxu0 0
        %1304 = vmatprep.subr.bf16.mxu0 0
        %1305 = vmatpush1.bf16.msra.mxu0 0
        %1306 = vmatprep.subr.bf16.mxu0 0
        %1307 = vmatpush1.bf16.msra.mxu0 0
        %1308 = vmatprep.subr.bf16.mxu0 0
        %1309 = vmatpush1.bf16.msra.mxu0 0
        %1310 = vmatprep.subr.bf16.mxu0 0
        %1311 = vmatpush1.bf16.msra.mxu0 0
        %1312 = vmatprep.subr.bf16.mxu0 0
        %1313 = vmatpush1.bf16.msra.mxu0 0
        %1314 = vmatprep.subr.bf16.mxu0 0
        %1315 = vmatpush1.bf16.msra.mxu0 0
        %1316 = vmatprep.subr.bf16.mxu0 0
        %1317 = vmatpush1.bf16.msra.mxu0 0
        %1318 = vmatprep.subr.bf16.mxu0 0
        %1319 = vmatpush1.bf16.msra.mxu0 0
        %1320 = vmatprep.subr.bf16.mxu0 0
        %1321 = vmatpush1.bf16.msra.mxu0 0
        %1322 = vmatprep.subr.bf16.mxu0 0
        %1323 = vmatpush1.bf16.msra.mxu0 0
        %1324 = vmatprep.subr.bf16.mxu0 0
        %1325 = vmatpush1.bf16.msra.mxu0 0
        %1326 = vmatprep.mubr.bf16.mxu0 0
        %1327 = vmatmul.mubr.bf16.gmra.mrb[0].mxu0 %v1292
        %v1328 = vpop.f32.mrb[0].mxu0
        %v1329 = vadd.f32 0.0, %v1328
        %v1330 = vpop.f32.mrb[0].mxu0
        %v1331 = vpop.f32.mrb[0].mxu0
        %v1332 = vadd.f32 0.0, %v1331
        %v1333 = vpop.f32.mrb[0].mxu0
        %1334 = vdwg.mxu0
        %v1335 = vpack.c.bf16 %v1332, %v1329
        %1337 = vrot.lane.b32.xlu0 %v1335, 64
        %v1338 = vpop.permute.xlu0 %1337
        %vm1340 = vcmask 785920
        %1341 = vst.msk [vmem:[#allocation5] sm:$0xff] %vm1340, %v1338
        %v1342 = vld [vmem:[#allocation3 + $0x30] sm:$0xff]
        %v1343 = vld [vmem:[#allocation3 + $0x38] sm:$0xff]
        %1344 = vrot.lane.b32.xlu0 %v962, 32
        %v1345 = vpop.permute.xlu0 %1344
        %v1347 = vsel %vm965, %v1345, 0
        %1349 = vmatprep.subr.bf16.mxu0 0
        %1350 = vmatpush1.bf16.msra.mxu0 %v1342
        %1351 = vmatprep.subr.bf16.mxu0 0
        %1352 = vmatpush1.bf16.msra.mxu0 %v1343
        %1353 = vmatprep.subr.bf16.mxu0 0
        %1354 = vmatpush1.bf16.msra.mxu0 0
        %1355 = vmatprep.subr.bf16.mxu0 0
        %1356 = vmatpush1.bf16.msra.mxu0 0
        %1357 = vmatprep.subr.bf16.mxu0 0
        %1358 = vmatpush1.bf16.msra.mxu0 0
        %1359 = vmatprep.subr.bf16.mxu0 0
        %1360 = vmatpush1.bf16.msra.mxu0 0
        %1361 = vmatprep.subr.bf16.mxu0 0
        %1362 = vmatpush1.bf16.msra.mxu0 0
        %1363 = vmatprep.subr.bf16.mxu0 0
        %1364 = vmatpush1.bf16.msra.mxu0 0
        %1365 = vmatprep.subr.bf16.mxu0 0
        %1366 = vmatpush1.bf16.msra.mxu0 0
        %1367 = vmatprep.subr.bf16.mxu0 0
        %1368 = vmatpush1.bf16.msra.mxu0 0
        %1369 = vmatprep.subr.bf16.mxu0 0
        %1370 = vmatpush1.bf16.msra.mxu0 0
        %1371 = vmatprep.subr.bf16.mxu0 0
        %1372 = vmatpush1.bf16.msra.mxu0 0
        %1373 = vmatprep.subr.bf16.mxu0 0
        %1374 = vmatpush1.bf16.msra.mxu0 0
        %1375 = vmatprep.subr.bf16.mxu0 0
        %1376 = vmatpush1.bf16.msra.mxu0 0
        %1377 = vmatprep.subr.bf16.mxu0 0
        %1378 = vmatpush1.bf16.msra.mxu0 0
        %1379 = vmatprep.subr.bf16.mxu0 0
        %1380 = vmatpush1.bf16.msra.mxu0 0
        %1381 = vmatprep.mubr.bf16.mxu0 0
        %1382 = vmatmul.mubr.bf16.gmra.mrb[0].mxu0 %v1347
        %v1383 = vpop.f32.mrb[0].mxu0
        %v1384 = vadd.f32 0.0, %v1383
        %v1385 = vpop.f32.mrb[0].mxu0
        %v1386 = vpop.f32.mrb[0].mxu0
        %v1387 = vadd.f32 0.0, %v1386
        %v1388 = vpop.f32.mrb[0].mxu0
        %1389 = vdwg.mxu0
        %v1390 = vmul.f32 %v1384, 0.17677669
        %v1391 = vmul.f32 %v1387, 0.17677669
        %v1392 = vsel %vm1012, %v1390, -inf
        %1393 = vmax.xlane.f32.xlu0 %v1392
        %v1394 = vpop.xlane.xlu0 %1393
        %v1395 = vsel %vm1012, %v1391, -inf
        %1396 = vmax.xlane.f32.xlu0 %v1395
        %v1397 = vpop.xlane.xlu0 %1396
        %v1398 = vsub.f32 %v1390, %v1394
        %v1399 = vsub.f32 %v1391, %v1397
        %v1400 = vmul.f32 %v1398, 1.442695
        %v1401 = vpow.pop %v1400
        %v1402 = vmul.f32 %v1399, 1.442695
        %v1403 = vpow.pop %v1402
        %v1404 = vsel %vm1012, %v1401, 0.0
        %1405 = vadd.xlane.f32.xlu0 %v1404
        %v1406 = vpop.xlane.xlu0 %1405
        %v1407 = vsel %vm1012, %v1403, 0.0
        %1408 = vadd.xlane.f32.xlu0 %v1407
        %v1409 = vpop.xlane.xlu0 %1408
        %v1410 = vrcp.pop %v1406
        %v1411 = vrcp.pop %v1409
        %v1412 = vmul.f32 %v1401, %v1410
        %v1413 = vmul.f32 %v1403, %v1411
        %v1414 = vpack.c.bf16 %v1413, %v1412
        %v1415 = vld [vmem:[#allocation4] sm:$0xff]
        %1417 = vrot.lane.b32.xlu0 %v1415, 32
        %v1418 = vpop.permute.xlu0 %1417
        %v1421 = vsel %vm1012, %v1414, 0
        %1423 = vmatprep.subr.bf16.mxu0 0
        %1424 = vmatpush1.bf16.msra.mxu0 %v1418
        %1425 = vmatprep.subr.bf16.mxu0 0
        %1426 = vmatpush1.bf16.msra.mxu0 0
        %1427 = vmatprep.subr.bf16.mxu0 0
        %1428 = vmatpush1.bf16.msra.mxu0 0
        %1429 = vmatprep.subr.bf16.mxu0 0
        %1430 = vmatpush1.bf16.msra.mxu0 0
        %1431 = vmatprep.subr.bf16.mxu0 0
        %1432 = vmatpush1.bf16.msra.mxu0 0
        %1433 = vmatprep.subr.bf16.mxu0 0
        %1434 = vmatpush1.bf16.msra.mxu0 0
        %1435 = vmatprep.subr.bf16.mxu0 0
        %1436 = vmatpush1.bf16.msra.mxu0 0
        %1437 = vmatprep.subr.bf16.mxu0 0
        %1438 = vmatpush1.bf16.msra.mxu0 0
        %1439 = vmatprep.subr.bf16.mxu0 0
        %1440 = vmatpush1.bf16.msra.mxu0 0
        %1441 = vmatprep.subr.bf16.mxu0 0
        %1442 = vmatpush1.bf16.msra.mxu0 0
        %1443 = vmatprep.subr.bf16.mxu0 0
        %1444 = vmatpush1.bf16.msra.mxu0 0
        %1445 = vmatprep.subr.bf16.mxu0 0
        %1446 = vmatpush1.bf16.msra.mxu0 0
        %1447 = vmatprep.subr.bf16.mxu0 0
        %1448 = vmatpush1.bf16.msra.mxu0 0
        %1449 = vmatprep.subr.bf16.mxu0 0
        %1450 = vmatpush1.bf16.msra.mxu0 0
        %1451 = vmatprep.subr.bf16.mxu0 0
        %1452 = vmatpush1.bf16.msra.mxu0 0
        %1453 = vmatprep.subr.bf16.mxu0 0
        %1454 = vmatpush1.bf16.msra.mxu0 0
        %1455 = vmatprep.mubr.bf16.mxu0 0
        %1456 = vmatmul.mubr.bf16.gmra.mrb[0].mxu0 %v1421
        %v1457 = vpop.f32.mrb[0].mxu0
        %v1458 = vadd.f32 0.0, %v1457
        %v1459 = vpop.f32.mrb[0].mxu0
        %v1460 = vpop.f32.mrb[0].mxu0
        %v1461 = vadd.f32 0.0, %v1460
        %v1462 = vpop.f32.mrb[0].mxu0
        %1463 = vdwg.mxu0
        %v1464 = vpack.c.bf16 %v1461, %v1458
        %1466 = vrot.lane.b32.xlu0 %v1464, 96
        %v1467 = vpop.permute.xlu0 %1466
        %vm1469 = vcmask 1048320
        %1470 = vst.msk [vmem:[#allocation5] sm:$0xff] %vm1469, %v1467
        %v1471 = vld [vmem:[#allocation5] sm:$0xff]
        %v1472 = vld [vmem:[#allocation12] sm:$0xf]
        %v1473 = vld [vmem:[#allocation12 + $0x4] sm:$0xf]
        %v1474 = vld [vmem:[#allocation12 + $0x8] sm:$0xf]
        %v1475 = vld [vmem:[#allocation12 + $0xc] sm:$0xf]
        %v1476 = vld [vmem:[#allocation12 + $0x10] sm:$0xf]
        %v1477 = vld [vmem:[#allocation12 + $0x14] sm:$0xf]
        %v1478 = vld [vmem:[#allocation12 + $0x18] sm:$0xf]
        %v1479 = vld [vmem:[#allocation12 + $0x1c] sm:$0xf]
        %v1480 = vld [vmem:[#allocation12 + $0x20] sm:$0xf]
        %v1481 = vld [vmem:[#allocation12 + $0x24] sm:$0xf]
        %v1482 = vld [vmem:[#allocation12 + $0x28] sm:$0xf]
        %v1483 = vld [vmem:[#allocation12 + $0x2c] sm:$0xf]
        %v1484 = vld [vmem:[#allocation12 + $0x30] sm:$0xf]
        %v1485 = vld [vmem:[#allocation12 + $0x34] sm:$0xf]
        %v1486 = vld [vmem:[#allocation12 + $0x38] sm:$0xf]
        %v1487 = vld [vmem:[#allocation12 + $0x3c] sm:$0xf]
        %v1488 = vld [vmem:[#allocation14] sm:$0x1]
        %v1490 = vlaneseq
        %v1491 = vshrl.u32 %v1490, 7
        %v1492 = vsub.s32 0, %v1491
        %v1493 = vrot.slane %v1488, %v1492
        %v1511 = vunpack.c.l.b16 %v1472
        %v1512 = vunpack.c.l.b16 %v1473
        %v1513 = vunpack.c.l.b16 %v1474
        %v1514 = vunpack.c.l.b16 %v1475
        %v1515 = vunpack.c.l.b16 %v1476
        %v1516 = vunpack.c.l.b16 %v1477
        %v1517 = vunpack.c.l.b16 %v1478
        %v1518 = vunpack.c.l.b16 %v1479
        %v1519 = vunpack.c.l.b16 %v1480
        %v1520 = vunpack.c.l.b16 %v1481
        %v1521 = vunpack.c.l.b16 %v1482
        %v1522 = vunpack.c.l.b16 %v1483
        %v1523 = vunpack.c.l.b16 %v1484
        %v1524 = vunpack.c.l.b16 %v1485
        %v1525 = vunpack.c.l.b16 %v1486
        %v1526 = vunpack.c.l.b16 %v1487
        %v1527 = vpack.c.b16 %v1512, %v1511
        %v1528 = vpack.c.b16 %v1514, %v1513
        %v1529 = vpack.c.b16 %v1516, %v1515
        %v1530 = vpack.c.b16 %v1518, %v1517
        %v1531 = vpack.c.b16 %v1520, %v1519
        %v1532 = vpack.c.b16 %v1522, %v1521
        %v1533 = vpack.c.b16 %v1524, %v1523
        %v1534 = vpack.c.b16 %v1526, %v1525
        %1543 = vmatprep.subr.bf16.mxu0 0
        %1544 = vmatpush1.bf16.msra.mxu0 %v1527
        %1545 = vmatprep.subr.bf16.mxu0 0
        %1546 = vmatpush1.bf16.msra.mxu0 %v1528
        %1547 = vmatprep.subr.bf16.mxu0 0
        %1548 = vmatpush1.bf16.msra.mxu0 %v1529
        %1549 = vmatprep.subr.bf16.mxu0 0
        %1550 = vmatpush1.bf16.msra.mxu0 %v1530
        %1551 = vmatprep.subr.bf16.mxu0 0
        %1552 = vmatpush1.bf16.msra.mxu0 %v1531
        %1553 = vmatprep.subr.bf16.mxu0 0
        %1554 = vmatpush1.bf16.msra.mxu0 %v1532
        %1555 = vmatprep.subr.bf16.mxu0 0
        %1556 = vmatpush1.bf16.msra.mxu0 %v1533
        %1557 = vmatprep.subr.bf16.mxu0 0
        %1558 = vmatpush1.bf16.msra.mxu0 %v1534
        %1559 = vmatprep.subr.bf16.mxu0 0
        %1560 = vmatpush1.bf16.msra.mxu0 0
        %1561 = vmatprep.subr.bf16.mxu0 0
        %1562 = vmatpush1.bf16.msra.mxu0 0
        %1563 = vmatprep.subr.bf16.mxu0 0
        %1564 = vmatpush1.bf16.msra.mxu0 0
        %1565 = vmatprep.subr.bf16.mxu0 0
        %1566 = vmatpush1.bf16.msra.mxu0 0
        %1567 = vmatprep.subr.bf16.mxu0 0
        %1568 = vmatpush1.bf16.msra.mxu0 0
        %1569 = vmatprep.subr.bf16.mxu0 0
        %1570 = vmatpush1.bf16.msra.mxu0 0
        %1571 = vmatprep.subr.bf16.mxu0 0
        %1572 = vmatpush1.bf16.msra.mxu0 0
        %1573 = vmatprep.subr.bf16.mxu0 0
        %1574 = vmatpush1.bf16.msra.mxu0 0
        %1575 = vmatprep.mubr.bf16.mxu0 0
        %1576 = vmatmul.mubr.bf16.gmra.mrb[0].mxu0 %v1471
        %v1577 = vpop.f32.mrb[0].mxu0
        %v1578 = vadd.f32 %v1493, %v1577
        %v1579 = vpop.f32.mrb[0].mxu0
        %v1580 = vpop.f32.mrb[0].mxu0
        %v1581 = vadd.f32 %v1493, %v1580
        %v1582 = vpop.f32.mrb[0].mxu0
        %1583 = vdwg.mxu0
        %v1584 = vadd.f32 %v1578, %v956
        %v1585 = vadd.f32 %v1581, %v957
        %1586 = vadd.xlane.f32.xlu0 %v1584
        %v1587 = vpop.xlane.xlu0 %1586
        %1588 = vadd.xlane.f32.xlu0 %v1585
        %v1589 = vpop.xlane.xlu0 %1588
        %v1590 = vrcp.pop 128.0
        %v1591 = vmul.f32 %v1587, %v1590
        %v1592 = vmul.f32 %v1589, %v1590
        %v1593 = vsub.f32 %v1584, %v1591
        %v1594 = vsub.f32 %v1585, %v1592
        %v1595 = vmul.f32 %v1593, %v1593
        %v1596 = vmul.f32 %v1594, %v1594
        %1597 = vadd.xlane.f32.xlu0 %v1595
        %v1598 = vpop.xlane.xlu0 %1597
        %1599 = vadd.xlane.f32.xlu0 %v1596
        %v1600 = vpop.xlane.xlu0 %1599
        %v1601 = vmul.f32 %v1598, %v1590
        %v1602 = vmul.f32 %v1600, %v1590
        %v1603 = vadd.f32 %v1601, 1e-05
        %v1604 = vadd.f32 %v1602, 1e-05
        %v1605 = vrsqrt.pop %v1603
        %v1606 = vrsqrt.pop %v1604
        %v1607 = vmul.f32 %v1593, %v1605
        %v1608 = vmul.f32 %v1594, %v1606
        %v1609 = vld [vmem:[#allocation15] sm:$0x1]
        %v1611 = vlaneseq
        %v1612 = vshrl.u32 %v1611, 7
        %v1613 = vsub.s32 0, %v1612
        %v1614 = vrot.slane %v1609, %v1613
        %v1616 = vmul.f32 %v1607, %v1614
        %v1617 = vmul.f32 %v1608, %v1614
        %v1618 = vld [vmem:[#allocation17] sm:$0x1]
        %v1620 = vlaneseq
        %v1621 = vshrl.u32 %v1620, 7
        %v1622 = vsub.s32 0, %v1621
        %v1623 = vrot.slane %v1618, %v1622
        %v1625 = vadd.f32 %v1616, %v1623
        %v1626 = vadd.f32 %v1617, %v1623
        %v1627 = vpack.c.bf16 %v1626, %v1625
        %v1628 = vld [vmem:[#allocation18] sm:$0xf]
        %v1629 = vld [vmem:[#allocation18 + $0x4] sm:$0xf]
        %v1630 = vld [vmem:[#allocation18 + $0x8] sm:$0xf]
        %v1631 = vld [vmem:[#allocation18 + $0xc] sm:$0xf]
        %v1632 = vld [vmem:[#allocation18 + $0x10] sm:$0xf]
        %v1633 = vld [vmem:[#allocation18 + $0x14] sm:$0xf]
        %v1634 = vld [vmem:[#allocation18 + $0x18] sm:$0xf]
        %v1635 = vld [vmem:[#allocation18 + $0x1c] sm:$0xf]
        %v1636 = vld [vmem:[#allocation18 + $0x20] sm:$0xf]
        %v1637 = vld [vmem:[#allocation18 + $0x24] sm:$0xf]
        %v1638 = vld [vmem:[#allocation18 + $0x28] sm:$0xf]
        %v1639 = vld [vmem:[#allocation18 + $0x2c] sm:$0xf]
        %v1640 = vld [vmem:[#allocation18 + $0x30] sm:$0xf]
        %v1641 = vld [vmem:[#allocation18 + $0x34] sm:$0xf]
        %v1642 = vld [vmem:[#allocation18 + $0x38] sm:$0xf]
        %v1643 = vld [vmem:[#allocation18 + $0x3c] sm:$0xf]
        %v1644 = vld [vmem:[#allocation20] sm:$0x1]
        %v1646 = vlaneseq
        %v1647 = vshrl.u32 %v1646, 7
        %v1648 = vsub.s32 0, %v1647
        %v1649 = vrot.slane %v1644, %v1648
        %v1667 = vunpack.c.l.b16 %v1628
        %v1668 = vunpack.c.l.b16 %v1629
        %v1669 = vunpack.c.l.b16 %v1630
        %v1670 = vunpack.c.l.b16 %v1631
        %v1671 = vunpack.c.l.b16 %v1632
        %v1672 = vunpack.c.l.b16 %v1633
        %v1673 = vunpack.c.l.b16 %v1634
        %v1674 = vunpack.c.l.b16 %v1635
        %v1675 = vunpack.c.l.b16 %v1636
        %v1676 = vunpack.c.l.b16 %v1637
        %v1677 = vunpack.c.l.b16 %v1638
        %v1678 = vunpack.c.l.b16 %v1639
        %v1679 = vunpack.c.l.b16 %v1640
        %v1680 = vunpack.c.l.b16 %v1641
        %v1681 = vunpack.c.l.b16 %v1642
        %v1682 = vunpack.c.l.b16 %v1643
        %v1683 = vpack.c.b16 %v1668, %v1667
        %v1684 = vpack.c.b16 %v1670, %v1669
        %v1685 = vpack.c.b16 %v1672, %v1671
        %v1686 = vpack.c.b16 %v1674, %v1673
        %v1687 = vpack.c.b16 %v1676, %v1675
        %v1688 = vpack.c.b16 %v1678, %v1677
        %v1689 = vpack.c.b16 %v1680, %v1679
        %v1690 = vpack.c.b16 %v1682, %v1681
        %1699 = vmatprep.subr.bf16.mxu0 0
        %1700 = vmatpush1.bf16.msra.mxu0 %v1683
        %1701 = vmatprep.subr.bf16.mxu0 0
        %1702 = vmatpush1.bf16.msra.mxu0 %v1684
        %1703 = vmatprep.subr.bf16.mxu0 0
        %1704 = vmatpush1.bf16.msra.mxu0 %v1685
        %1705 = vmatprep.subr.bf16.mxu0 0
        %1706 = vmatpush1.bf16.msra.mxu0 %v1686
        %1707 = vmatprep.subr.bf16.mxu0 0
        %1708 = vmatpush1.bf16.msra.mxu0 %v1687
        %1709 = vmatprep.subr.bf16.mxu0 0
        %1710 = vmatpush1.bf16.msra.mxu0 %v1688
        %1711 = vmatprep.subr.bf16.mxu0 0
        %1712 = vmatpush1.bf16.msra.mxu0 %v1689
        %1713 = vmatprep.subr.bf16.mxu0 0
        %1714 = vmatpush1.bf16.msra.mxu0 %v1690
        %1715 = vmatprep.subr.bf16.mxu0 0
        %1716 = vmatpush1.bf16.msra.mxu0 0
        %1717 = vmatprep.subr.bf16.mxu0 0
        %1718 = vmatpush1.bf16.msra.mxu0 0
        %1719 = vmatprep.subr.bf16.mxu0 0
        %1720 = vmatpush1.bf16.msra.mxu0 0
        %1721 = vmatprep.subr.bf16.mxu0 0
        %1722 = vmatpush1.bf16.msra.mxu0 0
        %1723 = vmatprep.subr.bf16.mxu0 0
        %1724 = vmatpush1.bf16.msra.mxu0 0
        %1725 = vmatprep.subr.bf16.mxu0 0
        %1726 = vmatpush1.bf16.msra.mxu0 0
        %1727 = vmatprep.subr.bf16.mxu0 0
        %1728 = vmatpush1.bf16.msra.mxu0 0
        %1729 = vmatprep.subr.bf16.mxu0 0
        %1730 = vmatpush1.bf16.msra.mxu0 0
        %1731 = vmatprep.mubr.bf16.mxu0 0
        %1732 = vmatmul.mubr.bf16.gmra.mrb[0].mxu0 %v1627
        %v1733 = vpop.f32.mrb[0].mxu0
        %v1734 = vadd.f32 %v1649, %v1733
        %v1735 = vpop.f32.mrb[0].mxu0
        %v1736 = vpop.f32.mrb[0].mxu0
        %v1737 = vadd.f32 %v1649, %v1736
        %v1738 = vpop.f32.mrb[0].mxu0
        %1739 = vdwg.mxu0
        %v1740 = vmax.f32 %v1734, 0.0
        %v1741 = vmax.f32 %v1737, 0.0
        %v1742 = vpack.c.bf16 %v1741, %v1740
        %v1743 = vld [vmem:[#allocation21] sm:$0xf]
        %v1744 = vld [vmem:[#allocation21 + $0x4] sm:$0xf]
        %v1745 = vld [vmem:[#allocation21 + $0x8] sm:$0xf]
        %v1746 = vld [vmem:[#allocation21 + $0xc] sm:$0xf]
        %v1747 = vld [vmem:[#allocation21 + $0x10] sm:$0xf]
        %v1748 = vld [vmem:[#allocation21 + $0x14] sm:$0xf]
        %v1749 = vld [vmem:[#allocation21 + $0x18] sm:$0xf]
        %v1750 = vld [vmem:[#allocation21 + $0x1c] sm:$0xf]
        %v1751 = vld [vmem:[#allocation21 + $0x20] sm:$0xf]
        %v1752 = vld [vmem:[#allocation21 + $0x24] sm:$0xf]
        %v1753 = vld [vmem:[#allocation21 + $0x28] sm:$0xf]
        %v1754 = vld [vmem:[#allocation21 + $0x2c] sm:$0xf]
        %v1755 = vld [vmem:[#allocation21 + $0x30] sm:$0xf]
        %v1756 = vld [vmem:[#allocation21 + $0x34] sm:$0xf]
        %v1757 = vld [vmem:[#allocation21 + $0x38] sm:$0xf]
        %v1758 = vld [vmem:[#allocation21 + $0x3c] sm:$0xf]
        %v1759 = vld [vmem:[#allocation23] sm:$0x1]
        %v1761 = vlaneseq
        %v1762 = vshrl.u32 %v1761, 7
        %v1763 = vsub.s32 0, %v1762
        %v1764 = vrot.slane %v1759, %v1763
        %v1782 = vunpack.c.l.b16 %v1743
        %v1783 = vunpack.c.l.b16 %v1744
        %v1784 = vunpack.c.l.b16 %v1745
        %v1785 = vunpack.c.l.b16 %v1746
        %v1786 = vunpack.c.l.b16 %v1747
        %v1787 = vunpack.c.l.b16 %v1748
        %v1788 = vunpack.c.l.b16 %v1749
        %v1789 = vunpack.c.l.b16 %v1750
        %v1790 = vunpack.c.l.b16 %v1751
        %v1791 = vunpack.c.l.b16 %v1752
        %v1792 = vunpack.c.l.b16 %v1753
        %v1793 = vunpack.c.l.b16 %v1754
        %v1794 = vunpack.c.l.b16 %v1755
        %v1795 = vunpack.c.l.b16 %v1756
        %v1796 = vunpack.c.l.b16 %v1757
        %v1797 = vunpack.c.l.b16 %v1758
        %v1798 = vpack.c.b16 %v1783, %v1782
        %v1799 = vpack.c.b16 %v1785, %v1784
        %v1800 = vpack.c.b16 %v1787, %v1786
        %v1801 = vpack.c.b16 %v1789, %v1788
        %v1802 = vpack.c.b16 %v1791, %v1790
        %v1803 = vpack.c.b16 %v1793, %v1792
        %v1804 = vpack.c.b16 %v1795, %v1794
        %v1805 = vpack.c.b16 %v1797, %v1796
        %1814 = vmatprep.subr.bf16.mxu0 0
        %1815 = vmatpush1.bf16.msra.mxu0 %v1798
        %1816 = vmatprep.subr.bf16.mxu0 0
        %1817 = vmatpush1.bf16.msra.mxu0 %v1799
        %1818 = vmatprep.subr.bf16.mxu0 0
        %1819 = vmatpush1.bf16.msra.mxu0 %v1800
        %1820 = vmatprep.subr.bf16.mxu0 0
        %1821 = vmatpush1.bf16.msra.mxu0 %v1801
        %1822 = vmatprep.subr.bf16.mxu0 0
        %1823 = vmatpush1.bf16.msra.mxu0 %v1802
        %1824 = vmatprep.subr.bf16.mxu0 0
        %1825 = vmatpush1.bf16.msra.mxu0 %v1803
        %1826 = vmatprep.subr.bf16.mxu0 0
        %1827 = vmatpush1.bf16.msra.mxu0 %v1804
        %1828 = vmatprep.subr.bf16.mxu0 0
        %1829 = vmatpush1.bf16.msra.mxu0 %v1805
        %1830 = vmatprep.subr.bf16.mxu0 0
        %1831 = vmatpush1.bf16.msra.mxu0 0
        %1832 = vmatprep.subr.bf16.mxu0 0
        %1833 = vmatpush1.bf16.msra.mxu0 0
        %1834 = vmatprep.subr.bf16.mxu0 0
        %1835 = vmatpush1.bf16.msra.mxu0 0
        %1836 = vmatprep.subr.bf16.mxu0 0
        %1837 = vmatpush1.bf16.msra.mxu0 0
        %1838 = vmatprep.subr.bf16.mxu0 0
        %1839 = vmatpush1.bf16.msra.mxu0 0
        %1840 = vmatprep.subr.bf16.mxu0 0
        %1841 = vmatpush1.bf16.msra.mxu0 0
        %1842 = vmatprep.subr.bf16.mxu0 0
        %1843 = vmatpush1.bf16.msra.mxu0 0
        %1844 = vmatprep.subr.bf16.mxu0 0
        %1845 = vmatpush1.bf16.msra.mxu0 0
        %1846 = vmatprep.mubr.bf16.mxu0 0
        %1847 = vmatmul.mubr.bf16.gmra.mrb[0].mxu0 %v1742
        %v1848 = vpop.f32.mrb[0].mxu0
        %v1849 = vadd.f32 %v1764, %v1848
        %v1850 = vpop.f32.mrb[0].mxu0
        %v1851 = vpop.f32.mrb[0].mxu0
        %v1852 = vadd.f32 %v1764, %v1851
        %v1853 = vpop.f32.mrb[0].mxu0
        %1854 = vdwg.mxu0
        %v1855 = vadd.f32 %v1849, %v1625
        %v1856 = vadd.f32 %v1852, %v1626
        %1857 = vadd.xlane.f32.xlu0 %v1855
        %v1858 = vpop.xlane.xlu0 %1857
        %1859 = vadd.xlane.f32.xlu0 %v1856
        %v1860 = vpop.xlane.xlu0 %1859
        %v1861 = vmul.f32 %v1858, %v1590
        %v1862 = vmul.f32 %v1860, %v1590
        %v1863 = vsub.f32 %v1855, %v1861
        %v1864 = vsub.f32 %v1856, %v1862
        %v1865 = vmul.f32 %v1863, %v1863
        %v1866 = vmul.f32 %v1864, %v1864
        %1867 = vadd.xlane.f32.xlu0 %v1865
        %v1868 = vpop.xlane.xlu0 %1867
        %1869 = vadd.xlane.f32.xlu0 %v1866
        %v1870 = vpop.xlane.xlu0 %1869
        %v1871 = vmul.f32 %v1868, %v1590
        %v1872 = vmul.f32 %v1870, %v1590
        %v1873 = vadd.f32 %v1871, 1e-05
        %v1874 = vadd.f32 %v1872, 1e-05
        %v1875 = vrsqrt.pop %v1873
        %v1876 = vrsqrt.pop %v1874
        %v1877 = vmul.f32 %v1863, %v1875
        %v1878 = vmul.f32 %v1864, %v1876
        %v1879 = vld [vmem:[#allocation24] sm:$0x1]
        %v1881 = vlaneseq
        %v1882 = vshrl.u32 %v1881, 7
        %v1883 = vsub.s32 0, %v1882
        %v1884 = vrot.slane %v1879, %v1883
        %v1886 = vmul.f32 %v1877, %v1884
        %v1887 = vmul.f32 %v1878, %v1884
        %v1888 = vld [vmem:[#allocation26] sm:$0x1]
        %v1890 = vlaneseq
        %v1891 = vshrl.u32 %v1890, 7
        %v1892 = vsub.s32 0, %v1891
        %v1893 = vrot.slane %v1888, %v1892
        %v1895 = vadd.f32 %v1886, %v1893
        %v1896 = vadd.f32 %v1887, %v1893
        %1897 = vst [vmem:[%s630] sm:$0xff] %v1895
        %1898 = vst [vmem:[%s630 + $0x8] sm:$0xff] %v1896
        %s1899 = sand.u32 %s336, 1
        %s1900 = scalar_lea.sflag [#allocation8], %s1899
        %s1901 = sand.u32 %s336, 1
        %s1902 = smul.addr %s1901, 16
        %s1903 = scalar_lea.vmem [#allocation27], %s1902
        // Predicated region
        $region129: #{tpu_custom_call.1} parent=71 // pred_check
          %p1904 = pneg %p346
        $region130: #{tpu_custom_call.1} parent=71 // pred_check_branch
          %1906 = sbr.rel (%p1904) target = $region132
        $region131: #{tpu_custom_call.1} parent=71 // pred_region
          %s1907 = smul.u32 2, %s41
          %s1909 = ssub.s32 256, 256
          %1910 = vsyncadd %s1900, %s1909
          %s1911 = smul.addr %s40, 2
          %s1912 = sadd.s32 %s1907, %s1911
          %s1913 = smul.addr %s1912, 128
          %s1914 = scalar_lea.hbm %s13, %s1913
          %s1915 = sshll.u32 %s1903, 4
          %s1916 = int_to_ptr.vmem [resolvable:$true] %s1915
          %1921 = dma.vmem_to_hbm [thread:$0]  %s1916, 256, %s1914, %s1900, 128, 128, 8
        $region132: #{tpu_custom_call.1} parent=71 // pred_fallthru
          _
      $region72: #{tpu_custom_call.1} parent=5 // pred_fallthru
        _
      %p1922 = scmp.le.s32.totalorder 2, %s31
      // Predicated region
      $region133: #{tpu_custom_call.1} parent=5 // pred_check
        %p1923 = pneg %p1922
      $region134: #{tpu_custom_call.1} parent=5 // pred_check_branch
        %1925 = sbr.rel (%p1923) target = $region136
      $region135: #{tpu_custom_call.1} parent=5 // pred_region
        %s1926 = ssub.s32 %s31, 2
        // Predicated region
        $region137: #{tpu_custom_call.1} parent=135 // pred_check
          %p1927 = pneg %p352
        $region138: #{tpu_custom_call.1} parent=135 // pred_check_branch
          %1929 = sbr.rel (%p1927) target = $region140
        $region139: #{tpu_custom_call.1} parent=135 // pred_region
          %s1930 = sand.u32 %s337, 1
          %s1931 = scalar_lea.sflag [#allocation8], %s1930
          %s1932 = sand.u32 %s337, 1
          %s1933 = smul.addr %s1932, 16
          %s1934 = scalar_lea.vmem [#allocation27], %s1933
          %1935 = dma.done %s1931, 256
        $region140: #{tpu_custom_call.1} parent=135 // pred_fallthru
          _
      $region136: #{tpu_custom_call.1} parent=5 // pred_fallthru
        _
    $region6: #{tpu_custom_call.1} parent=1 // loop_footer
      %s35 = sadd.s32 1, %s31
    $region7: #{tpu_custom_call.1} parent=1 // loop_footer_branch
      %30 = sbr.rel target = $region3
    $region8: #{tpu_custom_call.1} parent=1 // loop_exit
      _
    %1936 = vsyncpa [#allocation7], 1
    %s1937 = scalar_lea.sflag [#allocation7], 1
    %1938 = vsyncpa %s1937, 1
    %1939 = vsyncpa [#allocation10], 1
    %1940 = vsyncpa [#allocation13], 1
    %1941 = vsyncpa [#allocation16], 1
    %1942 = vsyncpa [#allocation19], 1
    %1943 = vsyncpa [#allocation22], 1
    %1944 = vsyncpa [#allocation25], 1
    %1945 = vsyncpa [#allocation8], 1
    %s1946 = scalar_lea.sflag [#allocation8], 1
    %1947 = vsyncpa %s1946, 1

// kernel: tpu_custom_call.1
$region0: #{tpu_custom_call.1}
  #allocation0 [shape = 'u32[]', space=smem, size = 0x4, offset = 0x4, fixed_abs, tag = 'smem constant byte address 0x4 - core index']
  #allocation1 [shape = 'u32[144,128]{1,0:T(1,128)}', space=vmem, size = 0x12000, scoped, tag = 'internal scratch']
  #allocation2 [shape = 'bf16[16,128]{1,0:T(16,128)(2,1)}', space=vmem, size = 0x1000, scoped, tag = 'scratch operand']
  #allocation3 [shape = 'bf16[128,16]{1,0:T(16,128)(2,1)}', space=vmem, size = 0x8000, scoped, tag = 'scratch operand']
  #allocation4 [shape = 'bf16[16,128]{1,0:T(16,128)(2,1)}', space=vmem, size = 0x1000, scoped, tag = 'scratch operand']
  #allocation5 [shape = 'bf16[16,128]{1,0:T(16,128)(2,1)}', space=vmem, size = 0x1000, scoped, tag = 'scratch operand']
  %s0 = inlined_call_operand.hbm [shape: f32[2,16,128], index: 0, kind: input, shape index: {}]
  %s1 = inlined_call_operand.hbm [shape: bf16[128,384], index: 1, kind: input, shape index: {}]
  %s2 = inlined_call_operand.hbm [shape: f32[1,384], index: 2, kind: input, shape index: {}]
  %s3 = inlined_call_operand.hbm [shape: bf16[128,128], index: 3, kind: input, shape index: {}]
  %s4 = inlined_call_operand.hbm [shape: f32[1,128], index: 4, kind: input, shape index: {}]
  %s5 = inlined_call_operand.hbm [shape: f32[1,128], index: 5, kind: input, shape index: {}]
  %s6 = inlined_call_operand.hbm [shape: f32[1,128], index: 6, kind: input, shape index: {}]
  %s7 = inlined_call_operand.hbm [shape: bf16[128,128], index: 7, kind: input, shape index: {}]
  %s8 = inlined_call_operand.hbm [shape: f32[1,128], index: 8, kind: input, shape index: {}]
  %s9 = inlined_call_operand.hbm [shape: bf16[128,128], index: 9, kind: input, shape index: {}]
  %s10 = inlined_call_operand.hbm [shape: f32[1,128], index: 10, kind: input, shape index: {}]
  %s11 = inlined_call_operand.hbm [shape: f32[1,128], index: 11, kind: input, shape index: {}]
  %s12 = inlined_call_operand.hbm [shape: f32[1,128], index: 12, kind: input, shape index: {}]
  %s13 = inlined_call_operand.hbm [shape: f32[2,16,128], index: 13, kind: output, shape index: {}]
  %s14 = sld [smem:[#allocation0]]
  $region141: #{tpu_custom_call.1} parent=0
    _
  %s16 = ssub.s32 1, %s14
  %s17 = scalar_select 0, %s16, %s14
  $region1: #{tpu_custom_call.1} parent=0
    #allocation6 [shape = 'u8[16384]{0}', space=vmem, size = 0x4000, scoped, tag = 'input window, operand 0']
    #allocation7 [shape = 's32[2]{0}', space=sflag, size = 0x8, scoped, tag = 'scoped memory for tpu_custom_call.1']
    #allocation8 [shape = 's32[2]{0}', space=sflag, size = 0x8, scoped, tag = 'scoped memory for tpu_custom_call.1']
    #allocation9 [shape = 'u8[98304]{0}', space=vmem, size = 0x18000, scoped, tag = 'input window, operand 1, single buffered']
    #allocation10 [shape = 's32[1]{0}', space=sflag, size = 0x4, scoped, tag = 'scoped memory for tpu_custom_call.1']
    #allocation11 [shape = 'u8[1536]{0}', space=vmem, size = 0x800, scoped, tag = 'input window, operand 2, single buffered']
    #allocation12 [shape = 'u8[32768]{0}', space=vmem, size = 0x8000, scoped, tag = 'input window, operand 3, single buffered']
    #allocation13 [shape = 's32[1]{0}', space=sflag, size = 0x4, scoped, tag = 'scoped memory for tpu_custom_call.1']
    #allocation14 [shape = 'u8[512]{0}', space=vmem, size = 0x400, scoped, tag = 'input window, operand 4, single buffered']
    #allocation15 [shape = 'u8[512]{0}', space=vmem, size = 0x400, scoped, tag = 'input window, operand 5, single buffered']
    #allocation16 [shape = 's32[1]{0}', space=sflag, size = 0x4, scoped, tag = 'scoped memory for tpu_custom_call.1']
    #allocation17 [shape = 'u8[512]{0}', space=vmem, size = 0x400, scoped, tag = 'input window, operand 6, single buffered']
    #allocation18 [shape = 'u8[32768]{0}', space=vmem, size = 0x8000, scoped, tag = 'input window, operand 7, single buffered']
    #allocation19 [shape = 's32[1]{0}', space=sflag, size = 0x4, scoped, tag = 'scoped memory for tpu_custom_call.1']
    #allocation20 [shape = 'u8[512]{0}', space=vmem, size = 0x400, scoped, tag = 'input window, operand 8, single buffered']
    #allocation21 [shape = 'u8[32768]{0}', space=vmem, size = 0x8000, scoped, tag = 'input window, operand 9, single buffered']
    #allocation22 [shape = 's32[1]{0}', space=sflag, size = 0x4, scoped, tag = 'scoped memory for tpu_custom_call.1']
    #allocation23 [shape = 'u8[512]{0}', space=vmem, size = 0x400, scoped, tag = 'input window, operand 10, single buffered']
    #allocation24 [shape = 'u8[512]{0}', space=vmem, size = 0x400, scoped, tag = 'input window, operand 11, single buffered']
    #allocation25 [shape = 's32[1]{0}', space=sflag, size = 0x4, scoped, tag = 'scoped memory for tpu_custom_call.1']
    #allocation26 [shape = 'u8[512]{0}', space=vmem, size = 0x400, scoped, tag = 'input window, operand 12, single buffered']
    #allocation27 [shape = 'u8[16384]{0}', space=vmem, size = 0x4000, scoped, tag = 'output window, operand 0']
    %18 = vsyncpa [#allocation7], 0
    %s19 = scalar_lea.sflag [#allocation7], 1
    %20 = vsyncpa %s19, 0
    %21 = vsyncpa [#allocation10], 0
    %22 = vsyncpa [#allocation13], 0
    %23 = vsyncpa [#allocation16], 0
    %24 = vsyncpa [#allocation19], 0
    %25 = vsyncpa [#allocation22], 0
    %26 = vsyncpa [#allocation25], 0
    %27 = vsyncpa [#allocation8], 0
    %s28 = scalar_lea.sflag [#allocation8], 1
    %29 = vsyncpa %s28, 0
    loop: start=0, step=1, limit=4
    $region2: #{tpu_custom_call.1} parent=1 // loop_pre_header
      _
    $region3: #{tpu_custom_call.1} parent=1 // loop_header
      %s31 = sphi 0, %s35
      %p32 = scmp.ge.s32.totalorder %s31, 4
      %s38 = sphi 0, %s50
      %s39 = sphi 0, %s46
      %s40 = sphi 0, %s38
      %s41 = sphi 0, %s39
      %s42 = sphi 0, %s40
      %s43 = sphi 0, %s41
      %s53 = sphi 0, %s55
      %s56 = sphi 0, %s53
      %s57 = sphi 0, %s56
      %s73 = sphi 0, %s57
      %s77 = sphi 0, %s77
      %s79 = sphi 0, %s77
      %s80 = sphi 0, %s79
      %s94 = sphi 0, %s80
      %s98 = sphi 0, %s98
      %s100 = sphi 0, %s98
      %s101 = sphi 0, %s100
      %s115 = sphi 0, %s101
      %s119 = sphi 0, %s119
      %s121 = sphi 0, %s119
      %s122 = sphi 0, %s121
      %s136 = sphi 0, %s122
      %s140 = sphi 0, %s140
      %s142 = sphi 0, %s140
      %s143 = sphi 0, %s142
      %s157 = sphi 0, %s143
      %s161 = sphi 0, %s161
      %s163 = sphi 0, %s161
      %s164 = sphi 0, %s163
      %s178 = sphi 0, %s164
      %s182 = sphi 0, %s182
      %s184 = sphi 0, %s182
      %s185 = sphi 0, %s184
      %s199 = sphi 0, %s185
      %s203 = sphi 0, %s203
      %s205 = sphi 0, %s203
      %s206 = sphi 0, %s205
      %s220 = sphi 0, %s206
      %s224 = sphi 0, %s224
      %s226 = sphi 0, %s224
      %s227 = sphi 0, %s226
      %s241 = sphi 0, %s227
      %s245 = sphi 0, %s245
      %s247 = sphi 0, %s245
      %s248 = sphi 0, %s247
      %s262 = sphi 0, %s248
      %s266 = sphi 0, %s266
      %s268 = sphi 0, %s266
      %s269 = sphi 0, %s268
      %s283 = sphi 0, %s269
      %s287 = sphi 0, %s287
      %s289 = sphi 0, %s287
      %s290 = sphi 0, %s289
      %s304 = sphi 0, %s290
      %s308 = sphi 0, %s308
      %s310 = sphi 0, %s308
      %s311 = sphi 0, %s310
      %s325 = sphi 0, %s311
      %s333 = sphi 0, %s335
      %s336 = sphi 0, %s333
      %s337 = sphi 0, %s336
      %s353 = sphi 0, %s337
    $region4: #{tpu_custom_call.1} parent=1 // loop_header_branch
      %34 = sbr.rel (%p32) target = $region8
    $region5: #{tpu_custom_call.1} parent=1 // loop_body
      %s36 = ssub.s32 %s31, 1
      %s37 = ssub.s32 %s31, 2
      %s44 = sadd.s32 1, %s39
      %p45 = scmp.ge.s32.totalorder %s44, 1
      %s46 = scalar_select %p45, 0, %s44
      %s47 = sadd.s32 1, %s38
      %s48 = scalar_select %p45, %s47, %s38
      %p49 = scmp.ge.s32.totalorder %s48, 2
      %s50 = scalar_select %p49, 0, %s48
      %s51 = ssub.s32 %s38, %s50
      %p52 = scmp.eq.s32.totalorder %s51, 0
      %s54 = sadd.s32 %s53, 1
      %s55 = scalar_select %p52, %s53, %s54
      %p58 = pneg %p52
      %p59 = scmp.eq.s32.totalorder %s31, 1
      %p60 = por %p58, %p59
      %p61 = scmp.ne.s32.totalorder %s53, %s56
      %p62 = scmp.eq.s32.totalorder %s31, 0
      %p63 = por %p61, %p62
      %p64 = scmp.ne.s32.totalorder %s53, %s56
      %p65 = scmp.eq.s32.totalorder %s36, 1
      %p66 = por %p64, %p65
      %p67 = scmp.ne.s32.totalorder %s56, %s57
      %p68 = scmp.eq.s32.totalorder %s36, 0
      %p69 = por %p67, %p68
      %p70 = scmp.ne.s32.totalorder %s56, %s57
      %p71 = scmp.eq.s32.totalorder %s37, 1
      %p72 = por %p70, %p71
      %p74 = scmp.ne.s32.totalorder %s57, %s73
      %p75 = scmp.eq.s32.totalorder %s37, 0
      %p76 = por %p74, %p75
      %s78 = sadd.s32 %s77, 1
      %p81 = scmp.eq.s32.totalorder %s31, 1
      %p82 = scmp.ne.s32.totalorder %s77, %s79
      %p83 = scmp.eq.s32.totalorder %s31, 0
      %p84 = por %p82, %p83
      %p85 = scmp.ne.s32.totalorder %s77, %s79
      %p86 = scmp.eq.s32.totalorder %s36, 1
      %p87 = por %p85, %p86
      %p88 = scmp.ne.s32.totalorder %s79, %s80
      %p89 = scmp.eq.s32.totalorder %s36, 0
      %p90 = por %p88, %p89
      %p91 = scmp.ne.s32.totalorder %s79, %s80
      %p92 = scmp.eq.s32.totalorder %s37, 1
      %p93 = por %p91, %p92
      %p95 = scmp.ne.s32.totalorder %s80, %s94
      %p96 = scmp.eq.s32.totalorder %s37, 0
      %p97 = por %p95, %p96
      %s99 = sadd.s32 %s98, 1
      %p102 = scmp.eq.s32.totalorder %s31, 1
      %p103 = scmp.ne.s32.totalorder %s98, %s100
      %p104 = scmp.eq.s32.totalorder %s31, 0
      %p105 = por %p103, %p104
      %p106 = scmp.ne.s32.totalorder %s98, %s100
      %p107 = scmp.eq.s32.totalorder %s36, 1
      %p108 = por %p106, %p107
      %p109 = scmp.ne.s32.totalorder %s100, %s101
      %p110 = scmp.eq.s32.totalorder %s36, 0
      %p111 = por %p109, %p110
      %p112 = scmp.ne.s32.totalorder %s100, %s101
      %p113 = scmp.eq.s32.totalorder %s37, 1
      %p114 = por %p112, %p113
      %p116 = scmp.ne.s32.totalorder %s101, %s115
      %p117 = scmp.eq.s32.totalorder %s37, 0
      %p118 = por %p116, %p117
      %s120 = sadd.s32 %s119, 1
      %p123 = scmp.eq.s32.totalorder %s31, 1
      %p124 = scmp.ne.s32.totalorder %s119, %s121
      %p125 = scmp.eq.s32.totalorder %s31, 0
      %p126 = por %p124, %p125
      %p127 = scmp.ne.s32.totalorder %s119, %s121
      %p128 = scmp.eq.s32.totalorder %s36, 1
      %p129 = por %p127, %p128
      %p130 = scmp.ne.s32.totalorder %s121, %s122
      %p131 = scmp.eq.s32.totalorder %s36, 0
      %p132 = por %p130, %p131
      %p133 = scmp.ne.s32.totalorder %s121, %s122
      %p134 = scmp.eq.s32.totalorder %s37, 1
      %p135 = por %p133, %p134
      %p137 = scmp.ne.s32.totalorder %s122, %s136
      %p138 = scmp.eq.s32.totalorder %s37, 0
      %p139 = por %p137, %p138
      %s141 = sadd.s32 %s140, 1
      %p144 = scmp.eq.s32.totalorder %s31, 1
      %p145 = scmp.ne.s32.totalorder %s140, %s142
      %p146 = scmp.eq.s32.totalorder %s31, 0
      %p147 = por %p145, %p146
      %p148 = scmp.ne.s32.totalorder %s140, %s142
      %p149 = scmp.eq.s32.totalorder %s36, 1
      %p150 = por %p148, %p149
      %p151 = scmp.ne.s32.totalorder %s142, %s143
      %p152 = scmp.eq.s32.totalorder %s36, 0
      %p153 = por %p151, %p152
      %p154 = scmp.ne.s32.totalorder %s142, %s143
      %p155 = scmp.eq.s32.totalorder %s37, 1
      %p156 = por %p154, %p155
      %p158 = scmp.ne.s32.totalorder %s143, %s157
      %p159 = scmp.eq.s32.totalorder %s37, 0
      %p160 = por %p158, %p159
      %s162 = sadd.s32 %s161, 1
      %p165 = scmp.eq.s32.totalorder %s31, 1
      %p166 = scmp.ne.s32.totalorder %s161, %s163
      %p167 = scmp.eq.s32.totalorder %s31, 0
      %p168 = por %p166, %p167
      %p169 = scmp.ne.s32.totalorder %s161, %s163
      %p170 = scmp.eq.s32.totalorder %s36, 1
      %p171 = por %p169, %p170
      %p172 = scmp.ne.s32.totalorder %s163, %s164
      %p173 = scmp.eq.s32.totalorder %s36, 0
      %p174 = por %p172, %p173
      %p175 = scmp.ne.s32.totalorder %s163, %s164
      %p176 = scmp.eq.s32.totalorder %s37, 1
      %p177 = por %p175, %p176
      %p179 = scmp.ne.s32.totalorder %s164, %s178
      %p180 = scmp.eq.s32.totalorder %s37, 0
      %p181 = por %p179, %p180
      %s183 = sadd.s32 %s182, 1
      %p186 = scmp.eq.s32.totalorder %s31, 1
      %p187 = scmp.ne.s32.totalorder %s182, %s184
      %p188 = scmp.eq.s32.totalorder %s31, 0
      %p189 = por %p187, %p188
      %p190 = scmp.ne.s32.totalorder %s182, %s184
      %p191 = scmp.eq.s32.totalorder %s36, 1
      %p192 = por %p190, %p191
      %p193 = scmp.ne.s32.totalorder %s184, %s185
      %p194 = scmp.eq.s32.totalorder %s36, 0
      %p195 = por %p193, %p194
      %p196 = scmp.ne.s32.totalorder %s184, %s185
      %p197 = scmp.eq.s32.totalorder %s37, 1
      %p198 = por %p196, %p197
      %p200 = scmp.ne.s32.totalorder %s185, %s199
      %p201 = scmp.eq.s32.totalorder %s37, 0
      %p202 = por %p200, %p201
      %s204 = sadd.s32 %s203, 1
      %p207 = scmp.eq.s32.totalorder %s31, 1
      %p208 = scmp.ne.s32.totalorder %s203, %s205
      %p209 = scmp.eq.s32.totalorder %s31, 0
      %p210 = por %p208, %p209
      %p211 = scmp.ne.s32.totalorder %s203, %s205
      %p212 = scmp.eq.s32.totalorder %s36, 1
      %p213 = por %p211, %p212
      %p214 = scmp.ne.s32.totalorder %s205, %s206
      %p215 = scmp.eq.s32.totalorder %s36, 0
      %p216 = por %p214, %p215
      %p217 = scmp.ne.s32.totalorder %s205, %s206
      %p218 = scmp.eq.s32.totalorder %s37, 1
      %p219 = por %p217, %p218
      %p221 = scmp.ne.s32.totalorder %s206, %s220
      %p222 = scmp.eq.s32.totalorder %s37, 0
      %p223 = por %p221, %p222
      %s225 = sadd.s32 %s224, 1
      %p228 = scmp.eq.s32.totalorder %s31, 1
      %p229 = scmp.ne.s32.totalorder %s224, %s226
      %p230 = scmp.eq.s32.totalorder %s31, 0
      %p231 = por %p229, %p230
      %p232 = scmp.ne.s32.totalorder %s224, %s226
      %p233 = scmp.eq.s32.totalorder %s36, 1
      %p234 = por %p232, %p233
      %p235 = scmp.ne.s32.totalorder %s226, %s227
      %p236 = scmp.eq.s32.totalorder %s36, 0
      %p237 = por %p235, %p236
      %p238 = scmp.ne.s32.totalorder %s226, %s227
      %p239 = scmp.eq.s32.totalorder %s37, 1
      %p240 = por %p238, %p239
      %p242 = scmp.ne.s32.totalorder %s227, %s241
      %p243 = scmp.eq.s32.totalorder %s37, 0
      %p244 = por %p242, %p243
      %s246 = sadd.s32 %s245, 1
      %p249 = scmp.eq.s32.totalorder %s31, 1
      %p250 = scmp.ne.s32.totalorder %s245, %s247
      %p251 = scmp.eq.s32.totalorder %s31, 0
      %p252 = por %p250, %p251
      %p253 = scmp.ne.s32.totalorder %s245, %s247
      %p254 = scmp.eq.s32.totalorder %s36, 1
      %p255 = por %p253, %p254
      %p256 = scmp.ne.s32.totalorder %s247, %s248
      %p257 = scmp.eq.s32.totalorder %s36, 0
      %p258 = por %p256, %p257
      %p259 = scmp.ne.s32.totalorder %s247, %s248
      %p260 = scmp.eq.s32.totalorder %s37, 1
      %p261 = por %p259, %p260
      %p263 = scmp.ne.s32.totalorder %s248, %s262
      %p264 = scmp.eq.s32.totalorder %s37, 0
      %p265 = por %p263, %p264
      %s267 = sadd.s32 %s266, 1
      %p270 = scmp.eq.s32.totalorder %s31, 1
      %p271 = scmp.ne.s32.totalorder %s266, %s268
      %p272 = scmp.eq.s32.totalorder %s31, 0
      %p273 = por %p271, %p272
      %p274 = scmp.ne.s32.totalorder %s266, %s268
      %p275 = scmp.eq.s32.totalorder %s36, 1
      %p276 = por %p274, %p275
      %p277 = scmp.ne.s32.totalorder %s268, %s269
      %p278 = scmp.eq.s32.totalorder %s36, 0
      %p279 = por %p277, %p278
      %p280 = scmp.ne.s32.totalorder %s268, %s269
      %p281 = scmp.eq.s32.totalorder %s37, 1
      %p282 = por %p280, %p281
      %p284 = scmp.ne.s32.totalorder %s269, %s283
      %p285 = scmp.eq.s32.totalorder %s37, 0
      %p286 = por %p284, %p285
      %s288 = sadd.s32 %s287, 1
      %p291 = scmp.eq.s32.totalorder %s31, 1
      %p292 = scmp.ne.s32.totalorder %s287, %s289
      %p293 = scmp.eq.s32.totalorder %s31, 0
      %p294 = por %p292, %p293
      %p295 = scmp.ne.s32.totalorder %s287, %s289
      %p296 = scmp.eq.s32.totalorder %s36, 1
      %p297 = por %p295, %p296
      %p298 = scmp.ne.s32.totalorder %s289, %s290
      %p299 = scmp.eq.s32.totalorder %s36, 0
      %p300 = por %p298, %p299
      %p301 = scmp.ne.s32.totalorder %s289, %s290
      %p302 = scmp.eq.s32.totalorder %s37, 1
      %p303 = por %p301, %p302
      %p305 = scmp.ne.s32.totalorder %s290, %s304
      %p306 = scmp.eq.s32.totalorder %s37, 0
      %p307 = por %p305, %p306
      %s309 = sadd.s32 %s308, 1
      %p312 = scmp.eq.s32.totalorder %s31, 1
      %p313 = scmp.ne.s32.totalorder %s308, %s310
      %p314 = scmp.eq.s32.totalorder %s31, 0
      %p315 = por %p313, %p314
      %p316 = scmp.ne.s32.totalorder %s308, %s310
      %p317 = scmp.eq.s32.totalorder %s36, 1
      %p318 = por %p316, %p317
      %p319 = scmp.ne.s32.totalorder %s310, %s311
      %p320 = scmp.eq.s32.totalorder %s36, 0
      %p321 = por %p319, %p320
      %p322 = scmp.ne.s32.totalorder %s310, %s311
      %p323 = scmp.eq.s32.totalorder %s37, 1
      %p324 = por %p322, %p323
      %p326 = scmp.ne.s32.totalorder %s311, %s325
      %p327 = scmp.eq.s32.totalorder %s37, 0
      %p328 = por %p326, %p327
      %s329 = ssub.s32 %s38, %s50
      %s330 = ssub.s32 %s39, %s46
      %s331 = sor.u32 %s329, %s330
      %p332 = scmp.eq.s32.totalorder %s331, 0
      %s334 = sadd.s32 %s333, 1
      %s335 = scalar_select %p332, %s333, %s334
      %p338 = pneg %p332
      %p339 = scmp.eq.s32.totalorder %s31, 1
      %p340 = por %p338, %p339
      %p341 = scmp.ne.s32.totalorder %s333, %s336
      %p342 = scmp.eq.s32.totalorder %s31, 0
      %p343 = por %p341, %p342
      %p344 = scmp.ne.s32.totalorder %s333, %s336
      %p345 = scmp.eq.s32.totalorder %s36, 1
      %p346 = por %p344, %p345
      %p347 = scmp.ne.s32.totalorder %s336, %s337
      %p348 = scmp.eq.s32.totalorder %s36, 0
      %p349 = por %p347, %p348
      %p350 = scmp.ne.s32.totalorder %s336, %s337
      %p351 = scmp.eq.s32.totalorder %s37, 1
      %p352 = por %p350, %p351
      %p354 = scmp.ne.s32.totalorder %s337, %s353
      %p355 = scmp.eq.s32.totalorder %s37, 0
      %p356 = por %p354, %p355
      %p357 = scmp.le.s32.totalorder 1, %s31
      %p358 = scmp.lt.s32.totalorder %s31, 3
      %p359 = pnand %p357, %p358
      %p360 = pneg %p359
      // Predicated region
      $region9: #{tpu_custom_call.1} parent=5 // pred_check
        _
      $region10: #{tpu_custom_call.1} parent=5 // pred_check_branch
        %362 = sbr.rel (%p359) target = $region12
      $region11: #{tpu_custom_call.1} parent=5 // pred_region
        %s363 = ssub.s32 %s31, 1
        // Predicated region
        $region13: #{tpu_custom_call.1} parent=11 // pred_check
          %p364 = pneg %p90
        $region14: #{tpu_custom_call.1} parent=11 // pred_check_branch
          %366 = sbr.rel (%p364) target = $region16
        $region15: #{tpu_custom_call.1} parent=11 // pred_region
          %s368 = ssub.s32 3072, 3072
          %369 = vsyncadd [#allocation10], %s368
          %s370 = sshll.u32 [#allocation9], 4
          %s371 = int_to_ptr.vmem [resolvable:$true] %s370
          %376 = dma.hbm_to_vmem [thread:$0]  %s1, 3072, %s371, [#allocation10], 192, 192, 12
        $region16: #{tpu_custom_call.1} parent=11 // pred_fallthru
          _
        // Predicated region
        $region17: #{tpu_custom_call.1} parent=11 // pred_check
          %p377 = pneg %p111
        $region18: #{tpu_custom_call.1} parent=11 // pred_check_branch
          %379 = sbr.rel (%p377) target = $region20
        $region19: #{tpu_custom_call.1} parent=11 // pred_region
          %s381 = ssub.s32 48, 48
          %382 = vsyncadd [#allocation10], %s381
          %s384 = sshll.u32 [#allocation11], 4
          %s385 = int_to_ptr.vmem [resolvable:$true] %s384
          %387 = dma.hbm_to_vmem [thread:$0]  %s2, 48, %s385, [#allocation10]
        $region20: #{tpu_custom_call.1} parent=11 // pred_fallthru
          _
        // Predicated region
        $region21: #{tpu_custom_call.1} parent=11 // pred_check
          %p388 = pneg %p132
        $region22: #{tpu_custom_call.1} parent=11 // pred_check_branch
          %390 = sbr.rel (%p388) target = $region24
        $region23: #{tpu_custom_call.1} parent=11 // pred_region
          %s392 = ssub.s32 1024, 1024
          %393 = vsyncadd [#allocation13], %s392
          %s394 = sshll.u32 [#allocation12], 4
          %s395 = int_to_ptr.vmem [resolvable:$true] %s394
          %400 = dma.hbm_to_vmem [thread:$0]  %s3, 1024, %s395, [#allocation13], 64, 64, 4
        $region24: #{tpu_custom_call.1} parent=11 // pred_fallthru
          _
        // Predicated region
        $region25: #{tpu_custom_call.1} parent=11 // pred_check
          %p401 = pneg %p153
        $region26: #{tpu_custom_call.1} parent=11 // pred_check_branch
          %403 = sbr.rel (%p401) target = $region28
        $region27: #{tpu_custom_call.1} parent=11 // pred_region
          %s405 = ssub.s32 16, 16
          %406 = vsyncadd [#allocation13], %s405
          %s408 = sshll.u32 [#allocation14], 4
          %s409 = int_to_ptr.vmem [resolvable:$true] %s408
          %411 = dma.hbm_to_vmem [thread:$0]  %s4, 16, %s409, [#allocation13]
        $region28: #{tpu_custom_call.1} parent=11 // pred_fallthru
          _
        // Predicated region
        $region29: #{tpu_custom_call.1} parent=11 // pred_check
          %p412 = pneg %p174
        $region30: #{tpu_custom_call.1} parent=11 // pred_check_branch
          %414 = sbr.rel (%p412) target = $region32
        $region31: #{tpu_custom_call.1} parent=11 // pred_region
          %s416 = ssub.s32 16, 16
          %417 = vsyncadd [#allocation16], %s416
          %s419 = sshll.u32 [#allocation15], 4
          %s420 = int_to_ptr.vmem [resolvable:$true] %s419
          %422 = dma.hbm_to_vmem [thread:$0]  %s5, 16, %s420, [#allocation16]
        $region32: #{tpu_custom_call.1} parent=11 // pred_fallthru
          _
        // Predicated region
        $region33: #{tpu_custom_call.1} parent=11 // pred_check
          %p423 = pneg %p195
        $region34: #{tpu_custom_call.1} parent=11 // pred_check_branch
          %425 = sbr.rel (%p423) target = $region36
        $region35: #{tpu_custom_call.1} parent=11 // pred_region
          %s427 = ssub.s32 16, 16
          %428 = vsyncadd [#allocation16], %s427
          %s430 = sshll.u32 [#allocation17], 4
          %s431 = int_to_ptr.vmem [resolvable:$true] %s430
          %433 = dma.hbm_to_vmem [thread:$0]  %s6, 16, %s431, [#allocation16]
        $region36: #{tpu_custom_call.1} parent=11 // pred_fallthru
          _
        // Predicated region
        $region37: #{tpu_custom_call.1} parent=11 // pred_check
          %p434 = pneg %p216
        $region38: #{tpu_custom_call.1} parent=11 // pred_check_branch
          %436 = sbr.rel (%p434) target = $region40
        $region39: #{tpu_custom_call.1} parent=11 // pred_region
          %s438 = ssub.s32 1024, 1024
          %439 = vsyncadd [#allocation19], %s438
          %s440 = sshll.u32 [#allocation18], 4
          %s441 = int_to_ptr.vmem [resolvable:$true] %s440
          %446 = dma.hbm_to_vmem [thread:$0]  %s7, 1024, %s441, [#allocation19], 64, 64, 4
        $region40: #{tpu_custom_call.1} parent=11 // pred_fallthru
          _
        // Predicated region
        $region41: #{tpu_custom_call.1} parent=11 // pred_check
          %p447 = pneg %p237
        $region42: #{tpu_custom_call.1} parent=11 // pred_check_branch
          %449 = sbr.rel (%p447) target = $region44
        $region43: #{tpu_custom_call.1} parent=11 // pred_region
          %s451 = ssub.s32 16, 16
          %452 = vsyncadd [#allocation19], %s451
          %s454 = sshll.u32 [#allocation20], 4
          %s455 = int_to_ptr.vmem [resolvable:$true] %s454
          %457 = dma.hbm_to_vmem [thread:$0]  %s8, 16, %s455, [#allocation19]
        $region44: #{tpu_custom_call.1} parent=11 // pred_fallthru
          _
        // Predicated region
        $region45: #{tpu_custom_call.1} parent=11 // pred_check
          %p458 = pneg %p258
        $region46: #{tpu_custom_call.1} parent=11 // pred_check_branch
          %460 = sbr.rel (%p458) target = $region48
        $region47: #{tpu_custom_call.1} parent=11 // pred_region
          %s462 = ssub.s32 1024, 1024
          %463 = vsyncadd [#allocation22], %s462
          %s464 = sshll.u32 [#allocation21], 4
          %s465 = int_to_ptr.vmem [resolvable:$true] %s464
          %470 = dma.hbm_to_vmem [thread:$0]  %s9, 1024, %s465, [#allocation22], 64, 64, 4
        $region48: #{tpu_custom_call.1} parent=11 // pred_fallthru
          _
        // Predicated region
        $region49: #{tpu_custom_call.1} parent=11 // pred_check
          %p471 = pneg %p279
        $region50: #{tpu_custom_call.1} parent=11 // pred_check_branch
          %473 = sbr.rel (%p471) target = $region52
        $region51: #{tpu_custom_call.1} parent=11 // pred_region
          %s475 = ssub.s32 16, 16
          %476 = vsyncadd [#allocation22], %s475
          %s478 = sshll.u32 [#allocation23], 4
          %s479 = int_to_ptr.vmem [resolvable:$true] %s478
          %481 = dma.hbm_to_vmem [thread:$0]  %s10, 16, %s479, [#allocation22]
        $region52: #{tpu_custom_call.1} parent=11 // pred_fallthru
          _
        // Predicated region
        $region53: #{tpu_custom_call.1} parent=11 // pred_check
          %p482 = pneg %p300
        $region54: #{tpu_custom_call.1} parent=11 // pred_check_branch
          %484 = sbr.rel (%p482) target = $region56
        $region55: #{tpu_custom_call.1} parent=11 // pred_region
          %s486 = ssub.s32 16, 16
          %487 = vsyncadd [#allocation25], %s486
          %s489 = sshll.u32 [#allocation24], 4
          %s490 = int_to_ptr.vmem [resolvable:$true] %s489
          %492 = dma.hbm_to_vmem [thread:$0]  %s11, 16, %s490, [#allocation25]
        $region56: #{tpu_custom_call.1} parent=11 // pred_fallthru
          _
        // Predicated region
        $region57: #{tpu_custom_call.1} parent=11 // pred_check
          %p493 = pneg %p321
        $region58: #{tpu_custom_call.1} parent=11 // pred_check_branch
          %495 = sbr.rel (%p493) target = $region60
        $region59: #{tpu_custom_call.1} parent=11 // pred_region
          %s497 = ssub.s32 16, 16
          %498 = vsyncadd [#allocation25], %s497
          %s500 = sshll.u32 [#allocation26], 4
          %s501 = int_to_ptr.vmem [resolvable:$true] %s500
          %503 = dma.hbm_to_vmem [thread:$0]  %s12, 16, %s501, [#allocation25]
        $region60: #{tpu_custom_call.1} parent=11 // pred_fallthru
          _
      $region12: #{tpu_custom_call.1} parent=5 // pred_fallthru
        _
      %p504 = scmp.lt.s32.totalorder %s31, 2
      // Predicated region
      $region61: #{tpu_custom_call.1} parent=5 // pred_check
        %p505 = pneg %p504
      $region62: #{tpu_custom_call.1} parent=5 // pred_check_branch
        %507 = sbr.rel (%p505) target = $region64
      $region63: #{tpu_custom_call.1} parent=5 // pred_region
        // Predicated region
        $region65: #{tpu_custom_call.1} parent=63 // pred_check
          %p508 = pneg %p63
        $region66: #{tpu_custom_call.1} parent=63 // pred_check_branch
          %510 = sbr.rel (%p508) target = $region68
        $region67: #{tpu_custom_call.1} parent=63 // pred_region
          %s511 = sand.u32 %s53, 1
          %s512 = scalar_lea.sflag [#allocation7], %s511
          %s513 = sand.u32 %s53, 1
          %s514 = smul.addr %s513, 16
          %s515 = scalar_lea.vmem [#allocation6], %s514
          %s517 = ssub.s32 256, 256
          %518 = vsyncadd %s512, %s517
          %s519 = smul.addr %s38, 2
          %s520 = smul.addr %s519, 128
          %s521 = scalar_lea.hbm %s0, %s520
          %s522 = sshll.u32 %s515, 4
          %s523 = int_to_ptr.vmem [resolvable:$true] %s522
          %528 = dma.hbm_to_vmem [thread:$0]  %s521, 256, %s523, %s512, 128, 128, 8
        $region68: #{tpu_custom_call.1} parent=63 // pred_fallthru
          _
      $region64: #{tpu_custom_call.1} parent=5 // pred_fallthru
        _
      %p529 = scmp.le.s32.totalorder 1, %s31
      %p530 = scmp.lt.s32.totalorder %s31, 3
      %p531 = pnand %p529, %p530
      %p532 = pneg %p531
      // Predicated region
      $region69: #{tpu_custom_call.1} parent=5 // pred_check
        _
      $region70: #{tpu_custom_call.1} parent=5 // pred_check_branch
        %534 = sbr.rel (%p531) target = $region72
      $region71: #{tpu_custom_call.1} parent=5 // pred_region
        %s535 = ssub.s32 %s31, 1
        %s536 = sand.u32 %s56, 1
        %s537 = scalar_lea.sflag [#allocation7], %s536
        %s538 = sand.u32 %s56, 1
        %s539 = smul.addr %s538, 16
        %s540 = scalar_lea.vmem [#allocation6], %s539
        // Predicated region
        $region73: #{tpu_custom_call.1} parent=71 // pred_check
          %p541 = pneg %p69
        $region74: #{tpu_custom_call.1} parent=71 // pred_check_branch
          %543 = sbr.rel (%p541) target = $region76
        $region75: #{tpu_custom_call.1} parent=71 // pred_region
          %544 = dma.done %s537, 256
        $region76: #{tpu_custom_call.1} parent=71 // pred_fallthru
          _
        // Predicated region
        $region77: #{tpu_custom_call.1} parent=71 // pred_check
          %p545 = pneg %p90
        $region78: #{tpu_custom_call.1} parent=71 // pred_check_branch
          %547 = sbr.rel (%p545) target = $region80
        $region79: #{tpu_custom_call.1} parent=71 // pred_region
          %548 = dma.done [#allocation10], 3072
        $region80: #{tpu_custom_call.1} parent=71 // pred_fallthru
          _
        // Predicated region
        $region81: #{tpu_custom_call.1} parent=71 // pred_check
          %p549 = pneg %p111
        $region82: #{tpu_custom_call.1} parent=71 // pred_check_branch
          %551 = sbr.rel (%p549) target = $region84
        $region83: #{tpu_custom_call.1} parent=71 // pred_region
          %552 = dma.done [#allocation10], 48
        $region84: #{tpu_custom_call.1} parent=71 // pred_fallthru
          _
        // Predicated region
        $region85: #{tpu_custom_call.1} parent=71 // pred_check
          %p553 = pneg %p132
        $region86: #{tpu_custom_call.1} parent=71 // pred_check_branch
          %555 = sbr.rel (%p553) target = $region88
        $region87: #{tpu_custom_call.1} parent=71 // pred_region
          %556 = dma.done [#allocation13], 1024
        $region88: #{tpu_custom_call.1} parent=71 // pred_fallthru
          _
        // Predicated region
        $region89: #{tpu_custom_call.1} parent=71 // pred_check
          %p557 = pneg %p153
        $region90: #{tpu_custom_call.1} parent=71 // pred_check_branch
          %559 = sbr.rel (%p557) target = $region92
        $region91: #{tpu_custom_call.1} parent=71 // pred_region
          %560 = dma.done [#allocation13], 16
        $region92: #{tpu_custom_call.1} parent=71 // pred_fallthru
          _
        // Predicated region
        $region93: #{tpu_custom_call.1} parent=71 // pred_check
          %p561 = pneg %p174
        $region94: #{tpu_custom_call.1} parent=71 // pred_check_branch
          %563 = sbr.rel (%p561) target = $region96
        $region95: #{tpu_custom_call.1} parent=71 // pred_region
          %564 = dma.done [#allocation16], 16
        $region96: #{tpu_custom_call.1} parent=71 // pred_fallthru
          _
        // Predicated region
        $region97: #{tpu_custom_call.1} parent=71 // pred_check
          %p565 = pneg %p195
        $region98: #{tpu_custom_call.1} parent=71 // pred_check_branch
          %567 = sbr.rel (%p565) target = $region100
        $region99: #{tpu_custom_call.1} parent=71 // pred_region
          %568 = dma.done [#allocation16], 16
        $region100: #{tpu_custom_call.1} parent=71 // pred_fallthru
          _
        // Predicated region
        $region101: #{tpu_custom_call.1} parent=71 // pred_check
          %p569 = pneg %p216
        $region102: #{tpu_custom_call.1} parent=71 // pred_check_branch
          %571 = sbr.rel (%p569) target = $region104
        $region103: #{tpu_custom_call.1} parent=71 // pred_region
          %572 = dma.done [#allocation19], 1024
        $region104: #{tpu_custom_call.1} parent=71 // pred_fallthru
          _
        // Predicated region
        $region105: #{tpu_custom_call.1} parent=71 // pred_check
          %p573 = pneg %p237
        $region106: #{tpu_custom_call.1} parent=71 // pred_check_branch
          %575 = sbr.rel (%p573) target = $region108
        $region107: #{tpu_custom_call.1} parent=71 // pred_region
          %576 = dma.done [#allocation19], 16
        $region108: #{tpu_custom_call.1} parent=71 // pred_fallthru
          _
        // Predicated region
        $region109: #{tpu_custom_call.1} parent=71 // pred_check
          %p577 = pneg %p258
        $region110: #{tpu_custom_call.1} parent=71 // pred_check_branch
          %579 = sbr.rel (%p577) target = $region112
        $region111: #{tpu_custom_call.1} parent=71 // pred_region
          %580 = dma.done [#allocation22], 1024
        $region112: #{tpu_custom_call.1} parent=71 // pred_fallthru
          _
        // Predicated region
        $region113: #{tpu_custom_call.1} parent=71 // pred_check
          %p581 = pneg %p279
        $region114: #{tpu_custom_call.1} parent=71 // pred_check_branch
          %583 = sbr.rel (%p581) target = $region116
        $region115: #{tpu_custom_call.1} parent=71 // pred_region
          %584 = dma.done [#allocation22], 16
        $region116: #{tpu_custom_call.1} parent=71 // pred_fallthru
          _
        // Predicated region
        $region117: #{tpu_custom_call.1} parent=71 // pred_check
          %p585 = pneg %p300
        $region118: #{tpu_custom_call.1} parent=71 // pred_check_branch
          %587 = sbr.rel (%p585) target = $region120
        $region119: #{tpu_custom_call.1} parent=71 // pred_region
          %588 = dma.done [#allocation25], 16
        $region120: #{tpu_custom_call.1} parent=71 // pred_fallthru
          _
        // Predicated region
        $region121: #{tpu_custom_call.1} parent=71 // pred_check
          %p589 = pneg %p321
        $region122: #{tpu_custom_call.1} parent=71 // pred_check_branch
          %591 = sbr.rel (%p589) target = $region124
        $region123: #{tpu_custom_call.1} parent=71 // pred_region
          %592 = dma.done [#allocation25], 16
        $region124: #{tpu_custom_call.1} parent=71 // pred_fallthru
          _
        %s593 = sand.u32 %s56, 1
        %s594 = scalar_lea.sflag [#allocation7], %s593
        %s595 = sand.u32 %s56, 1
        %s596 = smul.addr %s595, 16
        %s597 = scalar_lea.vmem [#allocation6], %s596
        %p598 = pneg %p69
        %p599 = pneg %p66
        %p600 = pneg %p90
        %p601 = pneg %p87
        %p602 = pneg %p111
        %p603 = pneg %p108
        %p604 = pneg %p132
        %p605 = pneg %p129
        %p606 = pneg %p153
        %p607 = pneg %p150
        %p608 = pneg %p174
        %p609 = pneg %p171
        %p610 = pneg %p195
        %p611 = pneg %p192
        %p612 = pneg %p216
        %p613 = pneg %p213
        %p614 = pneg %p237
        %p615 = pneg %p234
        %p616 = pneg %p258
        %p617 = pneg %p255
        %p618 = pneg %p279
        %p619 = pneg %p276
        %p620 = pneg %p300
        %p621 = pneg %p297
        %p622 = pneg %p321
        %p623 = pneg %p318
        %p624 = pneg %p349
        %p625 = pneg %p346
        %s626 = sand.u32 %s336, 1
        %s627 = scalar_lea.sflag [#allocation8], %s626
        %s628 = sand.u32 %s336, 1
        %s629 = smul.addr %s628, 16
        %s630 = scalar_lea.vmem [#allocation27], %s629
        %s631 = smul.u32 2, %s41
        %p633 = scmp.eq.s32.totalorder %s41, 0
        // Predicated region
        $region125: #{tpu_custom_call.1} parent=71 // pred_check
          %p634 = pneg %p633
        $region126: #{tpu_custom_call.1} parent=71 // pred_check_branch
          %636 = sbr.rel (%p634) target = $region128
        $region127: #{tpu_custom_call.1} parent=71 // pred_region
          %v637 = vld [vmem:[%s540] sm:$0xff]
          %v638 = vld [vmem:[%s540 + $0x8] sm:$0xff]
          %v639 = vpack.c.bf16 %v638, %v637
          %v640 = vld [vmem:[#allocation9] sm:$0xff]
          %v641 = vld [vmem:[#allocation9 + $0x8] sm:$0xf]
          %v642 = vld [vmem:[#allocation9 + $0xc] sm:$0xff]
          %v643 = vld [vmem:[#allocation9 + $0x14] sm:$0xf]
          %v644 = vld [vmem:[#allocation9 + $0x18] sm:$0xff]
          %v645 = vld [vmem:[#allocation9 + $0x20] sm:$0xf]
          %v646 = vld [vmem:[#allocation9 + $0x24] sm:$0xff]
          %v647 = vld [vmem:[#allocation9 + $0x2c] sm:$0xf]
          %v648 = vld [vmem:[#allocation9 + $0x30] sm:$0xff]
          %v649 = vld [vmem:[#allocation9 + $0x38] sm:$0xf]
          %v650 = vld [vmem:[#allocation9 + $0x3c] sm:$0xff]
          %v651 = vld [vmem:[#allocation9 + $0x44] sm:$0xf]
          %v652 = vld [vmem:[#allocation9 + $0x48] sm:$0xff]
          %v653 = vld [vmem:[#allocation9 + $0x50] sm:$0xf]
          %v654 = vld [vmem:[#allocation9 + $0x54] sm:$0xff]
          %v655 = vld [vmem:[#allocation9 + $0x5c] sm:$0xf]
          %v656 = vld [vmem:[#allocation9 + $0x60] sm:$0xff]
          %v657 = vld [vmem:[#allocation9 + $0x68] sm:$0xf]
          %v658 = vld [vmem:[#allocation9 + $0x6c] sm:$0xff]
          %v659 = vld [vmem:[#allocation9 + $0x74] sm:$0xf]
          %v660 = vld [vmem:[#allocation9 + $0x78] sm:$0xff]
          %v661 = vld [vmem:[#allocation9 + $0x80] sm:$0xf]
          %v662 = vld [vmem:[#allocation9 + $0x84] sm:$0xff]
          %v663 = vld [vmem:[#allocation9 + $0x8c] sm:$0xf]
          %v664 = vld [vmem:[#allocation9 + $0x90] sm:$0xff]
          %v665 = vld [vmem:[#allocation9 + $0x98] sm:$0xf]
          %v666 = vld [vmem:[#allocation9 + $0x9c] sm:$0xff]
          %v667 = vld [vmem:[#allocation9 + $0xa4] sm:$0xf]
          %v668 = vld [vmem:[#allocation9 + $0xa8] sm:$0xff]
          %v669 = vld [vmem:[#allocation9 + $0xb0] sm:$0xf]
          %v670 = vld [vmem:[#allocation9 + $0xb4] sm:$0xff]
          %v671 = vld [vmem:[#allocation9 + $0xbc] sm:$0xf]
          %v672 = vld [vmem:[#allocation11] sm:$0x7]
          %v674 = vlaneseq
          %v675 = vshrl.u32 %v674, 7
          %v676 = vsub.s32 0, %v675
          %v677 = vrot.slane %v672, %v676
          %v678 = vlaneseq
          %v679 = vshrl.u32 %v678, 7
          %v680 = vsub.s32 1, %v679
          %v681 = vrot.slane %v672, %v680
          %v682 = vlaneseq
          %v683 = vshrl.u32 %v682, 7
          %v684 = vsub.s32 2, %v683
          %v685 = vrot.slane %v672, %v684
          %v721 = vunpack.c.l.b16 %v640
          %v722 = vunpack.c.h.b16 %v640
          %v723 = vunpack.c.l.b16 %v641
          %v724 = vunpack.c.l.b16 %v642
          %v725 = vunpack.c.h.b16 %v642
          %v726 = vunpack.c.l.b16 %v643
          %v727 = vunpack.c.l.b16 %v644
          %v728 = vunpack.c.h.b16 %v644
          %v729 = vunpack.c.l.b16 %v645
          %v730 = vunpack.c.l.b16 %v646
          %v731 = vunpack.c.h.b16 %v646
          %v732 = vunpack.c.l.b16 %v647
          %v733 = vunpack.c.l.b16 %v648
          %v734 = vunpack.c.h.b16 %v648
          %v735 = vunpack.c.l.b16 %v649
          %v736 = vunpack.c.l.b16 %v650
          %v737 = vunpack.c.h.b16 %v650
          %v738 = vunpack.c.l.b16 %v651
          %v739 = vunpack.c.l.b16 %v652
          %v740 = vunpack.c.h.b16 %v652
          %v741 = vunpack.c.l.b16 %v653
          %v742 = vunpack.c.l.b16 %v654
          %v743 = vunpack.c.h.b16 %v654
          %v744 = vunpack.c.l.b16 %v655
          %v745 = vunpack.c.l.b16 %v656
          %v746 = vunpack.c.h.b16 %v656
          %v747 = vunpack.c.l.b16 %v657
          %v748 = vunpack.c.l.b16 %v658
          %v749 = vunpack.c.h.b16 %v658
          %v750 = vunpack.c.l.b16 %v659
          %v751 = vunpack.c.l.b16 %v660
          %v752 = vunpack.c.h.b16 %v660
          %v753 = vunpack.c.l.b16 %v661
          %v754 = vunpack.c.l.b16 %v662
          %v755 = vunpack.c.h.b16 %v662
          %v756 = vunpack.c.l.b16 %v663
          %v757 = vunpack.c.l.b16 %v664
          %v758 = vunpack.c.h.b16 %v664
          %v759 = vunpack.c.l.b16 %v665
          %v760 = vunpack.c.l.b16 %v666
          %v761 = vunpack.c.h.b16 %v666
          %v762 = vunpack.c.l.b16 %v667
          %v763 = vunpack.c.l.b16 %v668
          %v764 = vunpack.c.h.b16 %v668
          %v765 = vunpack.c.l.b16 %v669
          %v766 = vunpack.c.l.b16 %v670
          %v767 = vunpack.c.h.b16 %v670
          %v768 = vunpack.c.l.b16 %v671
          %v769 = vpack.c.b16 %v724, %v721
          %v770 = vpack.c.b16 %v725, %v722
          %v771 = vpack.c.b16 %v726, %v723
          %v772 = vpack.c.b16 %v730, %v727
          %v773 = vpack.c.b16 %v731, %v728
          %v774 = vpack.c.b16 %v732, %v729
          %v775 = vpack.c.b16 %v736, %v733
          %v776 = vpack.c.b16 %v737, %v734
          %v777 = vpack.c.b16 %v738, %v735
          %v778 = vpack.c.b16 %v742, %v739
          %v779 = vpack.c.b16 %v743, %v740
          %v780 = vpack.c.b16 %v744, %v741
          %v781 = vpack.c.b16 %v748, %v745
          %v782 = vpack.c.b16 %v749, %v746
          %v783 = vpack.c.b16 %v750, %v747
          %v784 = vpack.c.b16 %v754, %v751
          %v785 = vpack.c.b16 %v755, %v752
          %v786 = vpack.c.b16 %v756, %v753
          %v787 = vpack.c.b16 %v760, %v757
          %v788 = vpack.c.b16 %v761, %v758
          %v789 = vpack.c.b16 %v762, %v759
          %v790 = vpack.c.b16 %v766, %v763
          %v791 = vpack.c.b16 %v767, %v764
          %v792 = vpack.c.b16 %v768, %v765
          %817 = vmatprep.subr.bf16.mxu0 %v770
          %818 = vmatpush1.bf16.msra.mxu0 %v769
          %819 = vmatprep.subr.bf16.mxu0 %v773
          %820 = vmatpush1.bf16.msra.mxu0 %v772
          %821 = vmatprep.subr.bf16.mxu0 %v776
          %822 = vmatpush1.bf16.msra.mxu0 %v775
          %823 = vmatprep.subr.bf16.mxu0 %v779
          %824 = vmatpush1.bf16.msra.mxu0 %v778
          %825 = vmatprep.subr.bf16.mxu0 %v782
          %826 = vmatpush1.bf16.msra.mxu0 %v781
          %827 = vmatprep.subr.bf16.mxu0 %v785
          %828 = vmatpush1.bf16.msra.mxu0 %v784
          %829 = vmatprep.subr.bf16.mxu0 %v788
          %830 = vmatpush1.bf16.msra.mxu0 %v787
          %831 = vmatprep.subr.bf16.mxu0 %v791
          %832 = vmatpush1.bf16.msra.mxu0 %v790
          %833 = vmatprep.subr.bf16.mxu0 0
          %834 = vmatpush1.bf16.msra.mxu0 0
          %835 = vmatprep.subr.bf16.mxu0 0
          %836 = vmatpush1.bf16.msra.mxu0 0
          %837 = vmatprep.subr.bf16.mxu0 0
          %838 = vmatpush1.bf16.msra.mxu0 0
          %839 = vmatprep.subr.bf16.mxu0 0
          %840 = vmatpush1.bf16.msra.mxu0 0
          %841 = vmatprep.subr.bf16.mxu0 0
          %842 = vmatpush1.bf16.msra.mxu0 0
          %843 = vmatprep.subr.bf16.mxu0 0
          %844 = vmatpush1.bf16.msra.mxu0 0
          %845 = vmatprep.subr.bf16.mxu0 0
          %846 = vmatpush1.bf16.msra.mxu0 0
          %847 = vmatprep.subr.bf16.mxu0 0
          %848 = vmatpush1.bf16.msra.mxu0 0
          %849 = vmatprep.mubr.bf16.mxu0 0
          %850 = vmatmul.mubr.bf16.gmra.mrb[0].mxu0 %v639
          %v851 = vpop.f32.mrb[0].mxu0
          %v852 = vadd.f32 %v677, %v851
          %v853 = vpop.f32.mrb[0].mxu0
          %v854 = vadd.f32 %v681, %v853
          %v855 = vpop.f32.mrb[0].mxu0
          %v856 = vadd.f32 %v677, %v855
          %v857 = vpop.f32.mrb[0].mxu0
          %v858 = vadd.f32 %v681, %v857
          %859 = vdwg.mxu0
          %860 = vmatprep.subr.bf16.mxu0 0
          %861 = vmatpush1.bf16.msra.mxu0 %v771
          %862 = vmatprep.subr.bf16.mxu0 0
          %863 = vmatpush1.bf16.msra.mxu0 %v774
          %864 = vmatprep.subr.bf16.mxu0 0
          %865 = vmatpush1.bf16.msra.mxu0 %v777
          %866 = vmatprep.subr.bf16.mxu0 0
          %867 = vmatpush1.bf16.msra.mxu0 %v780
          %868 = vmatprep.subr.bf16.mxu0 0
          %869 = vmatpush1.bf16.msra.mxu0 %v783
          %870 = vmatprep.subr.bf16.mxu0 0
          %871 = vmatpush1.bf16.msra.mxu0 %v786
          %872 = vmatprep.subr.bf16.mxu0 0
          %873 = vmatpush1.bf16.msra.mxu0 %v789
          %874 = vmatprep.subr.bf16.mxu0 0
          %875 = vmatpush1.bf16.msra.mxu0 %v792
          %876 = vmatprep.subr.bf16.mxu0 0
          %877 = vmatpush1.bf16.msra.mxu0 0
          %878 = vmatprep.subr.bf16.mxu0 0
          %879 = vmatpush1.bf16.msra.mxu0 0
          %880 = vmatprep.subr.bf16.mxu0 0
          %881 = vmatpush1.bf16.msra.mxu0 0
          %882 = vmatprep.subr.bf16.mxu0 0
          %883 = vmatpush1.bf16.msra.mxu0 0
          %884 = vmatprep.subr.bf16.mxu0 0
          %885 = vmatpush1.bf16.msra.mxu0 0
          %886 = vmatprep.subr.bf16.mxu0 0
          %887 = vmatpush1.bf16.msra.mxu0 0
          %888 = vmatprep.subr.bf16.mxu0 0
          %889 = vmatpush1.bf16.msra.mxu0 0
          %890 = vmatprep.subr.bf16.mxu0 0
          %891 = vmatpush1.bf16.msra.mxu0 0
          %892 = vmatprep.mubr.bf16.mxu0 0
          %893 = vmatmul.mubr.bf16.gmra.mrb[0].mxu0 %v639
          %v894 = vpop.f32.mrb[0].mxu0
          %v895 = vadd.f32 %v685, %v894
          %v896 = vpop.f32.mrb[0].mxu0
          %v897 = vpop.f32.mrb[0].mxu0
          %v898 = vadd.f32 %v685, %v897
          %v899 = vpop.f32.mrb[0].mxu0
          %900 = vdwg.mxu0
          %v901 = vpack.c.bf16 %v856, %v852
          %902 = vst [vmem:[#allocation2] sm:$0xff] %v901
          %903 = vxpose.xlu0.b32.start [1/16] %v854, 128
          %904 = vxpose.xlu0.b32.cont [2/16] %v858, 128
          %905 = vxpose.xlu0.b32.cont [3/16] 0.0, 128
          %906 = vxpose.xlu0.b32.cont [4/16] 0.0, 128
          %907 = vxpose.xlu0.b32.cont [5/16] 0.0, 128
          %908 = vxpose.xlu0.b32.cont [6/16] 0.0, 128
          %909 = vxpose.xlu0.b32.cont [7/16] 0.0, 128
          %910 = vxpose.xlu0.b32.cont [8/16] 0.0, 128
          %911 = vxpose.xlu0.b32.cont [9/16] 0.0, 128
          %912 = vxpose.xlu0.b32.cont [10/16] 0.0, 128
          %913 = vxpose.xlu0.b32.cont [11/16] 0.0, 128
          %914 = vxpose.xlu0.b32.cont [12/16] 0.0, 128
          %915 = vxpose.xlu0.b32.cont [13/16] 0.0, 128
          %916 = vxpose.xlu0.b32.cont [14/16] 0.0, 128
          %917 = vxpose.xlu0.b32.cont [15/16] 0.0, 128
          %918 = vxpose.xlu0.b32.end [16/16] 0.0, 128
          %v919 = vpop.trf.xlu0
          %v920 = vpop.trf.xlu0
          %v921 = vpop.trf.xlu0
          %v922 = vpop.trf.xlu0
          %v923 = vpop.trf.xlu0
          %v924 = vpop.trf.xlu0
          %v925 = vpop.trf.xlu0
          %v926 = vpop.trf.xlu0
          %v927 = vpop.trf.xlu0
          %v928 = vpop.trf.xlu0
          %v929 = vpop.trf.xlu0
          %v930 = vpop.trf.xlu0
          %v931 = vpop.trf.xlu0
          %v932 = vpop.trf.xlu0
          %v933 = vpop.trf.xlu0
          %v934 = vpop.trf.xlu0
          %v935 = vpack.c.bf16 %v920, %v919
          %v936 = vpack.c.bf16 %v922, %v921
          %v937 = vpack.c.bf16 %v924, %v923
          %v938 = vpack.c.bf16 %v926, %v925
          %v939 = vpack.c.bf16 %v928, %v927
          %v940 = vpack.c.bf16 %v930, %v929
          %v941 = vpack.c.bf16 %v932, %v931
          %v942 = vpack.c.bf16 %v934, %v933
          %vm943 = vcmask 130048
          %944 = vst.msk [vmem:[#allocation3] sm:$0xff] %vm943, %v935
          %945 = vst.msk [vmem:[#allocation3 + $0x8] sm:$0xff] %vm943, %v936
          %946 = vst.msk [vmem:[#allocation3 + $0x10] sm:$0xff] %vm943, %v937
          %947 = vst.msk [vmem:[#allocation3 + $0x18] sm:$0xff] %vm943, %v938
          %948 = vst.msk [vmem:[#allocation3 + $0x20] sm:$0xff] %vm943, %v939
          %949 = vst.msk [vmem:[#allocation3 + $0x28] sm:$0xff] %vm943, %v940
          %950 = vst.msk [vmem:[#allocation3 + $0x30] sm:$0xff] %vm943, %v941
          %951 = vst.msk [vmem:[#allocation3 + $0x38] sm:$0xff] %vm943, %v942
          %v952 = vpack.c.bf16 %v898, %v895
          %953 = vst [vmem:[#allocation4] sm:$0xff] %v952
        $region128: #{tpu_custom_call.1} parent=71 // pred_fallthru
          _
        %s954 = smul.u32 %s41, 16
        %s955 = scalar_lea.vmem %s540, %s954 [#allocation6]
        %v956 = vld [vmem:[%s955] sm:$0xff]
        %v957 = vld [vmem:[%s955 + $0x8] sm:$0xff]
        %s958 = sshra.s32 %s954, 4
        %s959 = sand.u32 %s954, 15
        %s960 = smul.addr %s958, 8
        %s961 = scalar_lea.vmem [#allocation2], %s960
        %v962 = vld [vmem:[%s961] sm:$0xff]
        %v963 = vld [vmem:[#allocation3] sm:$0xff]
        %v964 = vld [vmem:[#allocation3 + $0x8] sm:$0xff]
        %vm965 = vcmask 261120
        %v967 = vsel %vm965, %v962, 0
        %969 = vmatprep.subr.bf16.mxu0 0
        %970 = vmatpush1.bf16.msra.mxu0 %v963
        %971 = vmatprep.subr.bf16.mxu0 0
        %972 = vmatpush1.bf16.msra.mxu0 %v964
        %973 = vmatprep.subr.bf16.mxu0 0
        %974 = vmatpush1.bf16.msra.mxu0 0
        %975 = vmatprep.subr.bf16.mxu0 0
        %976 = vmatpush1.bf16.msra.mxu0 0
        %977 = vmatprep.subr.bf16.mxu0 0
        %978 = vmatpush1.bf16.msra.mxu0 0
        %979 = vmatprep.subr.bf16.mxu0 0
        %980 = vmatpush1.bf16.msra.mxu0 0
        %981 = vmatprep.subr.bf16.mxu0 0
        %982 = vmatpush1.bf16.msra.mxu0 0
        %983 = vmatprep.subr.bf16.mxu0 0
        %984 = vmatpush1.bf16.msra.mxu0 0
        %985 = vmatprep.subr.bf16.mxu0 0
        %986 = vmatpush1.bf16.msra.mxu0 0
        %987 = vmatprep.subr.bf16.mxu0 0
        %988 = vmatpush1.bf16.msra.mxu0 0
        %989 = vmatprep.subr.bf16.mxu0 0
        %990 = vmatpush1.bf16.msra.mxu0 0
        %991 = vmatprep.subr.bf16.mxu0 0
        %992 = vmatpush1.bf16.msra.mxu0 0
        %993 = vmatprep.subr.bf16.mxu0 0
        %994 = vmatpush1.bf16.msra.mxu0 0
        %995 = vmatprep.subr.bf16.mxu0 0
        %996 = vmatpush1.bf16.msra.mxu0 0
        %997 = vmatprep.subr.bf16.mxu0 0
        %998 = vmatpush1.bf16.msra.mxu0 0
        %999 = vmatprep.subr.bf16.mxu0 0
        %1000 = vmatpush1.bf16.msra.mxu0 0
        %1001 = vmatprep.mubr.bf16.mxu0 0
        %1002 = vmatmul.mubr.bf16.gmra.mrb[0].mxu0 %v967
        %v1003 = vpop.f32.mrb[0].mxu0
        %v1004 = vadd.f32 0.0, %v1003
        %v1005 = vpop.f32.mrb[0].mxu0
        %v1006 = vpop.f32.mrb[0].mxu0
        %v1007 = vadd.f32 0.0, %v1006
        %v1008 = vpop.f32.mrb[0].mxu0
        %1009 = vdwg.mxu0
        %v1010 = vmul.f32 %v1004, 0.17677669
        %v1011 = vmul.f32 %v1007, 0.17677669
        %vm1012 = vcmask 130048
        %v1013 = vsel %vm1012, %v1010, -inf
        %1014 = vmax.xlane.f32.xlu0 %v1013
        %v1015 = vpop.xlane.xlu0 %1014
        %v1016 = vsel %vm1012, %v1011, -inf
        %1017 = vmax.xlane.f32.xlu0 %v1016
        %v1018 = vpop.xlane.xlu0 %1017
        %v1019 = vsub.f32 %v1010, %v1015
        %v1020 = vsub.f32 %v1011, %v1018
        %v1021 = vmul.f32 %v1019, 1.442695
        %v1022 = vpow.pop %v1021
        %v1023 = vmul.f32 %v1020, 1.442695
        %v1024 = vpow.pop %v1023
        %v1025 = vsel %vm1012, %v1022, 0.0
        %1026 = vadd.xlane.f32.xlu0 %v1025
        %v1027 = vpop.xlane.xlu0 %1026
        %v1028 = vsel %vm1012, %v1024, 0.0
        %1029 = vadd.xlane.f32.xlu0 %v1028
        %v1030 = vpop.xlane.xlu0 %1029
        %v1031 = vrcp.pop %v1027
        %v1032 = vrcp.pop %v1030
        %v1033 = vmul.f32 %v1022, %v1031
        %v1034 = vmul.f32 %v1024, %v1032
        %v1035 = vpack.c.bf16 %v1034, %v1033
        %v1036 = vld [vmem:[#allocation4] sm:$0xff]
        %v1038 = vsel %vm1012, %v1035, 0
        %1040 = vmatprep.subr.bf16.mxu0 0
        %1041 = vmatpush1.bf16.msra.mxu0 %v1036
        %1042 = vmatprep.subr.bf16.mxu0 0
        %1043 = vmatpush1.bf16.msra.mxu0 0
        %1044 = vmatprep.subr.bf16.mxu0 0
        %1045 = vmatpush1.bf16.msra.mxu0 0
        %1046 = vmatprep.subr.bf16.mxu0 0
        %1047 = vmatpush1.bf16.msra.mxu0 0
        %1048 = vmatprep.subr.bf16.mxu0 0
        %1049 = vmatpush1.bf16.msra.mxu0 0
        %1050 = vmatprep.subr.bf16.mxu0 0
        %1051 = vmatpush1.bf16.msra.mxu0 0
        %1052 = vmatprep.subr.bf16.mxu0 0
        %1053 = vmatpush1.bf16.msra.mxu0 0
        %1054 = vmatprep.subr.bf16.mxu0 0
        %1055 = vmatpush1.bf16.msra.mxu0 0
        %1056 = vmatprep.subr.bf16.mxu0 0
        %1057 = vmatpush1.bf16.msra.mxu0 0
        %1058 = vmatprep.subr.bf16.mxu0 0
        %1059 = vmatpush1.bf16.msra.mxu0 0
        %1060 = vmatprep.subr.bf16.mxu0 0
        %1061 = vmatpush1.bf16.msra.mxu0 0
        %1062 = vmatprep.subr.bf16.mxu0 0
        %1063 = vmatpush1.bf16.msra.mxu0 0
        %1064 = vmatprep.subr.bf16.mxu0 0
        %1065 = vmatpush1.bf16.msra.mxu0 0
        %1066 = vmatprep.subr.bf16.mxu0 0
        %1067 = vmatpush1.bf16.msra.mxu0 0
        %1068 = vmatprep.subr.bf16.mxu0 0
        %1069 = vmatpush1.bf16.msra.mxu0 0
        %1070 = vmatprep.subr.bf16.mxu0 0
        %1071 = vmatpush1.bf16.msra.mxu0 0
        %1072 = vmatprep.mubr.bf16.mxu0 0
        %1073 = vmatmul.mubr.bf16.gmra.mrb[0].mxu0 %v1038
        %v1074 = vpop.f32.mrb[0].mxu0
        %v1075 = vadd.f32 0.0, %v1074
        %v1076 = vpop.f32.mrb[0].mxu0
        %v1077 = vpop.f32.mrb[0].mxu0
        %v1078 = vadd.f32 0.0, %v1077
        %v1079 = vpop.f32.mrb[0].mxu0
        %1080 = vdwg.mxu0
        %v1081 = vpack.c.bf16 %v1078, %v1075
        %1082 = vst.msk [vmem:[#allocation5] sm:$0xff] %vm965, %v1081
        %v1083 = vld [vmem:[#allocation3 + $0x10] sm:$0xff]
        %v1084 = vld [vmem:[#allocation3 + $0x18] sm:$0xff]
        %1086 = vrot.lane.b32.xlu0 %v962, 96
        %v1087 = vpop.permute.xlu0 %1086
        %v1089 = vsel %vm965, %v1087, 0
        %1091 = vmatprep.subr.bf16.mxu0 0
        %1092 = vmatpush1.bf16.msra.mxu0 %v1083
        %1093 = vmatprep.subr.bf16.mxu0 0
        %1094 = vmatpush1.bf16.msra.mxu0 %v1084
        %1095 = vmatprep.subr.bf16.mxu0 0
        %1096 = vmatpush1.bf16.msra.mxu0 0
        %1097 = vmatprep.subr.bf16.mxu0 0
        %1098 = vmatpush1.bf16.msra.mxu0 0
        %1099 = vmatprep.subr.bf16.mxu0 0
        %1100 = vmatpush1.bf16.msra.mxu0 0
        %1101 = vmatprep.subr.bf16.mxu0 0
        %1102 = vmatpush1.bf16.msra.mxu0 0
        %1103 = vmatprep.subr.bf16.mxu0 0
        %1104 = vmatpush1.bf16.msra.mxu0 0
        %1105 = vmatprep.subr.bf16.mxu0 0
        %1106 = vmatpush1.bf16.msra.mxu0 0
        %1107 = vmatprep.subr.bf16.mxu0 0
        %1108 = vmatpush1.bf16.msra.mxu0 0
        %1109 = vmatprep.subr.bf16.mxu0 0
        %1110 = vmatpush1.bf16.msra.mxu0 0
        %1111 = vmatprep.subr.bf16.mxu0 0
        %1112 = vmatpush1.bf16.msra.mxu0 0
        %1113 = vmatprep.subr.bf16.mxu0 0
        %1114 = vmatpush1.bf16.msra.mxu0 0
        %1115 = vmatprep.subr.bf16.mxu0 0
        %1116 = vmatpush1.bf16.msra.mxu0 0
        %1117 = vmatprep.subr.bf16.mxu0 0
        %1118 = vmatpush1.bf16.msra.mxu0 0
        %1119 = vmatprep.subr.bf16.mxu0 0
        %1120 = vmatpush1.bf16.msra.mxu0 0
        %1121 = vmatprep.subr.bf16.mxu0 0
        %1122 = vmatpush1.bf16.msra.mxu0 0
        %1123 = vmatprep.mubr.bf16.mxu0 0
        %1124 = vmatmul.mubr.bf16.gmra.mrb[0].mxu0 %v1089
        %v1125 = vpop.f32.mrb[0].mxu0
        %v1126 = vadd.f32 0.0, %v1125
        %v1127 = vpop.f32.mrb[0].mxu0
        %v1128 = vpop.f32.mrb[0].mxu0
        %v1129 = vadd.f32 0.0, %v1128
        %v1130 = vpop.f32.mrb[0].mxu0
        %1131 = vdwg.mxu0
        %v1132 = vmul.f32 %v1126, 0.17677669
        %v1133 = vmul.f32 %v1129, 0.17677669
        %v1134 = vsel %vm1012, %v1132, -inf
        %1135 = vmax.xlane.f32.xlu0 %v1134
        %v1136 = vpop.xlane.xlu0 %1135
        %v1137 = vsel %vm1012, %v1133, -inf
        %1138 = vmax.xlane.f32.xlu0 %v1137
        %v1139 = vpop.xlane.xlu0 %1138
        %v1140 = vsub.f32 %v1132, %v1136
        %v1141 = vsub.f32 %v1133, %v1139
        %v1142 = vmul.f32 %v1140, 1.442695
        %v1143 = vpow.pop %v1142
        %v1144 = vmul.f32 %v1141, 1.442695
        %v1145 = vpow.pop %v1144
        %v1146 = vsel %vm1012, %v1143, 0.0
        %1147 = vadd.xlane.f32.xlu0 %v1146
        %v1148 = vpop.xlane.xlu0 %1147
        %v1149 = vsel %vm1012, %v1145, 0.0
        %1150 = vadd.xlane.f32.xlu0 %v1149
        %v1151 = vpop.xlane.xlu0 %1150
        %v1152 = vrcp.pop %v1148
        %v1153 = vrcp.pop %v1151
        %v1154 = vmul.f32 %v1143, %v1152
        %v1155 = vmul.f32 %v1145, %v1153
        %v1156 = vpack.c.bf16 %v1155, %v1154
        %v1157 = vld [vmem:[#allocation4] sm:$0xff]
        %1159 = vrot.lane.b32.xlu0 %v1157, 96
        %v1160 = vpop.permute.xlu0 %1159
        %v1163 = vsel %vm1012, %v1156, 0
        %1165 = vmatprep.subr.bf16.mxu0 0
        %1166 = vmatpush1.bf16.msra.mxu0 %v1160
        %1167 = vmatprep.subr.bf16.mxu0 0
        %1168 = vmatpush1.bf16.msra.mxu0 0
        %1169 = vmatprep.subr.bf16.mxu0 0
        %1170 = vmatpush1.bf16.msra.mxu0 0
        %1171 = vmatprep.subr.bf16.mxu0 0
        %1172 = vmatpush1.bf16.msra.mxu0 0
        %1173 = vmatprep.subr.bf16.mxu0 0
        %1174 = vmatpush1.bf16.msra.mxu0 0
        %1175 = vmatprep.subr.bf16.mxu0 0
        %1176 = vmatpush1.bf16.msra.mxu0 0
        %1177 = vmatprep.subr.bf16.mxu0 0
        %1178 = vmatpush1.bf16.msra.mxu0 0
        %1179 = vmatprep.subr.bf16.mxu0 0
        %1180 = vmatpush1.bf16.msra.mxu0 0
        %1181 = vmatprep.subr.bf16.mxu0 0
        %1182 = vmatpush1.bf16.msra.mxu0 0
        %1183 = vmatprep.subr.bf16.mxu0 0
        %1184 = vmatpush1.bf16.msra.mxu0 0
        %1185 = vmatprep.subr.bf16.mxu0 0
        %1186 = vmatpush1.bf16.msra.mxu0 0
        %1187 = vmatprep.subr.bf16.mxu0 0
        %1188 = vmatpush1.bf16.msra.mxu0 0
        %1189 = vmatprep.subr.bf16.mxu0 0
        %1190 = vmatpush1.bf16.msra.mxu0 0
        %1191 = vmatprep.subr.bf16.mxu0 0
        %1192 = vmatpush1.bf16.msra.mxu0 0
        %1193 = vmatprep.subr.bf16.mxu0 0
        %1194 = vmatpush1.bf16.msra.mxu0 0
        %1195 = vmatprep.subr.bf16.mxu0 0
        %1196 = vmatpush1.bf16.msra.mxu0 0
        %1197 = vmatprep.mubr.bf16.mxu0 0
        %1198 = vmatmul.mubr.bf16.gmra.mrb[0].mxu0 %v1163
        %v1199 = vpop.f32.mrb[0].mxu0
        %v1200 = vadd.f32 0.0, %v1199
        %v1201 = vpop.f32.mrb[0].mxu0
        %v1202 = vpop.f32.mrb[0].mxu0
        %v1203 = vadd.f32 0.0, %v1202
        %v1204 = vpop.f32.mrb[0].mxu0
        %1205 = vdwg.mxu0
        %v1206 = vpack.c.bf16 %v1203, %v1200
        %1208 = vrot.lane.b32.xlu0 %v1206, 32
        %v1209 = vpop.permute.xlu0 %1208
        %vm1211 = vcmask 523520
        %1212 = vst.msk [vmem:[#allocation5] sm:$0xff] %vm1211, %v1209
        %v1213 = vld [vmem:[#allocation3 + $0x20] sm:$0xff]
        %v1214 = vld [vmem:[#allocation3 + $0x28] sm:$0xff]
        %1215 = vrot.lane.b32.xlu0 %v962, 64
        %v1216 = vpop.permute.xlu0 %1215
        %v1218 = vsel %vm965, %v1216, 0
        %1220 = vmatprep.subr.bf16.mxu0 0
        %1221 = vmatpush1.bf16.msra.mxu0 %v1213
        %1222 = vmatprep.subr.bf16.mxu0 0
        %1223 = vmatpush1.bf16.msra.mxu0 %v1214
        %1224 = vmatprep.subr.bf16.mxu0 0
        %1225 = vmatpush1.bf16.msra.mxu0 0
        %1226 = vmatprep.subr.bf16.mxu0 0
        %1227 = vmatpush1.bf16.msra.mxu0 0
        %1228 = vmatprep.subr.bf16.mxu0 0
        %1229 = vmatpush1.bf16.msra.mxu0 0
        %1230 = vmatprep.subr.bf16.mxu0 0
        %1231 = vmatpush1.bf16.msra.mxu0 0
        %1232 = vmatprep.subr.bf16.mxu0 0
        %1233 = vmatpush1.bf16.msra.mxu0 0
        %1234 = vmatprep.subr.bf16.mxu0 0
        %1235 = vmatpush1.bf16.msra.mxu0 0
        %1236 = vmatprep.subr.bf16.mxu0 0
        %1237 = vmatpush1.bf16.msra.mxu0 0
        %1238 = vmatprep.subr.bf16.mxu0 0
        %1239 = vmatpush1.bf16.msra.mxu0 0
        %1240 = vmatprep.subr.bf16.mxu0 0
        %1241 = vmatpush1.bf16.msra.mxu0 0
        %1242 = vmatprep.subr.bf16.mxu0 0
        %1243 = vmatpush1.bf16.msra.mxu0 0
        %1244 = vmatprep.subr.bf16.mxu0 0
        %1245 = vmatpush1.bf16.msra.mxu0 0
        %1246 = vmatprep.subr.bf16.mxu0 0
        %1247 = vmatpush1.bf16.msra.mxu0 0
        %1248 = vmatprep.subr.bf16.mxu0 0
        %1249 = vmatpush1.bf16.msra.mxu0 0
        %1250 = vmatprep.subr.bf16.mxu0 0
        %1251 = vmatpush1.bf16.msra.mxu0 0
        %1252 = vmatprep.mubr.bf16.mxu0 0
        %1253 = vmatmul.mubr.bf16.gmra.mrb[0].mxu0 %v1218
        %v1254 = vpop.f32.mrb[0].mxu0
        %v1255 = vadd.f32 0.0, %v1254
        %v1256 = vpop.f32.mrb[0].mxu0
        %v1257 = vpop.f32.mrb[0].mxu0
        %v1258 = vadd.f32 0.0, %v1257
        %v1259 = vpop.f32.mrb[0].mxu0
        %1260 = vdwg.mxu0
        %v1261 = vmul.f32 %v1255, 0.17677669
        %v1262 = vmul.f32 %v1258, 0.17677669
        %v1263 = vsel %vm1012, %v1261, -inf
        %1264 = vmax.xlane.f32.xlu0 %v1263
        %v1265 = vpop.xlane.xlu0 %1264
        %v1266 = vsel %vm1012, %v1262, -inf
        %1267 = vmax.xlane.f32.xlu0 %v1266
        %v1268 = vpop.xlane.xlu0 %1267
        %v1269 = vsub.f32 %v1261, %v1265
        %v1270 = vsub.f32 %v1262, %v1268
        %v1271 = vmul.f32 %v1269, 1.442695
        %v1272 = vpow.pop %v1271
        %v1273 = vmul.f32 %v1270, 1.442695
        %v1274 = vpow.pop %v1273
        %v1275 = vsel %vm1012, %v1272, 0.0
        %1276 = vadd.xlane.f32.xlu0 %v1275
        %v1277 = vpop.xlane.xlu0 %1276
        %v1278 = vsel %vm1012, %v1274, 0.0
        %1279 = vadd.xlane.f32.xlu0 %v1278
        %v1280 = vpop.xlane.xlu0 %1279
        %v1281 = vrcp.pop %v1277
        %v1282 = vrcp.pop %v1280
        %v1283 = vmul.f32 %v1272, %v1281
        %v1284 = vmul.f32 %v1274, %v1282
        %v1285 = vpack.c.bf16 %v1284, %v1283
        %v1286 = vld [vmem:[#allocation4] sm:$0xff]
        %1288 = vrot.lane.b32.xlu0 %v1286, 64
        %v1289 = vpop.permute.xlu0 %1288
        %v1292 = vsel %vm1012, %v1285, 0
        %1294 = vmatprep.subr.bf16.mxu0 0
        %1295 = vmatpush1.bf16.msra.mxu0 %v1289
        %1296 = vmatprep.subr.bf16.mxu0 0
        %1297 = vmatpush1.bf16.msra.mxu0 0
        %1298 = vmatprep.subr.bf16.mxu0 0
        %1299 = vmatpush1.bf16.msra.mxu0 0
        %1300 = vmatprep.subr.bf16.mxu0 0
        %1301 = vmatpush1.bf16.msra.mxu0 0
        %1302 = vmatprep.subr.bf16.mxu0 0
        %1303 = vmatpush1.bf16.msra.mxu0 0
        %1304 = vmatprep.subr.bf16.mxu0 0
        %1305 = vmatpush1.bf16.msra.mxu0 0
        %1306 = vmatprep.subr.bf16.mxu0 0
        %1307 = vmatpush1.bf16.msra.mxu0 0
        %1308 = vmatprep.subr.bf16.mxu0 0
        %1309 = vmatpush1.bf16.msra.mxu0 0
        %1310 = vmatprep.subr.bf16.mxu0 0
        %1311 = vmatpush1.bf16.msra.mxu0 0
        %1312 = vmatprep.subr.bf16.mxu0 0
        %1313 = vmatpush1.bf16.msra.mxu0 0
        %1314 = vmatprep.subr.bf16.mxu0 0
        %1315 = vmatpush1.bf16.msra.mxu0 0
        %1316 = vmatprep.subr.bf16.mxu0 0
        %1317 = vmatpush1.bf16.msra.mxu0 0
        %1318 = vmatprep.subr.bf16.mxu0 0
        %1319 = vmatpush1.bf16.msra.mxu0 0
        %1320 = vmatprep.subr.bf16.mxu0 0
        %1321 = vmatpush1.bf16.msra.mxu0 0
        %1322 = vmatprep.subr.bf16.mxu0 0
        %1323 = vmatpush1.bf16.msra.mxu0 0
        %1324 = vmatprep.subr.bf16.mxu0 0
        %1325 = vmatpush1.bf16.msra.mxu0 0
        %1326 = vmatprep.mubr.bf16.mxu0 0
        %1327 = vmatmul.mubr.bf16.gmra.mrb[0].mxu0 %v1292
        %v1328 = vpop.f32.mrb[0].mxu0
        %v1329 = vadd.f32 0.0, %v1328
        %v1330 = vpop.f32.mrb[0].mxu0
        %v1331 = vpop.f32.mrb[0].mxu0
        %v1332 = vadd.f32 0.0, %v1331
        %v1333 = vpop.f32.mrb[0].mxu0
        %1334 = vdwg.mxu0
        %v1335 = vpack.c.bf16 %v1332, %v1329
        %1337 = vrot.lane.b32.xlu0 %v1335, 64
        %v1338 = vpop.permute.xlu0 %1337
        %vm1340 = vcmask 785920
        %1341 = vst.msk [vmem:[#allocation5] sm:$0xff] %vm1340, %v1338
        %v1342 = vld [vmem:[#allocation3 + $0x30] sm:$0xff]
        %v1343 = vld [vmem:[#allocation3 + $0x38] sm:$0xff]
        %1344 = vrot.lane.b32.xlu0 %v962, 32
        %v1345 = vpop.permute.xlu0 %1344
        %v1347 = vsel %vm965, %v1345, 0
        %1349 = vmatprep.subr.bf16.mxu0 0
        %1350 = vmatpush1.bf16.msra.mxu0 %v1342
        %1351 = vmatprep.subr.bf16.mxu0 0
        %1352 = vmatpush1.bf16.msra.mxu0 %v1343
        %1353 = vmatprep.subr.bf16.mxu0 0
        %1354 = vmatpush1.bf16.msra.mxu0 0
        %1355 = vmatprep.subr.bf16.mxu0 0
        %1356 = vmatpush1.bf16.msra.mxu0 0
        %1357 = vmatprep.subr.bf16.mxu0 0
        %1358 = vmatpush1.bf16.msra.mxu0 0
        %1359 = vmatprep.subr.bf16.mxu0 0
        %1360 = vmatpush1.bf16.msra.mxu0 0
        %1361 = vmatprep.subr.bf16.mxu0 0
        %1362 = vmatpush1.bf16.msra.mxu0 0
        %1363 = vmatprep.subr.bf16.mxu0 0
        %1364 = vmatpush1.bf16.msra.mxu0 0
        %1365 = vmatprep.subr.bf16.mxu0 0
        %1366 = vmatpush1.bf16.msra.mxu0 0
        %1367 = vmatprep.subr.bf16.mxu0 0
        %1368 = vmatpush1.bf16.msra.mxu0 0
        %1369 = vmatprep.subr.bf16.mxu0 0
        %1370 = vmatpush1.bf16.msra.mxu0 0
        %1371 = vmatprep.subr.bf16.mxu0 0
        %1372 = vmatpush1.bf16.msra.mxu0 0
        %1373 = vmatprep.subr.bf16.mxu0 0
        %1374 = vmatpush1.bf16.msra.mxu0 0
        %1375 = vmatprep.subr.bf16.mxu0 0
        %1376 = vmatpush1.bf16.msra.mxu0 0
        %1377 = vmatprep.subr.bf16.mxu0 0
        %1378 = vmatpush1.bf16.msra.mxu0 0
        %1379 = vmatprep.subr.bf16.mxu0 0
        %1380 = vmatpush1.bf16.msra.mxu0 0
        %1381 = vmatprep.mubr.bf16.mxu0 0
        %1382 = vmatmul.mubr.bf16.gmra.mrb[0].mxu0 %v1347
        %v1383 = vpop.f32.mrb[0].mxu0
        %v1384 = vadd.f32 0.0, %v1383
        %v1385 = vpop.f32.mrb[0].mxu0
        %v1386 = vpop.f32.mrb[0].mxu0
        %v1387 = vadd.f32 0.0, %v1386
        %v1388 = vpop.f32.mrb[0].mxu0
        %1389 = vdwg.mxu0
        %v1390 = vmul.f32 %v1384, 0.17677669
        %v1391 = vmul.f32 %v1387, 0.17677669
        %v1392 = vsel %vm1012, %v1390, -inf
        %1393 = vmax.xlane.f32.xlu0 %v1392
        %v1394 = vpop.xlane.xlu0 %1393
        %v1395 = vsel %vm1012, %v1391, -inf
        %1396 = vmax.xlane.f32.xlu0 %v1395
        %v1397 = vpop.xlane.xlu0 %1396
        %v1398 = vsub.f32 %v1390, %v1394
        %v1399 = vsub.f32 %v1391, %v1397
        %v1400 = vmul.f32 %v1398, 1.442695
        %v1401 = vpow.pop %v1400
        %v1402 = vmul.f32 %v1399, 1.442695
        %v1403 = vpow.pop %v1402
        %v1404 = vsel %vm1012, %v1401, 0.0
        %1405 = vadd.xlane.f32.xlu0 %v1404
        %v1406 = vpop.xlane.xlu0 %1405
        %v1407 = vsel %vm1012, %v1403, 0.0
        %1408 = vadd.xlane.f32.xlu0 %v1407
        %v1409 = vpop.xlane.xlu0 %1408
        %v1410 = vrcp.pop %v1406
        %v1411 = vrcp.pop %v1409
        %v1412 = vmul.f32 %v1401, %v1410
        %v1413 = vmul.f32 %v1403, %v1411
        %v1414 = vpack.c.bf16 %v1413, %v1412
        %v1415 = vld [vmem:[#allocation4] sm:$0xff]
        %1417 = vrot.lane.b32.xlu0 %v1415, 32
        %v1418 = vpop.permute.xlu0 %1417
        %v1421 = vsel %vm1012, %v1414, 0
        %1423 = vmatprep.subr.bf16.mxu0 0
        %1424 = vmatpush1.bf16.msra.mxu0 %v1418
        %1425 = vmatprep.subr.bf16.mxu0 0
        %1426 = vmatpush1.bf16.msra.mxu0 0
        %1427 = vmatprep.subr.bf16.mxu0 0
        %1428 = vmatpush1.bf16.msra.mxu0 0
        %1429 = vmatprep.subr.bf16.mxu0 0
        %1430 = vmatpush1.bf16.msra.mxu0 0
        %1431 = vmatprep.subr.bf16.mxu0 0
        %1432 = vmatpush1.bf16.msra.mxu0 0
        %1433 = vmatprep.subr.bf16.mxu0 0
        %1434 = vmatpush1.bf16.msra.mxu0 0
        %1435 = vmatprep.subr.bf16.mxu0 0
        %1436 = vmatpush1.bf16.msra.mxu0 0
        %1437 = vmatprep.subr.bf16.mxu0 0
        %1438 = vmatpush1.bf16.msra.mxu0 0
        %1439 = vmatprep.subr.bf16.mxu0 0
        %1440 = vmatpush1.bf16.msra.mxu0 0
        %1441 = vmatprep.subr.bf16.mxu0 0
        %1442 = vmatpush1.bf16.msra.mxu0 0
        %1443 = vmatprep.subr.bf16.mxu0 0
        %1444 = vmatpush1.bf16.msra.mxu0 0
        %1445 = vmatprep.subr.bf16.mxu0 0
        %1446 = vmatpush1.bf16.msra.mxu0 0
        %1447 = vmatprep.subr.bf16.mxu0 0
        %1448 = vmatpush1.bf16.msra.mxu0 0
        %1449 = vmatprep.subr.bf16.mxu0 0
        %1450 = vmatpush1.bf16.msra.mxu0 0
        %1451 = vmatprep.subr.bf16.mxu0 0
        %1452 = vmatpush1.bf16.msra.mxu0 0
        %1453 = vmatprep.subr.bf16.mxu0 0
        %1454 = vmatpush1.bf16.msra.mxu0 0
        %1455 = vmatprep.mubr.bf16.mxu0 0
        %1456 = vmatmul.mubr.bf16.gmra.mrb[0].mxu0 %v1421
        %v1457 = vpop.f32.mrb[0].mxu0
        %v1458 = vadd.f32 0.0, %v1457
        %v1459 = vpop.f32.mrb[0].mxu0
        %v1460 = vpop.f32.mrb[0].mxu0
        %v1461 = vadd.f32 0.0, %v1460
        %v1462 = vpop.f32.mrb[0].mxu0
        %1463 = vdwg.mxu0
        %v1464 = vpack.c.bf16 %v1461, %v1458
        %1466 = vrot.lane.b32.xlu0 %v1464, 96
        %v1467 = vpop.permute.xlu0 %1466
        %vm1469 = vcmask 1048320
        %1470 = vst.msk [vmem:[#allocation5] sm:$0xff] %vm1469, %v1467
        %v1471 = vld [vmem:[#allocation5] sm:$0xff]
        %v1472 = vld [vmem:[#allocation12] sm:$0xf]
        %v1473 = vld [vmem:[#allocation12 + $0x4] sm:$0xf]
        %v1474 = vld [vmem:[#allocation12 + $0x8] sm:$0xf]
        %v1475 = vld [vmem:[#allocation12 + $0xc] sm:$0xf]
        %v1476 = vld [vmem:[#allocation12 + $0x10] sm:$0xf]
        %v1477 = vld [vmem:[#allocation12 + $0x14] sm:$0xf]
        %v1478 = vld [vmem:[#allocation12 + $0x18] sm:$0xf]
        %v1479 = vld [vmem:[#allocation12 + $0x1c] sm:$0xf]
        %v1480 = vld [vmem:[#allocation12 + $0x20] sm:$0xf]
        %v1481 = vld [vmem:[#allocation12 + $0x24] sm:$0xf]
        %v1482 = vld [vmem:[#allocation12 + $0x28] sm:$0xf]
        %v1483 = vld [vmem:[#allocation12 + $0x2c] sm:$0xf]
        %v1484 = vld [vmem:[#allocation12 + $0x30] sm:$0xf]
        %v1485 = vld [vmem:[#allocation12 + $0x34] sm:$0xf]
        %v1486 = vld [vmem:[#allocation12 + $0x38] sm:$0xf]
        %v1487 = vld [vmem:[#allocation12 + $0x3c] sm:$0xf]
        %v1488 = vld [vmem:[#allocation14] sm:$0x1]
        %v1490 = vlaneseq
        %v1491 = vshrl.u32 %v1490, 7
        %v1492 = vsub.s32 0, %v1491
        %v1493 = vrot.slane %v1488, %v1492
        %v1511 = vunpack.c.l.b16 %v1472
        %v1512 = vunpack.c.l.b16 %v1473
        %v1513 = vunpack.c.l.b16 %v1474
        %v1514 = vunpack.c.l.b16 %v1475
        %v1515 = vunpack.c.l.b16 %v1476
        %v1516 = vunpack.c.l.b16 %v1477
        %v1517 = vunpack.c.l.b16 %v1478
        %v1518 = vunpack.c.l.b16 %v1479
        %v1519 = vunpack.c.l.b16 %v1480
        %v1520 = vunpack.c.l.b16 %v1481
        %v1521 = vunpack.c.l.b16 %v1482
        %v1522 = vunpack.c.l.b16 %v1483
        %v1523 = vunpack.c.l.b16 %v1484
        %v1524 = vunpack.c.l.b16 %v1485
        %v1525 = vunpack.c.l.b16 %v1486
        %v1526 = vunpack.c.l.b16 %v1487
        %v1527 = vpack.c.b16 %v1512, %v1511
        %v1528 = vpack.c.b16 %v1514, %v1513
        %v1529 = vpack.c.b16 %v1516, %v1515
        %v1530 = vpack.c.b16 %v1518, %v1517
        %v1531 = vpack.c.b16 %v1520, %v1519
        %v1532 = vpack.c.b16 %v1522, %v1521
        %v1533 = vpack.c.b16 %v1524, %v1523
        %v1534 = vpack.c.b16 %v1526, %v1525
        %1543 = vmatprep.subr.bf16.mxu0 0
        %1544 = vmatpush1.bf16.msra.mxu0 %v1527
        %1545 = vmatprep.subr.bf16.mxu0 0
        %1546 = vmatpush1.bf16.msra.mxu0 %v1528
        %1547 = vmatprep.subr.bf16.mxu0 0
        %1548 = vmatpush1.bf16.msra.mxu0 %v1529
        %1549 = vmatprep.subr.bf16.mxu0 0
        %1550 = vmatpush1.bf16.msra.mxu0 %v1530
        %1551 = vmatprep.subr.bf16.mxu0 0
        %1552 = vmatpush1.bf16.msra.mxu0 %v1531
        %1553 = vmatprep.subr.bf16.mxu0 0
        %1554 = vmatpush1.bf16.msra.mxu0 %v1532
        %1555 = vmatprep.subr.bf16.mxu0 0
        %1556 = vmatpush1.bf16.msra.mxu0 %v1533
        %1557 = vmatprep.subr.bf16.mxu0 0
        %1558 = vmatpush1.bf16.msra.mxu0 %v1534
        %1559 = vmatprep.subr.bf16.mxu0 0
        %1560 = vmatpush1.bf16.msra.mxu0 0
        %1561 = vmatprep.subr.bf16.mxu0 0
        %1562 = vmatpush1.bf16.msra.mxu0 0
        %1563 = vmatprep.subr.bf16.mxu0 0
        %1564 = vmatpush1.bf16.msra.mxu0 0
        %1565 = vmatprep.subr.bf16.mxu0 0
        %1566 = vmatpush1.bf16.msra.mxu0 0
        %1567 = vmatprep.subr.bf16.mxu0 0
        %1568 = vmatpush1.bf16.msra.mxu0 0
        %1569 = vmatprep.subr.bf16.mxu0 0
        %1570 = vmatpush1.bf16.msra.mxu0 0
        %1571 = vmatprep.subr.bf16.mxu0 0
        %1572 = vmatpush1.bf16.msra.mxu0 0
        %1573 = vmatprep.subr.bf16.mxu0 0
        %1574 = vmatpush1.bf16.msra.mxu0 0
        %1575 = vmatprep.mubr.bf16.mxu0 0
        %1576 = vmatmul.mubr.bf16.gmra.mrb[0].mxu0 %v1471
        %v1577 = vpop.f32.mrb[0].mxu0
        %v1578 = vadd.f32 %v1493, %v1577
        %v1579 = vpop.f32.mrb[0].mxu0
        %v1580 = vpop.f32.mrb[0].mxu0
        %v1581 = vadd.f32 %v1493, %v1580
        %v1582 = vpop.f32.mrb[0].mxu0
        %1583 = vdwg.mxu0
        %v1584 = vadd.f32 %v1578, %v956
        %v1585 = vadd.f32 %v1581, %v957
        %1586 = vadd.xlane.f32.xlu0 %v1584
        %v1587 = vpop.xlane.xlu0 %1586
        %1588 = vadd.xlane.f32.xlu0 %v1585
        %v1589 = vpop.xlane.xlu0 %1588
        %v1590 = vrcp.pop 128.0
        %v1591 = vmul.f32 %v1587, %v1590
        %v1592 = vmul.f32 %v1589, %v1590
        %v1593 = vsub.f32 %v1584, %v1591
        %v1594 = vsub.f32 %v1585, %v1592
        %v1595 = vmul.f32 %v1593, %v1593
        %v1596 = vmul.f32 %v1594, %v1594
        %1597 = vadd.xlane.f32.xlu0 %v1595
        %v1598 = vpop.xlane.xlu0 %1597
        %1599 = vadd.xlane.f32.xlu0 %v1596
        %v1600 = vpop.xlane.xlu0 %1599
        %v1601 = vmul.f32 %v1598, %v1590
        %v1602 = vmul.f32 %v1600, %v1590
        %v1603 = vadd.f32 %v1601, 1e-05
        %v1604 = vadd.f32 %v1602, 1e-05
        %v1605 = vrsqrt.pop %v1603
        %v1606 = vrsqrt.pop %v1604
        %v1607 = vmul.f32 %v1593, %v1605
        %v1608 = vmul.f32 %v1594, %v1606
        %v1609 = vld [vmem:[#allocation15] sm:$0x1]
        %v1611 = vlaneseq
        %v1612 = vshrl.u32 %v1611, 7
        %v1613 = vsub.s32 0, %v1612
        %v1614 = vrot.slane %v1609, %v1613
        %v1616 = vmul.f32 %v1607, %v1614
        %v1617 = vmul.f32 %v1608, %v1614
        %v1618 = vld [vmem:[#allocation17] sm:$0x1]
        %v1620 = vlaneseq
        %v1621 = vshrl.u32 %v1620, 7
        %v1622 = vsub.s32 0, %v1621
        %v1623 = vrot.slane %v1618, %v1622
        %v1625 = vadd.f32 %v1616, %v1623
        %v1626 = vadd.f32 %v1617, %v1623
        %v1627 = vpack.c.bf16 %v1626, %v1625
        %v1628 = vld [vmem:[#allocation18] sm:$0xf]
        %v1629 = vld [vmem:[#allocation18 + $0x4] sm:$0xf]
        %v1630 = vld [vmem:[#allocation18 + $0x8] sm:$0xf]
        %v1631 = vld [vmem:[#allocation18 + $0xc] sm:$0xf]
        %v1632 = vld [vmem:[#allocation18 + $0x10] sm:$0xf]
        %v1633 = vld [vmem:[#allocation18 + $0x14] sm:$0xf]
        %v1634 = vld [vmem:[#allocation18 + $0x18] sm:$0xf]
        %v1635 = vld [vmem:[#allocation18 + $0x1c] sm:$0xf]
        %v1636 = vld [vmem:[#allocation18 + $0x20] sm:$0xf]
        %v1637 = vld [vmem:[#allocation18 + $0x24] sm:$0xf]
        %v1638 = vld [vmem:[#allocation18 + $0x28] sm:$0xf]
        %v1639 = vld [vmem:[#allocation18 + $0x2c] sm:$0xf]
        %v1640 = vld [vmem:[#allocation18 + $0x30] sm:$0xf]
        %v1641 = vld [vmem:[#allocation18 + $0x34] sm:$0xf]
        %v1642 = vld [vmem:[#allocation18 + $0x38] sm:$0xf]
        %v1643 = vld [vmem:[#allocation18 + $0x3c] sm:$0xf]
        %v1644 = vld [vmem:[#allocation20] sm:$0x1]
        %v1646 = vlaneseq
        %v1647 = vshrl.u32 %v1646, 7
        %v1648 = vsub.s32 0, %v1647
        %v1649 = vrot.slane %v1644, %v1648
        %v1667 = vunpack.c.l.b16 %v1628
        %v1668 = vunpack.c.l.b16 %v1629
        %v1669 = vunpack.c.l.b16 %v1630
        %v1670 = vunpack.c.l.b16 %v1631
        %v1671 = vunpack.c.l.b16 %v1632
        %v1672 = vunpack.c.l.b16 %v1633
        %v1673 = vunpack.c.l.b16 %v1634
        %v1674 = vunpack.c.l.b16 %v1635
        %v1675 = vunpack.c.l.b16 %v1636
        %v1676 = vunpack.c.l.b16 %v1637
        %v1677 = vunpack.c.l.b16 %v1638
        %v1678 = vunpack.c.l.b16 %v1639
        %v1679 = vunpack.c.l.b16 %v1640
        %v1680 = vunpack.c.l.b16 %v1641
        %v1681 = vunpack.c.l.b16 %v1642
        %v1682 = vunpack.c.l.b16 %v1643
        %v1683 = vpack.c.b16 %v1668, %v1667
        %v1684 = vpack.c.b16 %v1670, %v1669
        %v1685 = vpack.c.b16 %v1672, %v1671
        %v1686 = vpack.c.b16 %v1674, %v1673
        %v1687 = vpack.c.b16 %v1676, %v1675
        %v1688 = vpack.c.b16 %v1678, %v1677
        %v1689 = vpack.c.b16 %v1680, %v1679
        %v1690 = vpack.c.b16 %v1682, %v1681
        %1699 = vmatprep.subr.bf16.mxu0 0
        %1700 = vmatpush1.bf16.msra.mxu0 %v1683
        %1701 = vmatprep.subr.bf16.mxu0 0
        %1702 = vmatpush1.bf16.msra.mxu0 %v1684
        %1703 = vmatprep.subr.bf16.mxu0 0
        %1704 = vmatpush1.bf16.msra.mxu0 %v1685
        %1705 = vmatprep.subr.bf16.mxu0 0
        %1706 = vmatpush1.bf16.msra.mxu0 %v1686
        %1707 = vmatprep.subr.bf16.mxu0 0
        %1708 = vmatpush1.bf16.msra.mxu0 %v1687
        %1709 = vmatprep.subr.bf16.mxu0 0
        %1710 = vmatpush1.bf16.msra.mxu0 %v1688
        %1711 = vmatprep.subr.bf16.mxu0 0
        %1712 = vmatpush1.bf16.msra.mxu0 %v1689
        %1713 = vmatprep.subr.bf16.mxu0 0
        %1714 = vmatpush1.bf16.msra.mxu0 %v1690
        %1715 = vmatprep.subr.bf16.mxu0 0
        %1716 = vmatpush1.bf16.msra.mxu0 0
        %1717 = vmatprep.subr.bf16.mxu0 0
        %1718 = vmatpush1.bf16.msra.mxu0 0
        %1719 = vmatprep.subr.bf16.mxu0 0
        %1720 = vmatpush1.bf16.msra.mxu0 0
        %1721 = vmatprep.subr.bf16.mxu0 0
        %1722 = vmatpush1.bf16.msra.mxu0 0
        %1723 = vmatprep.subr.bf16.mxu0 0
        %1724 = vmatpush1.bf16.msra.mxu0 0
        %1725 = vmatprep.subr.bf16.mxu0 0
        %1726 = vmatpush1.bf16.msra.mxu0 0
        %1727 = vmatprep.subr.bf16.mxu0 0
        %1728 = vmatpush1.bf16.msra.mxu0 0
        %1729 = vmatprep.subr.bf16.mxu0 0
        %1730 = vmatpush1.bf16.msra.mxu0 0
        %1731 = vmatprep.mubr.bf16.mxu0 0
        %1732 = vmatmul.mubr.bf16.gmra.mrb[0].mxu0 %v1627
        %v1733 = vpop.f32.mrb[0].mxu0
        %v1734 = vadd.f32 %v1649, %v1733
        %v1735 = vpop.f32.mrb[0].mxu0
        %v1736 = vpop.f32.mrb[0].mxu0
        %v1737 = vadd.f32 %v1649, %v1736
        %v1738 = vpop.f32.mrb[0].mxu0
        %1739 = vdwg.mxu0
        %v1740 = vmax.f32 %v1734, 0.0
        %v1741 = vmax.f32 %v1737, 0.0
        %v1742 = vpack.c.bf16 %v1741, %v1740
        %v1743 = vld [vmem:[#allocation21] sm:$0xf]
        %v1744 = vld [vmem:[#allocation21 + $0x4] sm:$0xf]
        %v1745 = vld [vmem:[#allocation21 + $0x8] sm:$0xf]
        %v1746 = vld [vmem:[#allocation21 + $0xc] sm:$0xf]
        %v1747 = vld [vmem:[#allocation21 + $0x10] sm:$0xf]
        %v1748 = vld [vmem:[#allocation21 + $0x14] sm:$0xf]
        %v1749 = vld [vmem:[#allocation21 + $0x18] sm:$0xf]
        %v1750 = vld [vmem:[#allocation21 + $0x1c] sm:$0xf]
        %v1751 = vld [vmem:[#allocation21 + $0x20] sm:$0xf]
        %v1752 = vld [vmem:[#allocation21 + $0x24] sm:$0xf]
        %v1753 = vld [vmem:[#allocation21 + $0x28] sm:$0xf]
        %v1754 = vld [vmem:[#allocation21 + $0x2c] sm:$0xf]
        %v1755 = vld [vmem:[#allocation21 + $0x30] sm:$0xf]
        %v1756 = vld [vmem:[#allocation21 + $0x34] sm:$0xf]
        %v1757 = vld [vmem:[#allocation21 + $0x38] sm:$0xf]
        %v1758 = vld [vmem:[#allocation21 + $0x3c] sm:$0xf]
        %v1759 = vld [vmem:[#allocation23] sm:$0x1]
        %v1761 = vlaneseq
        %v1762 = vshrl.u32 %v1761, 7
        %v1763 = vsub.s32 0, %v1762
        %v1764 = vrot.slane %v1759, %v1763
        %v1782 = vunpack.c.l.b16 %v1743
        %v1783 = vunpack.c.l.b16 %v1744
        %v1784 = vunpack.c.l.b16 %v1745
        %v1785 = vunpack.c.l.b16 %v1746
        %v1786 = vunpack.c.l.b16 %v1747
        %v1787 = vunpack.c.l.b16 %v1748
        %v1788 = vunpack.c.l.b16 %v1749
        %v1789 = vunpack.c.l.b16 %v1750
        %v1790 = vunpack.c.l.b16 %v1751
        %v1791 = vunpack.c.l.b16 %v1752
        %v1792 = vunpack.c.l.b16 %v1753
        %v1793 = vunpack.c.l.b16 %v1754
        %v1794 = vunpack.c.l.b16 %v1755
        %v1795 = vunpack.c.l.b16 %v1756
        %v1796 = vunpack.c.l.b16 %v1757
        %v1797 = vunpack.c.l.b16 %v1758
        %v1798 = vpack.c.b16 %v1783, %v1782
        %v1799 = vpack.c.b16 %v1785, %v1784
        %v1800 = vpack.c.b16 %v1787, %v1786
        %v1801 = vpack.c.b16 %v1789, %v1788
        %v1802 = vpack.c.b16 %v1791, %v1790
        %v1803 = vpack.c.b16 %v1793, %v1792
        %v1804 = vpack.c.b16 %v1795, %v1794
        %v1805 = vpack.c.b16 %v1797, %v1796
        %1814 = vmatprep.subr.bf16.mxu0 0
        %1815 = vmatpush1.bf16.msra.mxu0 %v1798
        %1816 = vmatprep.subr.bf16.mxu0 0
        %1817 = vmatpush1.bf16.msra.mxu0 %v1799
        %1818 = vmatprep.subr.bf16.mxu0 0
        %1819 = vmatpush1.bf16.msra.mxu0 %v1800
        %1820 = vmatprep.subr.bf16.mxu0 0
        %1821 = vmatpush1.bf16.msra.mxu0 %v1801
        %1822 = vmatprep.subr.bf16.mxu0 0
        %1823 = vmatpush1.bf16.msra.mxu0 %v1802
        %1824 = vmatprep.subr.bf16.mxu0 0
        %1825 = vmatpush1.bf16.msra.mxu0 %v1803
        %1826 = vmatprep.subr.bf16.mxu0 0
        %1827 = vmatpush1.bf16.msra.mxu0 %v1804
        %1828 = vmatprep.subr.bf16.mxu0 0
        %1829 = vmatpush1.bf16.msra.mxu0 %v1805
        %1830 = vmatprep.subr.bf16.mxu0 0
        %1831 = vmatpush1.bf16.msra.mxu0 0
        %1832 = vmatprep.subr.bf16.mxu0 0
        %1833 = vmatpush1.bf16.msra.mxu0 0
        %1834 = vmatprep.subr.bf16.mxu0 0
        %1835 = vmatpush1.bf16.msra.mxu0 0
        %1836 = vmatprep.subr.bf16.mxu0 0
        %1837 = vmatpush1.bf16.msra.mxu0 0
        %1838 = vmatprep.subr.bf16.mxu0 0
        %1839 = vmatpush1.bf16.msra.mxu0 0
        %1840 = vmatprep.subr.bf16.mxu0 0
        %1841 = vmatpush1.bf16.msra.mxu0 0
        %1842 = vmatprep.subr.bf16.mxu0 0
        %1843 = vmatpush1.bf16.msra.mxu0 0
        %1844 = vmatprep.subr.bf16.mxu0 0
        %1845 = vmatpush1.bf16.msra.mxu0 0
        %1846 = vmatprep.mubr.bf16.mxu0 0
        %1847 = vmatmul.mubr.bf16.gmra.mrb[0].mxu0 %v1742
        %v1848 = vpop.f32.mrb[0].mxu0
        %v1849 = vadd.f32 %v1764, %v1848
        %v1850 = vpop.f32.mrb[0].mxu0
        %v1851 = vpop.f32.mrb[0].mxu0
        %v1852 = vadd.f32 %v1764, %v1851
        %v1853 = vpop.f32.mrb[0].mxu0
        %1854 = vdwg.mxu0
        %v1855 = vadd.f32 %v1849, %v1625
        %v1856 = vadd.f32 %v1852, %v1626
        %1857 = vadd.xlane.f32.xlu0 %v1855
        %v1858 = vpop.xlane.xlu0 %1857
        %1859 = vadd.xlane.f32.xlu0 %v1856
        %v1860 = vpop.xlane.xlu0 %1859
        %v1861 = vmul.f32 %v1858, %v1590
        %v1862 = vmul.f32 %v1860, %v1590
        %v1863 = vsub.f32 %v1855, %v1861
        %v1864 = vsub.f32 %v1856, %v1862
        %v1865 = vmul.f32 %v1863, %v1863
        %v1866 = vmul.f32 %v1864, %v1864
        %1867 = vadd.xlane.f32.xlu0 %v1865
        %v1868 = vpop.xlane.xlu0 %1867
        %1869 = vadd.xlane.f32.xlu0 %v1866
        %v1870 = vpop.xlane.xlu0 %1869
        %v1871 = vmul.f32 %v1868, %v1590
        %v1872 = vmul.f32 %v1870, %v1590
        %v1873 = vadd.f32 %v1871, 1e-05
        %v1874 = vadd.f32 %v1872, 1e-05
        %v1875 = vrsqrt.pop %v1873
        %v1876 = vrsqrt.pop %v1874
        %v1877 = vmul.f32 %v1863, %v1875
        %v1878 = vmul.f32 %v1864, %v1876
        %v1879 = vld [vmem:[#allocation24] sm:$0x1]
        %v1881 = vlaneseq
        %v1882 = vshrl.u32 %v1881, 7
        %v1883 = vsub.s32 0, %v1882
        %v1884 = vrot.slane %v1879, %v1883
        %v1886 = vmul.f32 %v1877, %v1884
        %v1887 = vmul.f32 %v1878, %v1884
        %v1888 = vld [vmem:[#allocation26] sm:$0x1]
        %v1890 = vlaneseq
        %v1891 = vshrl.u32 %v1890, 7
        %v1892 = vsub.s32 0, %v1891
        %v1893 = vrot.slane %v1888, %v1892
        %v1895 = vadd.f32 %v1886, %v1893
        %v1896 = vadd.f32 %v1887, %v1893
        %1897 = vst [vmem:[%s630] sm:$0xff] %v1895
        %1898 = vst [vmem:[%s630 + $0x8] sm:$0xff] %v1896
        %s1899 = sand.u32 %s336, 1
        %s1900 = scalar_lea.sflag [#allocation8], %s1899
        %s1901 = sand.u32 %s336, 1
        %s1902 = smul.addr %s1901, 16
        %s1903 = scalar_lea.vmem [#allocation27], %s1902
        // Predicated region
        $region129: #{tpu_custom_call.1} parent=71 // pred_check
          %p1904 = pneg %p346
        $region130: #{tpu_custom_call.1} parent=71 // pred_check_branch
          %1906 = sbr.rel (%p1904) target = $region132
        $region131: #{tpu_custom_call.1} parent=71 // pred_region
          %s1907 = smul.u32 2, %s41
          %s1909 = ssub.s32 256, 256
          %1910 = vsyncadd %s1900, %s1909
          %s1911 = smul.addr %s40, 2
          %s1912 = sadd.s32 %s1907, %s1911
          %s1913 = smul.addr %s1912, 128
          %s1914 = scalar_lea.hbm %s13, %s1913
          %s1915 = sshll.u32 %s1903, 4
          %s1916 = int_to_ptr.vmem [resolvable:$true] %s1915
          %1921 = dma.vmem_to_hbm [thread:$0]  %s1916, 256, %s1914, %s1900, 128, 128, 8
        $region132: #{tpu_custom_call.1} parent=71 // pred_fallthru
          _
      $region72: #{tpu_custom_call.1} parent=5 // pred_fallthru
        _
      %p1922 = scmp.le.s32.totalorder 2, %s31
      // Predicated region
      $region133: #{tpu_custom_call.1} parent=5 // pred_check
        %p1923 = pneg %p1922
      $region134: #{tpu_custom_call.1} parent=5 // pred_check_branch
        %1925 = sbr.rel (%p1923) target = $region136
      $region135: #{tpu_custom_call.1} parent=5 // pred_region
        %s1926 = ssub.s32 %s31, 2
        // Predicated region
        $region137: #{tpu_custom_call.1} parent=135 // pred_check
          %p1927 = pneg %p352
        $region138: #{tpu_custom_call.1} parent=135 // pred_check_branch
          %1929 = sbr.rel (%p1927) target = $region140
        $region139: #{tpu_custom_call.1} parent=135 // pred_region
          %s1930 = sand.u32 %s337, 1
          %s1931 = scalar_lea.sflag [#allocation8], %s1930
          %s1932 = sand.u32 %s337, 1
          %s1933 = smul.addr %s1932, 16
          %s1934 = scalar_lea.vmem [#allocation27], %s1933
          %1935 = dma.done %s1931, 256
        $region140: #{tpu_custom_call.1} parent=135 // pred_fallthru
          _
      $region136: #{tpu_custom_call.1} parent=5 // pred_fallthru
        _
    $region6: #{tpu_custom_call.1} parent=1 // loop_footer
      %s35 = sadd.s32 1, %s31
    $region7: #{tpu_custom_call.1} parent=1 // loop_footer_branch
      %30 = sbr.rel target = $region3
    $region8: #{tpu_custom_call.1} parent=1 // loop_exit
      _
    %1936 = vsyncpa [#allocation7], 1
    %s1937 = scalar_lea.sflag [#allocation7], 1
    %1938 = vsyncpa %s1937, 1
    %1939 = vsyncpa [#allocation10], 1
    %1940 = vsyncpa [#allocation13], 1
    %1941 = vsyncpa [#allocation16], 1
    %1942 = vsyncpa [#allocation19], 1
    %1943 = vsyncpa [#allocation22], 1
    %1944 = vsyncpa [#allocation25], 1
    %1945 = vsyncpa [#allocation8], 1
    %s1946 = scalar_lea.sflag [#allocation8], 1
    %1947 = vsyncpa %s1946, 1

</llo_original>
